<compile_context>
chip_gen: v6e
topology: v6e:2x2x1
jax: 0.10.0
libtpu: 0.0.40
codegen_flags: <defaults>
</compile_context>

<pallas_src>
import math

import jax
import jax.numpy as jnp
from jax.experimental import pallas as pl
from jax.experimental.pallas import tpu as pltpu

# ---- small ViT config consistent with the module (patch_size=8) ----
BATCH = 2
IN_CHANS = 3
IMG_H = IMG_W = 16
PATCH = 8
EMBED_DIM = 32
DEPTH = 2
NUM_HEADS = 4
HEAD_DIM = EMBED_DIM // NUM_HEADS
MLP_HIDDEN = 4 * EMBED_DIM
NUM_PATCHES = (IMG_H // PATCH) * (IMG_W // PATCH)
SEQ = NUM_PATCHES + 1
PATCH_K = IN_CHANS * PATCH * PATCH
LN_EPS = 1e-6
SCALE = HEAD_DIM ** -0.5


# ----------------- in-kernel math helpers (all f32, VPU/EUP-friendly) -----------------
def _erf(x):
    # Abramowitz & Stegun 7.1.26 (|err| < 1.5e-7); exp-only so it lowers cleanly
    # on the TPU EUP. Matches nn.GELU() (exact, erf-based) to ~1e-6.
    a1, a2, a3, a4, a5 = 0.254829592, -0.284496736, 1.421413741, -1.453152027, 1.061405429
    p = 0.3275911
    s = jnp.where(x >= 0.0, 1.0, -1.0)
    ax = jnp.abs(x)
    t = 1.0 / (1.0 + p * ax)
    poly = t * (a1 + t * (a2 + t * (a3 + t * (a4 + t * a5))))
    return s * (1.0 - poly * jnp.exp(-ax * ax))


def _gelu_exact(x):
    return 0.5 * x * (1.0 + _erf(x * (1.0 / math.sqrt(2.0))))


def _layernorm(x, g, b):
    mu = jnp.mean(x, axis=-1, keepdims=True)
    var = jnp.mean(jnp.square(x - mu), axis=-1, keepdims=True)
    return (x - mu) * jax.lax.rsqrt(var + LN_EPS) * g + b


def _softmax(x):
    m = jnp.max(x, axis=-1, keepdims=True)
    e = jnp.exp(x - m)
    return e / jnp.sum(e, axis=-1, keepdims=True)


# ----------------- single fused ViT kernel (one batch element per grid step) ----------
def _vit_kernel(patches_ref, pw_ref, pb_ref, cls_ref, pos_ref,
                ln1g_ref, ln1b_ref, wqkv_ref, bqkv_ref, wo_ref, bo_ref,
                ln2g_ref, ln2b_ref, w1_ref, b1_ref, w2_ref, b2_ref,
                ng_ref, nb_ref, o_ref):
    f32 = jnp.float32

    # Patch embedding: (NP, C*P*P) @ (C*P*P, D) + b.
    tokens = jnp.dot(patches_ref[...], pw_ref[...], preferred_element_type=f32) + pb_ref[...]
    # Prepend cls token and add positional embedding (fused into the kernel).
    x = jnp.concatenate([cls_ref[...], tokens], axis=0) + pos_ref[...]        # (S, D)

    for d in range(DEPTH):                                                     # unrolled, weights stacked
        # ---------------- multi-head attention ----------------
        h = _layernorm(x, ln1g_ref[d], ln1b_ref[d])
        # Fused QKV projection: one (S, D) @ (D, 3D) matmul.
        qkv = jnp.dot(h, wqkv_ref[d], preferred_element_type=f32) + bqkv_ref[d]  # (S, 3D)
        heads = []
        for n in range(NUM_HEADS):
            q = qkv[:, n * HEAD_DIM:(n + 1) * HEAD_DIM] * SCALE                  # (S, hd)
            k = qkv[:, EMBED_DIM + n * HEAD_DIM:EMBED_DIM + (n + 1) * HEAD_DIM]
            v = qkv[:, 2 * EMBED_DIM + n * HEAD_DIM:2 * EMBED_DIM + (n + 1) * HEAD_DIM]
            # q @ k^T without an explicit transpose (contract last dims).
            s = jax.lax.dot_general(q, k, (((1,), (1,)), ((), ())),
                                    preferred_element_type=f32)                  # (S, S)
            p = _softmax(s)
            heads.append(jnp.dot(p, v, preferred_element_type=f32))              # (S, hd)
        o = jnp.concatenate(heads, axis=-1)                                      # (S, D)
        # Single output projection on the concatenated heads.
        x = x + jnp.dot(o, wo_ref[d], preferred_element_type=f32) + bo_ref[d]

        # ---------------- MLP ----------------
        h2 = _layernorm(x, ln2g_ref[d], ln2b_ref[d])
        m = _gelu_exact(jnp.dot(h2, w1_ref[d], preferred_element_type=f32) + b1_ref[d])
        x = x + jnp.dot(m, w2_ref[d], preferred_element_type=f32) + b2_ref[d]

    # Final LayerNorm is per-token, so only the cls row needs normalizing.
    o_ref[...] = _layernorm(x[0:1, :], ng_ref[...], nb_ref[...])


# ----------------- wrapper: one pallas_call for the whole forward -----------------
def vit_forward(x_nchw, params):
    B, C, H, W = x_nchw.shape
    hp, wp = H // PATCH, W // PATCH
    # im2col for non-overlapping patches == Conv2d(kernel=stride=PATCH).
    # Pure layout plumbing done once in the wrapper; the kernel sees a lane-dense
    # (NUM_PATCHES, C*P*P) slab per batch element.
    patches = x_nchw.reshape(B, C, hp, PATCH, wp, PATCH)
    patches = patches.transpose(0, 2, 4, 1, 3, 5).reshape(B, hp * wp, C * PATCH * PATCH)

    ws = (params["patch_w"], params["patch_b"], params["cls_token"], params["pos_embed"],
          params["ln1_g"], params["ln1_b"], params["wqkv"], params["bqkv"],
          params["wo"], params["bo"], params["ln2_g"], params["ln2_b"],
          params["w1"], params["b1"], params["w2"], params["b2"],
          params["norm_g"], params["norm_b"])

    def const_spec(a):
        # Same block every grid step -> weights stay resident in VMEM (no re-DMA).
        return pl.BlockSpec(a.shape, lambda b, _nd=a.ndim: (0,) * _nd)

    out = pl.pallas_call(
        _vit_kernel,
        out_shape=jax.ShapeDtypeStruct((B, 1, EMBED_DIM), jnp.float32),
        grid=(B,),
        in_specs=[pl.BlockSpec((None, NUM_PATCHES, PATCH_K), lambda b: (b, 0, 0))]
        + [const_spec(a) for a in ws],
        out_specs=pl.BlockSpec((None, 1, EMBED_DIM), lambda b: (b, 0, 0)),
        compiler_params=pltpu.CompilerParams(dimension_semantics=("parallel",)),
    )(patches, *ws)
    return out.reshape(B, EMBED_DIM)


# ----------------- deterministic synthetic parameters (DEPTH-stacked) -----------------
def init_params(key):
    key_box = [key]

    def nxt():
        key_box[0], sub = jax.random.split(key_box[0])
        return sub

    std = 0.02
    f32 = jnp.float32
    params = {
        "patch_w": jax.random.normal(nxt(), (PATCH_K, EMBED_DIM), f32) * std,
        "patch_b": jax.random.normal(nxt(), (1, EMBED_DIM), f32) * std,
        "cls_token": jax.random.normal(nxt(), (1, EMBED_DIM), f32) * std,
        "pos_embed": jax.random.normal(nxt(), (SEQ, EMBED_DIM), f32),   # torch.randn in the module
        "norm_g": jnp.ones((1, EMBED_DIM), f32),
        "norm_b": jnp.zeros((1, EMBED_DIM), f32),
    }

    names = ("ln1_g", "ln1_b", "wqkv", "bqkv", "wo", "bo",
             "ln2_g", "ln2_b", "w1", "b1", "w2", "b2")
    stack = {k: [] for k in names}
    for _ in range(DEPTH):
        stack["ln1_g"].append(jnp.ones((1, EMBED_DIM), f32))
        stack["ln1_b"].append(jnp.zeros((1, EMBED_DIM), f32))
        stack["wqkv"].append(jax.random.normal(nxt(), (EMBED_DIM, 3 * EMBED_DIM), f32) * std)
        stack["bqkv"].append(jax.random.normal(nxt(), (1, 3 * EMBED_DIM), f32) * std)
        stack["wo"].append(jax.random.normal(nxt(), (EMBED_DIM, EMBED_DIM), f32) * std)
        stack["bo"].append(jax.random.normal(nxt(), (1, EMBED_DIM), f32) * std)
        stack["ln2_g"].append(jnp.ones((1, EMBED_DIM), f32))
        stack["ln2_b"].append(jnp.zeros((1, EMBED_DIM), f32))
        stack["w1"].append(jax.random.normal(nxt(), (EMBED_DIM, MLP_HIDDEN), f32) * std)
        stack["b1"].append(jax.random.normal(nxt(), (1, MLP_HIDDEN), f32) * std)
        stack["w2"].append(jax.random.normal(nxt(), (MLP_HIDDEN, EMBED_DIM), f32) * std)
        stack["b2"].append(jax.random.normal(nxt(), (1, EMBED_DIM), f32) * std)
    for k in names:
        params[k] = jnp.stack(stack[k], axis=0)   # leading DEPTH axis
    return params


if __name__ == "__main__":
    root = jax.random.PRNGKey(0)
    pkey, xkey = jax.random.split(root)
    params = init_params(pkey)
    x = jax.random.normal(xkey, (BATCH, IN_CHANS, IMG_H, IMG_W), jnp.float32)

    out = jax.jit(vit_forward)(x, params)
    out = jax.block_until_ready(out)

    assert out.shape == (BATCH, EMBED_DIM), out.shape
    assert bool(jnp.all(jnp.isfinite(out)))
    print("KERNEL_OK")
</pallas_src>

<mosaic_0001>
module attributes {stable_mosaic.version = 11 : i64} {
  func.func @_vit_kernel(%arg0: i32, %arg1: memref<1x4x192xf32, #tpu.memory_space<vmem>>, %arg2: memref<192x32xf32, #tpu.memory_space<vmem>>, %arg3: memref<1x32xf32, #tpu.memory_space<vmem>>, %arg4: memref<1x32xf32, #tpu.memory_space<vmem>>, %arg5: memref<5x32xf32, #tpu.memory_space<vmem>>, %arg6: memref<2x1x32xf32, #tpu.memory_space<vmem>>, %arg7: memref<2x1x32xf32, #tpu.memory_space<vmem>>, %arg8: memref<2x32x96xf32, #tpu.memory_space<vmem>>, %arg9: memref<2x1x96xf32, #tpu.memory_space<vmem>>, %arg10: memref<2x32x32xf32, #tpu.memory_space<vmem>>, %arg11: memref<2x1x32xf32, #tpu.memory_space<vmem>>, %arg12: memref<2x1x32xf32, #tpu.memory_space<vmem>>, %arg13: memref<2x1x32xf32, #tpu.memory_space<vmem>>, %arg14: memref<2x32x128xf32, #tpu.memory_space<vmem>>, %arg15: memref<2x1x128xf32, #tpu.memory_space<vmem>>, %arg16: memref<2x128x32xf32, #tpu.memory_space<vmem>>, %arg17: memref<2x1x32xf32, #tpu.memory_space<vmem>>, %arg18: memref<1x32xf32, #tpu.memory_space<vmem>>, %arg19: memref<1x32xf32, #tpu.memory_space<vmem>>, %arg20: memref<1x1x32xf32, #tpu.memory_space<vmem>>) attributes {dimension_semantics = [#tpu.dimension_semantics<parallel>], iteration_bounds = array<i64: 2>, scalar_prefetch = 0 : i64, scratch_operands = 0 : i64, tpu.core_type = #tpu.core_type<tc>, window_params = [{transform_indices = @transform_0, window_bounds = array<i64: 1, 4, 192>}, {pipeline_mode = #tpu.pipeline_mode<synchronous>, transform_indices = @transform_1, window_bounds = array<i64: 192, 32>}, {pipeline_mode = #tpu.pipeline_mode<synchronous>, transform_indices = @transform_2, window_bounds = array<i64: 1, 32>}, {pipeline_mode = #tpu.pipeline_mode<synchronous>, transform_indices = @transform_3, window_bounds = array<i64: 1, 32>}, {pipeline_mode = #tpu.pipeline_mode<synchronous>, transform_indices = @transform_4, window_bounds = array<i64: 5, 32>}, {pipeline_mode = #tpu.pipeline_mode<synchronous>, transform_indices = @transform_5, window_bounds = array<i64: 2, 1, 32>}, {pipeline_mode = #tpu.pipeline_mode<synchronous>, transform_indices = @transform_6, window_bounds = array<i64: 2, 1, 32>}, {pipeline_mode = #tpu.pipeline_mode<synchronous>, transform_indices = @transform_7, window_bounds = array<i64: 2, 32, 96>}, {pipeline_mode = #tpu.pipeline_mode<synchronous>, transform_indices = @transform_8, window_bounds = array<i64: 2, 1, 96>}, {pipeline_mode = #tpu.pipeline_mode<synchronous>, transform_indices = @transform_9, window_bounds = array<i64: 2, 32, 32>}, {pipeline_mode = #tpu.pipeline_mode<synchronous>, transform_indices = @transform_10, window_bounds = array<i64: 2, 1, 32>}, {pipeline_mode = #tpu.pipeline_mode<synchronous>, transform_indices = @transform_11, window_bounds = array<i64: 2, 1, 32>}, {pipeline_mode = #tpu.pipeline_mode<synchronous>, transform_indices = @transform_12, window_bounds = array<i64: 2, 1, 32>}, {pipeline_mode = #tpu.pipeline_mode<synchronous>, transform_indices = @transform_13, window_bounds = array<i64: 2, 32, 128>}, {pipeline_mode = #tpu.pipeline_mode<synchronous>, transform_indices = @transform_14, window_bounds = array<i64: 2, 1, 128>}, {pipeline_mode = #tpu.pipeline_mode<synchronous>, transform_indices = @transform_15, window_bounds = array<i64: 2, 128, 32>}, {pipeline_mode = #tpu.pipeline_mode<synchronous>, transform_indices = @transform_16, window_bounds = array<i64: 2, 1, 32>}, {pipeline_mode = #tpu.pipeline_mode<synchronous>, transform_indices = @transform_17, window_bounds = array<i64: 1, 32>}, {pipeline_mode = #tpu.pipeline_mode<synchronous>, transform_indices = @transform_18, window_bounds = array<i64: 1, 32>}, {transform_indices = @transform_19, window_bounds = array<i64: 1, 1, 32>}]} {
    %c0 = arith.constant 0 : index
    %c0_0 = arith.constant 0 : index
    %c0_1 = arith.constant 0 : index
    %0 = vector.load %arg1[%c0, %c0_0, %c0_1] : memref<1x4x192xf32, #tpu.memory_space<vmem>>, vector<1x4x192xf32>
    %1 = vector.shape_cast %0 : vector<1x4x192xf32> to vector<4x192xf32>
    %c0_2 = arith.constant 0 : index
    %c0_3 = arith.constant 0 : index
    %2 = vector.load %arg2[%c0_2, %c0_3] : memref<192x32xf32, #tpu.memory_space<vmem>>, vector<192x32xf32>
    %cst = arith.constant dense<0.000000e+00> : vector<4x32xf32>
    %3 = tpu.matmul %1, %2, %cst {dimension_numbers = #tpu.dot_dimension_numbers<[1], [0], [0], [1], [0, 0, 1, 1], [], []>} : vector<4x192xf32>, vector<192x32xf32>, vector<4x32xf32> -> vector<4x32xf32>
    %c0_4 = arith.constant 0 : index
    %c0_5 = arith.constant 0 : index
    %4 = vector.load %arg3[%c0_4, %c0_5] : memref<1x32xf32, #tpu.memory_space<vmem>>, vector<1x32xf32>
    %5 = vector.broadcast %4 : vector<1x32xf32> to vector<4x32xf32>
    %6 = arith.addf %3, %5 : vector<4x32xf32>
    %c0_6 = arith.constant 0 : index
    %c0_7 = arith.constant 0 : index
    %7 = vector.load %arg4[%c0_6, %c0_7] : memref<1x32xf32, #tpu.memory_space<vmem>>, vector<1x32xf32>
    %8 = tpu.concatenate %7, %6 in 0 : vector<1x32xf32>, vector<4x32xf32> -> vector<5x32xf32>
    %c0_8 = arith.constant 0 : index
    %c0_9 = arith.constant 0 : index
    %9 = vector.load %arg5[%c0_8, %c0_9] : memref<5x32xf32, #tpu.memory_space<vmem>>, vector<5x32xf32>
    %10 = arith.addf %8, %9 : vector<5x32xf32>
    %c0_10 = arith.constant 0 : index
    %c0_11 = arith.constant 0 : index
    %c0_12 = arith.constant 0 : index
    %11 = vector.load %arg6[%c0_10, %c0_11, %c0_12] : memref<2x1x32xf32, #tpu.memory_space<vmem>>, vector<1x1x32xf32>
    %12 = vector.shape_cast %11 : vector<1x1x32xf32> to vector<1x32xf32>
    %c0_13 = arith.constant 0 : index
    %c0_14 = arith.constant 0 : index
    %c0_15 = arith.constant 0 : index
    %13 = vector.load %arg7[%c0_13, %c0_14, %c0_15] : memref<2x1x32xf32, #tpu.memory_space<vmem>>, vector<1x1x32xf32>
    %14 = vector.shape_cast %13 : vector<1x1x32xf32> to vector<1x32xf32>
    %cst_16 = arith.constant dense<0.000000e+00> : vector<5xf32>
    %15 = vector.multi_reduction <add>, %10, %cst_16 [1] : vector<5x32xf32> to vector<5xf32>
    %16 = vector.shape_cast %15 : vector<5xf32> to vector<5x1xf32>
    %cst_17 = arith.constant 3.200000e+01 : f32
    %17 = vector.broadcast %cst_17 : f32 to vector<5x1xf32>
    %18 = arith.divf %16, %17 : vector<5x1xf32>
    %19 = vector.broadcast %18 : vector<5x1xf32> to vector<5x32xf32>
    %20 = arith.subf %10, %19 : vector<5x32xf32>
    %21 = arith.mulf %20, %20 : vector<5x32xf32>
    %cst_18 = arith.constant dense<0.000000e+00> : vector<5xf32>
    %22 = vector.multi_reduction <add>, %21, %cst_18 [1] : vector<5x32xf32> to vector<5xf32>
    %23 = vector.shape_cast %22 : vector<5xf32> to vector<5x1xf32>
    %cst_19 = arith.constant 3.200000e+01 : f32
    %24 = vector.broadcast %cst_19 : f32 to vector<5x1xf32>
    %25 = arith.divf %23, %24 : vector<5x1xf32>
    %26 = vector.broadcast %18 : vector<5x1xf32> to vector<5x32xf32>
    %27 = arith.subf %10, %26 : vector<5x32xf32>
    %cst_20 = arith.constant 9.99999997E-7 : f32
    %28 = vector.broadcast %cst_20 : f32 to vector<5x1xf32>
    %29 = arith.addf %25, %28 : vector<5x1xf32>
    %30 = math.rsqrt %29 : vector<5x1xf32>
    %31 = vector.broadcast %30 : vector<5x1xf32> to vector<5x32xf32>
    %32 = arith.mulf %27, %31 : vector<5x32xf32>
    %33 = vector.broadcast %12 : vector<1x32xf32> to vector<5x32xf32>
    %34 = arith.mulf %32, %33 : vector<5x32xf32>
    %35 = vector.broadcast %14 : vector<1x32xf32> to vector<5x32xf32>
    %36 = arith.addf %34, %35 : vector<5x32xf32>
    %c0_21 = arith.constant 0 : index
    %c0_22 = arith.constant 0 : index
    %c0_23 = arith.constant 0 : index
    %37 = vector.load %arg8[%c0_21, %c0_22, %c0_23] : memref<2x32x96xf32, #tpu.memory_space<vmem>>, vector<1x32x96xf32>
    %38 = vector.shape_cast %37 : vector<1x32x96xf32> to vector<32x96xf32>
    %cst_24 = arith.constant dense<0.000000e+00> : vector<5x96xf32>
    %39 = tpu.matmul %36, %38, %cst_24 {dimension_numbers = #tpu.dot_dimension_numbers<[1], [0], [0], [1], [0, 0, 1, 1], [], []>} : vector<5x32xf32>, vector<32x96xf32>, vector<5x96xf32> -> vector<5x96xf32>
    %c0_25 = arith.constant 0 : index
    %c0_26 = arith.constant 0 : index
    %c0_27 = arith.constant 0 : index
    %40 = vector.load %arg9[%c0_25, %c0_26, %c0_27] : memref<2x1x96xf32, #tpu.memory_space<vmem>>, vector<1x1x96xf32>
    %41 = vector.shape_cast %40 : vector<1x1x96xf32> to vector<1x96xf32>
    %42 = vector.broadcast %41 : vector<1x96xf32> to vector<5x96xf32>
    %43 = arith.addf %39, %42 : vector<5x96xf32>
    %44 = vector.extract_strided_slice %43 {offsets = [0, 0], sizes = [5, 8], strides = [1, 1]} : vector<5x96xf32> to vector<5x8xf32>
    %cst_28 = arith.constant 0.353553385 : f32
    %45 = vector.broadcast %cst_28 : f32 to vector<5x8xf32>
    %46 = arith.mulf %44, %45 : vector<5x8xf32>
    %47 = vector.extract_strided_slice %43 {offsets = [0, 32], sizes = [5, 8], strides = [1, 1]} : vector<5x96xf32> to vector<5x8xf32>
    %48 = vector.extract_strided_slice %43 {offsets = [0, 64], sizes = [5, 8], strides = [1, 1]} : vector<5x96xf32> to vector<5x8xf32>
    %cst_29 = arith.constant dense<0.000000e+00> : vector<5x5xf32>
    %49 = tpu.matmul %46, %47, %cst_29 {dimension_numbers = #tpu.dot_dimension_numbers<[1], [1], [0], [0], [0, 0, 1, 0], [], []>} : vector<5x8xf32>, vector<5x8xf32>, vector<5x5xf32> -> vector<5x5xf32>
    %cst_30 = arith.constant dense<0xFF800000> : vector<5xf32>
    %50 = vector.multi_reduction <maximumf>, %49, %cst_30 [1] : vector<5x5xf32> to vector<5xf32>
    %51 = vector.shape_cast %50 : vector<5xf32> to vector<5x1xf32>
    %52 = vector.broadcast %51 : vector<5x1xf32> to vector<5x5xf32>
    %53 = arith.subf %49, %52 : vector<5x5xf32>
    %54 = math.exp %53 : vector<5x5xf32>
    %cst_31 = arith.constant dense<0.000000e+00> : vector<5xf32>
    %55 = vector.multi_reduction <add>, %54, %cst_31 [1] : vector<5x5xf32> to vector<5xf32>
    %56 = vector.shape_cast %55 : vector<5xf32> to vector<5x1xf32>
    %57 = vector.broadcast %56 : vector<5x1xf32> to vector<5x5xf32>
    %58 = arith.divf %54, %57 : vector<5x5xf32>
    %cst_32 = arith.constant dense<0.000000e+00> : vector<5x8xf32>
    %59 = tpu.matmul %58, %48, %cst_32 {dimension_numbers = #tpu.dot_dimension_numbers<[1], [0], [0], [1], [0, 0, 1, 1], [], []>} : vector<5x5xf32>, vector<5x8xf32>, vector<5x8xf32> -> vector<5x8xf32>
    %60 = vector.extract_strided_slice %43 {offsets = [0, 8], sizes = [5, 8], strides = [1, 1]} : vector<5x96xf32> to vector<5x8xf32>
    %cst_33 = arith.constant 0.353553385 : f32
    %61 = vector.broadcast %cst_33 : f32 to vector<5x8xf32>
    %62 = arith.mulf %60, %61 : vector<5x8xf32>
    %63 = vector.extract_strided_slice %43 {offsets = [0, 40], sizes = [5, 8], strides = [1, 1]} : vector<5x96xf32> to vector<5x8xf32>
    %64 = vector.extract_strided_slice %43 {offsets = [0, 72], sizes = [5, 8], strides = [1, 1]} : vector<5x96xf32> to vector<5x8xf32>
    %cst_34 = arith.constant dense<0.000000e+00> : vector<5x5xf32>
    %65 = tpu.matmul %62, %63, %cst_34 {dimension_numbers = #tpu.dot_dimension_numbers<[1], [1], [0], [0], [0, 0, 1, 0], [], []>} : vector<5x8xf32>, vector<5x8xf32>, vector<5x5xf32> -> vector<5x5xf32>
    %cst_35 = arith.constant dense<0xFF800000> : vector<5xf32>
    %66 = vector.multi_reduction <maximumf>, %65, %cst_35 [1] : vector<5x5xf32> to vector<5xf32>
    %67 = vector.shape_cast %66 : vector<5xf32> to vector<5x1xf32>
    %68 = vector.broadcast %67 : vector<5x1xf32> to vector<5x5xf32>
    %69 = arith.subf %65, %68 : vector<5x5xf32>
    %70 = math.exp %69 : vector<5x5xf32>
    %cst_36 = arith.constant dense<0.000000e+00> : vector<5xf32>
    %71 = vector.multi_reduction <add>, %70, %cst_36 [1] : vector<5x5xf32> to vector<5xf32>
    %72 = vector.shape_cast %71 : vector<5xf32> to vector<5x1xf32>
    %73 = vector.broadcast %72 : vector<5x1xf32> to vector<5x5xf32>
    %74 = arith.divf %70, %73 : vector<5x5xf32>
    %cst_37 = arith.constant dense<0.000000e+00> : vector<5x8xf32>
    %75 = tpu.matmul %74, %64, %cst_37 {dimension_numbers = #tpu.dot_dimension_numbers<[1], [0], [0], [1], [0, 0, 1, 1], [], []>} : vector<5x5xf32>, vector<5x8xf32>, vector<5x8xf32> -> vector<5x8xf32>
    %76 = vector.extract_strided_slice %43 {offsets = [0, 16], sizes = [5, 8], strides = [1, 1]} : vector<5x96xf32> to vector<5x8xf32>
    %cst_38 = arith.constant 0.353553385 : f32
    %77 = vector.broadcast %cst_38 : f32 to vector<5x8xf32>
    %78 = arith.mulf %76, %77 : vector<5x8xf32>
    %79 = vector.extract_strided_slice %43 {offsets = [0, 48], sizes = [5, 8], strides = [1, 1]} : vector<5x96xf32> to vector<5x8xf32>
    %80 = vector.extract_strided_slice %43 {offsets = [0, 80], sizes = [5, 8], strides = [1, 1]} : vector<5x96xf32> to vector<5x8xf32>
    %cst_39 = arith.constant dense<0.000000e+00> : vector<5x5xf32>
    %81 = tpu.matmul %78, %79, %cst_39 {dimension_numbers = #tpu.dot_dimension_numbers<[1], [1], [0], [0], [0, 0, 1, 0], [], []>} : vector<5x8xf32>, vector<5x8xf32>, vector<5x5xf32> -> vector<5x5xf32>
    %cst_40 = arith.constant dense<0xFF800000> : vector<5xf32>
    %82 = vector.multi_reduction <maximumf>, %81, %cst_40 [1] : vector<5x5xf32> to vector<5xf32>
    %83 = vector.shape_cast %82 : vector<5xf32> to vector<5x1xf32>
    %84 = vector.broadcast %83 : vector<5x1xf32> to vector<5x5xf32>
    %85 = arith.subf %81, %84 : vector<5x5xf32>
    %86 = math.exp %85 : vector<5x5xf32>
    %cst_41 = arith.constant dense<0.000000e+00> : vector<5xf32>
    %87 = vector.multi_reduction <add>, %86, %cst_41 [1] : vector<5x5xf32> to vector<5xf32>
    %88 = vector.shape_cast %87 : vector<5xf32> to vector<5x1xf32>
    %89 = vector.broadcast %88 : vector<5x1xf32> to vector<5x5xf32>
    %90 = arith.divf %86, %89 : vector<5x5xf32>
    %cst_42 = arith.constant dense<0.000000e+00> : vector<5x8xf32>
    %91 = tpu.matmul %90, %80, %cst_42 {dimension_numbers = #tpu.dot_dimension_numbers<[1], [0], [0], [1], [0, 0, 1, 1], [], []>} : vector<5x5xf32>, vector<5x8xf32>, vector<5x8xf32> -> vector<5x8xf32>
    %92 = vector.extract_strided_slice %43 {offsets = [0, 24], sizes = [5, 8], strides = [1, 1]} : vector<5x96xf32> to vector<5x8xf32>
    %cst_43 = arith.constant 0.353553385 : f32
    %93 = vector.broadcast %cst_43 : f32 to vector<5x8xf32>
    %94 = arith.mulf %92, %93 : vector<5x8xf32>
    %95 = vector.extract_strided_slice %43 {offsets = [0, 56], sizes = [5, 8], strides = [1, 1]} : vector<5x96xf32> to vector<5x8xf32>
    %96 = vector.extract_strided_slice %43 {offsets = [0, 88], sizes = [5, 8], strides = [1, 1]} : vector<5x96xf32> to vector<5x8xf32>
    %cst_44 = arith.constant dense<0.000000e+00> : vector<5x5xf32>
    %97 = tpu.matmul %94, %95, %cst_44 {dimension_numbers = #tpu.dot_dimension_numbers<[1], [1], [0], [0], [0, 0, 1, 0], [], []>} : vector<5x8xf32>, vector<5x8xf32>, vector<5x5xf32> -> vector<5x5xf32>
    %cst_45 = arith.constant dense<0xFF800000> : vector<5xf32>
    %98 = vector.multi_reduction <maximumf>, %97, %cst_45 [1] : vector<5x5xf32> to vector<5xf32>
    %99 = vector.shape_cast %98 : vector<5xf32> to vector<5x1xf32>
    %100 = vector.broadcast %99 : vector<5x1xf32> to vector<5x5xf32>
    %101 = arith.subf %97, %100 : vector<5x5xf32>
    %102 = math.exp %101 : vector<5x5xf32>
    %cst_46 = arith.constant dense<0.000000e+00> : vector<5xf32>
    %103 = vector.multi_reduction <add>, %102, %cst_46 [1] : vector<5x5xf32> to vector<5xf32>
    %104 = vector.shape_cast %103 : vector<5xf32> to vector<5x1xf32>
    %105 = vector.broadcast %104 : vector<5x1xf32> to vector<5x5xf32>
    %106 = arith.divf %102, %105 : vector<5x5xf32>
    %cst_47 = arith.constant dense<0.000000e+00> : vector<5x8xf32>
    %107 = tpu.matmul %106, %96, %cst_47 {dimension_numbers = #tpu.dot_dimension_numbers<[1], [0], [0], [1], [0, 0, 1, 1], [], []>} : vector<5x5xf32>, vector<5x8xf32>, vector<5x8xf32> -> vector<5x8xf32>
    %108 = tpu.concatenate %59, %75, %91, %107 in 1 : vector<5x8xf32>, vector<5x8xf32>, vector<5x8xf32>, vector<5x8xf32> -> vector<5x32xf32>
    %c0_48 = arith.constant 0 : index
    %c0_49 = arith.constant 0 : index
    %c0_50 = arith.constant 0 : index
    %109 = vector.load %arg10[%c0_48, %c0_49, %c0_50] : memref<2x32x32xf32, #tpu.memory_space<vmem>>, vector<1x32x32xf32>
    %110 = vector.shape_cast %109 : vector<1x32x32xf32> to vector<32x32xf32>
    %cst_51 = arith.constant dense<0.000000e+00> : vector<5x32xf32>
    %111 = tpu.matmul %108, %110, %cst_51 {dimension_numbers = #tpu.dot_dimension_numbers<[1], [0], [0], [1], [0, 0, 1, 1], [], []>} : vector<5x32xf32>, vector<32x32xf32>, vector<5x32xf32> -> vector<5x32xf32>
    %112 = arith.addf %10, %111 : vector<5x32xf32>
    %c0_52 = arith.constant 0 : index
    %c0_53 = arith.constant 0 : index
    %c0_54 = arith.constant 0 : index
    %113 = vector.load %arg11[%c0_52, %c0_53, %c0_54] : memref<2x1x32xf32, #tpu.memory_space<vmem>>, vector<1x1x32xf32>
    %114 = vector.shape_cast %113 : vector<1x1x32xf32> to vector<1x32xf32>
    %115 = vector.broadcast %114 : vector<1x32xf32> to vector<5x32xf32>
    %116 = arith.addf %112, %115 : vector<5x32xf32>
    %c0_55 = arith.constant 0 : index
    %c0_56 = arith.constant 0 : index
    %c0_57 = arith.constant 0 : index
    %117 = vector.load %arg12[%c0_55, %c0_56, %c0_57] : memref<2x1x32xf32, #tpu.memory_space<vmem>>, vector<1x1x32xf32>
    %118 = vector.shape_cast %117 : vector<1x1x32xf32> to vector<1x32xf32>
    %c0_58 = arith.constant 0 : index
    %c0_59 = arith.constant 0 : index
    %c0_60 = arith.constant 0 : index
    %119 = vector.load %arg13[%c0_58, %c0_59, %c0_60] : memref<2x1x32xf32, #tpu.memory_space<vmem>>, vector<1x1x32xf32>
    %120 = vector.shape_cast %119 : vector<1x1x32xf32> to vector<1x32xf32>
    %cst_61 = arith.constant dense<0.000000e+00> : vector<5xf32>
    %121 = vector.multi_reduction <add>, %116, %cst_61 [1] : vector<5x32xf32> to vector<5xf32>
    %122 = vector.shape_cast %121 : vector<5xf32> to vector<5x1xf32>
    %cst_62 = arith.constant 3.200000e+01 : f32
    %123 = vector.broadcast %cst_62 : f32 to vector<5x1xf32>
    %124 = arith.divf %122, %123 : vector<5x1xf32>
    %125 = vector.broadcast %124 : vector<5x1xf32> to vector<5x32xf32>
    %126 = arith.subf %116, %125 : vector<5x32xf32>
    %127 = arith.mulf %126, %126 : vector<5x32xf32>
    %cst_63 = arith.constant dense<0.000000e+00> : vector<5xf32>
    %128 = vector.multi_reduction <add>, %127, %cst_63 [1] : vector<5x32xf32> to vector<5xf32>
    %129 = vector.shape_cast %128 : vector<5xf32> to vector<5x1xf32>
    %cst_64 = arith.constant 3.200000e+01 : f32
    %130 = vector.broadcast %cst_64 : f32 to vector<5x1xf32>
    %131 = arith.divf %129, %130 : vector<5x1xf32>
    %132 = vector.broadcast %124 : vector<5x1xf32> to vector<5x32xf32>
    %133 = arith.subf %116, %132 : vector<5x32xf32>
    %cst_65 = arith.constant 9.99999997E-7 : f32
    %134 = vector.broadcast %cst_65 : f32 to vector<5x1xf32>
    %135 = arith.addf %131, %134 : vector<5x1xf32>
    %136 = math.rsqrt %135 : vector<5x1xf32>
    %137 = vector.broadcast %136 : vector<5x1xf32> to vector<5x32xf32>
    %138 = arith.mulf %133, %137 : vector<5x32xf32>
    %139 = vector.broadcast %118 : vector<1x32xf32> to vector<5x32xf32>
    %140 = arith.mulf %138, %139 : vector<5x32xf32>
    %141 = vector.broadcast %120 : vector<1x32xf32> to vector<5x32xf32>
    %142 = arith.addf %140, %141 : vector<5x32xf32>
    %c0_66 = arith.constant 0 : index
    %c0_67 = arith.constant 0 : index
    %c0_68 = arith.constant 0 : index
    %143 = vector.load %arg14[%c0_66, %c0_67, %c0_68] : memref<2x32x128xf32, #tpu.memory_space<vmem>>, vector<1x32x128xf32>
    %144 = vector.shape_cast %143 : vector<1x32x128xf32> to vector<32x128xf32>
    %cst_69 = arith.constant dense<0.000000e+00> : vector<5x128xf32>
    %145 = tpu.matmul %142, %144, %cst_69 {dimension_numbers = #tpu.dot_dimension_numbers<[1], [0], [0], [1], [0, 0, 1, 1], [], []>} : vector<5x32xf32>, vector<32x128xf32>, vector<5x128xf32> -> vector<5x128xf32>
    %c0_70 = arith.constant 0 : index
    %c0_71 = arith.constant 0 : index
    %c0_72 = arith.constant 0 : index
    %146 = vector.load %arg15[%c0_70, %c0_71, %c0_72] : memref<2x1x128xf32, #tpu.memory_space<vmem>>, vector<1x1x128xf32>
    %147 = vector.shape_cast %146 : vector<1x1x128xf32> to vector<1x128xf32>
    %148 = vector.broadcast %147 : vector<1x128xf32> to vector<5x128xf32>
    %149 = arith.addf %145, %148 : vector<5x128xf32>
    %cst_73 = arith.constant 5.000000e-01 : f32
    %150 = vector.broadcast %cst_73 : f32 to vector<5x128xf32>
    %151 = arith.mulf %150, %149 : vector<5x128xf32>
    %cst_74 = arith.constant 0.707106769 : f32
    %152 = vector.broadcast %cst_74 : f32 to vector<5x128xf32>
    %153 = arith.mulf %149, %152 : vector<5x128xf32>
    %cst_75 = arith.constant 0.000000e+00 : f32
    %154 = vector.broadcast %cst_75 : f32 to vector<5x128xf32>
    %155 = arith.cmpf oge, %153, %154 : vector<5x128xf32>
    %cst_76 = arith.constant 1.000000e+00 : f32
    %cst_77 = arith.constant -1.000000e+00 : f32
    %156 = vector.broadcast %cst_76 : f32 to vector<5x128xf32>
    %157 = vector.broadcast %cst_77 : f32 to vector<5x128xf32>
    %158 = arith.select %155, %156, %157 : vector<5x128xi1>, vector<5x128xf32>
    %159 = math.absf %153 : vector<5x128xf32>
    %cst_78 = arith.constant 0.327591091 : f32
    %160 = vector.broadcast %cst_78 : f32 to vector<5x128xf32>
    %161 = arith.mulf %160, %159 : vector<5x128xf32>
    %cst_79 = arith.constant 1.000000e+00 : f32
    %162 = vector.broadcast %cst_79 : f32 to vector<5x128xf32>
    %163 = arith.addf %162, %161 : vector<5x128xf32>
    %cst_80 = arith.constant 1.000000e+00 : f32
    %164 = vector.broadcast %cst_80 : f32 to vector<5x128xf32>
    %165 = arith.divf %164, %163 : vector<5x128xf32>
    %cst_81 = arith.constant 1.06140542 : f32
    %166 = vector.broadcast %cst_81 : f32 to vector<5x128xf32>
    %167 = arith.mulf %165, %166 : vector<5x128xf32>
    %cst_82 = arith.constant -1.45315206 : f32
    %168 = vector.broadcast %cst_82 : f32 to vector<5x128xf32>
    %169 = arith.addf %168, %167 : vector<5x128xf32>
    %170 = arith.mulf %165, %169 : vector<5x128xf32>
    %cst_83 = arith.constant 1.42141378 : f32
    %171 = vector.broadcast %cst_83 : f32 to vector<5x128xf32>
    %172 = arith.addf %171, %170 : vector<5x128xf32>
    %173 = arith.mulf %165, %172 : vector<5x128xf32>
    %cst_84 = arith.constant -0.284496725 : f32
    %174 = vector.broadcast %cst_84 : f32 to vector<5x128xf32>
    %175 = arith.addf %174, %173 : vector<5x128xf32>
    %176 = arith.mulf %165, %175 : vector<5x128xf32>
    %cst_85 = arith.constant 0.254829586 : f32
    %177 = vector.broadcast %cst_85 : f32 to vector<5x128xf32>
    %178 = arith.addf %177, %176 : vector<5x128xf32>
    %179 = arith.mulf %165, %178 : vector<5x128xf32>
    %cst_86 = arith.constant 0.000000e+00 : f32
    %180 = vector.broadcast %cst_86 : f32 to vector<5x128xf32>
    %181 = arith.subf %180, %159 : vector<5x128xf32>
    %182 = arith.mulf %181, %159 : vector<5x128xf32>
    %183 = math.exp %182 : vector<5x128xf32>
    %184 = arith.mulf %179, %183 : vector<5x128xf32>
    %cst_87 = arith.constant 1.000000e+00 : f32
    %185 = vector.broadcast %cst_87 : f32 to vector<5x128xf32>
    %186 = arith.subf %185, %184 : vector<5x128xf32>
    %187 = arith.mulf %158, %186 : vector<5x128xf32>
    %cst_88 = arith.constant 1.000000e+00 : f32
    %188 = vector.broadcast %cst_88 : f32 to vector<5x128xf32>
    %189 = arith.addf %188, %187 : vector<5x128xf32>
    %190 = arith.mulf %151, %189 : vector<5x128xf32>
    %c0_89 = arith.constant 0 : index
    %c0_90 = arith.constant 0 : index
    %c0_91 = arith.constant 0 : index
    %191 = vector.load %arg16[%c0_89, %c0_90, %c0_91] : memref<2x128x32xf32, #tpu.memory_space<vmem>>, vector<1x128x32xf32>
    %192 = vector.shape_cast %191 : vector<1x128x32xf32> to vector<128x32xf32>
    %cst_92 = arith.constant dense<0.000000e+00> : vector<5x32xf32>
    %193 = tpu.matmul %190, %192, %cst_92 {dimension_numbers = #tpu.dot_dimension_numbers<[1], [0], [0], [1], [0, 0, 1, 1], [], []>} : vector<5x128xf32>, vector<128x32xf32>, vector<5x32xf32> -> vector<5x32xf32>
    %194 = arith.addf %116, %193 : vector<5x32xf32>
    %c0_93 = arith.constant 0 : index
    %c0_94 = arith.constant 0 : index
    %c0_95 = arith.constant 0 : index
    %195 = vector.load %arg17[%c0_93, %c0_94, %c0_95] : memref<2x1x32xf32, #tpu.memory_space<vmem>>, vector<1x1x32xf32>
    %196 = vector.shape_cast %195 : vector<1x1x32xf32> to vector<1x32xf32>
    %197 = vector.broadcast %196 : vector<1x32xf32> to vector<5x32xf32>
    %198 = arith.addf %194, %197 : vector<5x32xf32>
    %c1 = arith.constant 1 : index
    %c0_96 = arith.constant 0 : index
    %c0_97 = arith.constant 0 : index
    %199 = vector.load %arg6[%c1, %c0_96, %c0_97] : memref<2x1x32xf32, #tpu.memory_space<vmem>>, vector<1x1x32xf32>
    %200 = vector.shape_cast %199 : vector<1x1x32xf32> to vector<1x32xf32>
    %c1_98 = arith.constant 1 : index
    %c0_99 = arith.constant 0 : index
    %c0_100 = arith.constant 0 : index
    %201 = vector.load %arg7[%c1_98, %c0_99, %c0_100] : memref<2x1x32xf32, #tpu.memory_space<vmem>>, vector<1x1x32xf32>
    %202 = vector.shape_cast %201 : vector<1x1x32xf32> to vector<1x32xf32>
    %cst_101 = arith.constant dense<0.000000e+00> : vector<5xf32>
    %203 = vector.multi_reduction <add>, %198, %cst_101 [1] : vector<5x32xf32> to vector<5xf32>
    %204 = vector.shape_cast %203 : vector<5xf32> to vector<5x1xf32>
    %cst_102 = arith.constant 3.200000e+01 : f32
    %205 = vector.broadcast %cst_102 : f32 to vector<5x1xf32>
    %206 = arith.divf %204, %205 : vector<5x1xf32>
    %207 = vector.broadcast %206 : vector<5x1xf32> to vector<5x32xf32>
    %208 = arith.subf %198, %207 : vector<5x32xf32>
    %209 = arith.mulf %208, %208 : vector<5x32xf32>
    %cst_103 = arith.constant dense<0.000000e+00> : vector<5xf32>
    %210 = vector.multi_reduction <add>, %209, %cst_103 [1] : vector<5x32xf32> to vector<5xf32>
    %211 = vector.shape_cast %210 : vector<5xf32> to vector<5x1xf32>
    %cst_104 = arith.constant 3.200000e+01 : f32
    %212 = vector.broadcast %cst_104 : f32 to vector<5x1xf32>
    %213 = arith.divf %211, %212 : vector<5x1xf32>
    %214 = vector.broadcast %206 : vector<5x1xf32> to vector<5x32xf32>
    %215 = arith.subf %198, %214 : vector<5x32xf32>
    %cst_105 = arith.constant 9.99999997E-7 : f32
    %216 = vector.broadcast %cst_105 : f32 to vector<5x1xf32>
    %217 = arith.addf %213, %216 : vector<5x1xf32>
    %218 = math.rsqrt %217 : vector<5x1xf32>
    %219 = vector.broadcast %218 : vector<5x1xf32> to vector<5x32xf32>
    %220 = arith.mulf %215, %219 : vector<5x32xf32>
    %221 = vector.broadcast %200 : vector<1x32xf32> to vector<5x32xf32>
    %222 = arith.mulf %220, %221 : vector<5x32xf32>
    %223 = vector.broadcast %202 : vector<1x32xf32> to vector<5x32xf32>
    %224 = arith.addf %222, %223 : vector<5x32xf32>
    %c1_106 = arith.constant 1 : index
    %c0_107 = arith.constant 0 : index
    %c0_108 = arith.constant 0 : index
    %225 = vector.load %arg8[%c1_106, %c0_107, %c0_108] : memref<2x32x96xf32, #tpu.memory_space<vmem>>, vector<1x32x96xf32>
    %226 = vector.shape_cast %225 : vector<1x32x96xf32> to vector<32x96xf32>
    %cst_109 = arith.constant dense<0.000000e+00> : vector<5x96xf32>
    %227 = tpu.matmul %224, %226, %cst_109 {dimension_numbers = #tpu.dot_dimension_numbers<[1], [0], [0], [1], [0, 0, 1, 1], [], []>} : vector<5x32xf32>, vector<32x96xf32>, vector<5x96xf32> -> vector<5x96xf32>
    %c1_110 = arith.constant 1 : index
    %c0_111 = arith.constant 0 : index
    %c0_112 = arith.constant 0 : index
    %228 = vector.load %arg9[%c1_110, %c0_111, %c0_112] : memref<2x1x96xf32, #tpu.memory_space<vmem>>, vector<1x1x96xf32>
    %229 = vector.shape_cast %228 : vector<1x1x96xf32> to vector<1x96xf32>
    %230 = vector.broadcast %229 : vector<1x96xf32> to vector<5x96xf32>
    %231 = arith.addf %227, %230 : vector<5x96xf32>
    %232 = vector.extract_strided_slice %231 {offsets = [0, 0], sizes = [5, 8], strides = [1, 1]} : vector<5x96xf32> to vector<5x8xf32>
    %cst_113 = arith.constant 0.353553385 : f32
    %233 = vector.broadcast %cst_113 : f32 to vector<5x8xf32>
    %234 = arith.mulf %232, %233 : vector<5x8xf32>
    %235 = vector.extract_strided_slice %231 {offsets = [0, 32], sizes = [5, 8], strides = [1, 1]} : vector<5x96xf32> to vector<5x8xf32>
    %236 = vector.extract_strided_slice %231 {offsets = [0, 64], sizes = [5, 8], strides = [1, 1]} : vector<5x96xf32> to vector<5x8xf32>
    %cst_114 = arith.constant dense<0.000000e+00> : vector<5x5xf32>
    %237 = tpu.matmul %234, %235, %cst_114 {dimension_numbers = #tpu.dot_dimension_numbers<[1], [1], [0], [0], [0, 0, 1, 0], [], []>} : vector<5x8xf32>, vector<5x8xf32>, vector<5x5xf32> -> vector<5x5xf32>
    %cst_115 = arith.constant dense<0xFF800000> : vector<5xf32>
    %238 = vector.multi_reduction <maximumf>, %237, %cst_115 [1] : vector<5x5xf32> to vector<5xf32>
    %239 = vector.shape_cast %238 : vector<5xf32> to vector<5x1xf32>
    %240 = vector.broadcast %239 : vector<5x1xf32> to vector<5x5xf32>
    %241 = arith.subf %237, %240 : vector<5x5xf32>
    %242 = math.exp %241 : vector<5x5xf32>
    %cst_116 = arith.constant dense<0.000000e+00> : vector<5xf32>
    %243 = vector.multi_reduction <add>, %242, %cst_116 [1] : vector<5x5xf32> to vector<5xf32>
    %244 = vector.shape_cast %243 : vector<5xf32> to vector<5x1xf32>
    %245 = vector.broadcast %244 : vector<5x1xf32> to vector<5x5xf32>
    %246 = arith.divf %242, %245 : vector<5x5xf32>
    %cst_117 = arith.constant dense<0.000000e+00> : vector<5x8xf32>
    %247 = tpu.matmul %246, %236, %cst_117 {dimension_numbers = #tpu.dot_dimension_numbers<[1], [0], [0], [1], [0, 0, 1, 1], [], []>} : vector<5x5xf32>, vector<5x8xf32>, vector<5x8xf32> -> vector<5x8xf32>
    %248 = vector.extract_strided_slice %231 {offsets = [0, 8], sizes = [5, 8], strides = [1, 1]} : vector<5x96xf32> to vector<5x8xf32>
    %cst_118 = arith.constant 0.353553385 : f32
    %249 = vector.broadcast %cst_118 : f32 to vector<5x8xf32>
    %250 = arith.mulf %248, %249 : vector<5x8xf32>
    %251 = vector.extract_strided_slice %231 {offsets = [0, 40], sizes = [5, 8], strides = [1, 1]} : vector<5x96xf32> to vector<5x8xf32>
    %252 = vector.extract_strided_slice %231 {offsets = [0, 72], sizes = [5, 8], strides = [1, 1]} : vector<5x96xf32> to vector<5x8xf32>
    %cst_119 = arith.constant dense<0.000000e+00> : vector<5x5xf32>
    %253 = tpu.matmul %250, %251, %cst_119 {dimension_numbers = #tpu.dot_dimension_numbers<[1], [1], [0], [0], [0, 0, 1, 0], [], []>} : vector<5x8xf32>, vector<5x8xf32>, vector<5x5xf32> -> vector<5x5xf32>
    %cst_120 = arith.constant dense<0xFF800000> : vector<5xf32>
    %254 = vector.multi_reduction <maximumf>, %253, %cst_120 [1] : vector<5x5xf32> to vector<5xf32>
    %255 = vector.shape_cast %254 : vector<5xf32> to vector<5x1xf32>
    %256 = vector.broadcast %255 : vector<5x1xf32> to vector<5x5xf32>
    %257 = arith.subf %253, %256 : vector<5x5xf32>
    %258 = math.exp %257 : vector<5x5xf32>
    %cst_121 = arith.constant dense<0.000000e+00> : vector<5xf32>
    %259 = vector.multi_reduction <add>, %258, %cst_121 [1] : vector<5x5xf32> to vector<5xf32>
    %260 = vector.shape_cast %259 : vector<5xf32> to vector<5x1xf32>
    %261 = vector.broadcast %260 : vector<5x1xf32> to vector<5x5xf32>
    %262 = arith.divf %258, %261 : vector<5x5xf32>
    %cst_122 = arith.constant dense<0.000000e+00> : vector<5x8xf32>
    %263 = tpu.matmul %262, %252, %cst_122 {dimension_numbers = #tpu.dot_dimension_numbers<[1], [0], [0], [1], [0, 0, 1, 1], [], []>} : vector<5x5xf32>, vector<5x8xf32>, vector<5x8xf32> -> vector<5x8xf32>
    %264 = vector.extract_strided_slice %231 {offsets = [0, 16], sizes = [5, 8], strides = [1, 1]} : vector<5x96xf32> to vector<5x8xf32>
    %cst_123 = arith.constant 0.353553385 : f32
    %265 = vector.broadcast %cst_123 : f32 to vector<5x8xf32>
    %266 = arith.mulf %264, %265 : vector<5x8xf32>
    %267 = vector.extract_strided_slice %231 {offsets = [0, 48], sizes = [5, 8], strides = [1, 1]} : vector<5x96xf32> to vector<5x8xf32>
    %268 = vector.extract_strided_slice %231 {offsets = [0, 80], sizes = [5, 8], strides = [1, 1]} : vector<5x96xf32> to vector<5x8xf32>
    %cst_124 = arith.constant dense<0.000000e+00> : vector<5x5xf32>
    %269 = tpu.matmul %266, %267, %cst_124 {dimension_numbers = #tpu.dot_dimension_numbers<[1], [1], [0], [0], [0, 0, 1, 0], [], []>} : vector<5x8xf32>, vector<5x8xf32>, vector<5x5xf32> -> vector<5x5xf32>
    %cst_125 = arith.constant dense<0xFF800000> : vector<5xf32>
    %270 = vector.multi_reduction <maximumf>, %269, %cst_125 [1] : vector<5x5xf32> to vector<5xf32>
    %271 = vector.shape_cast %270 : vector<5xf32> to vector<5x1xf32>
    %272 = vector.broadcast %271 : vector<5x1xf32> to vector<5x5xf32>
    %273 = arith.subf %269, %272 : vector<5x5xf32>
    %274 = math.exp %273 : vector<5x5xf32>
    %cst_126 = arith.constant dense<0.000000e+00> : vector<5xf32>
    %275 = vector.multi_reduction <add>, %274, %cst_126 [1] : vector<5x5xf32> to vector<5xf32>
    %276 = vector.shape_cast %275 : vector<5xf32> to vector<5x1xf32>
    %277 = vector.broadcast %276 : vector<5x1xf32> to vector<5x5xf32>
    %278 = arith.divf %274, %277 : vector<5x5xf32>
    %cst_127 = arith.constant dense<0.000000e+00> : vector<5x8xf32>
    %279 = tpu.matmul %278, %268, %cst_127 {dimension_numbers = #tpu.dot_dimension_numbers<[1], [0], [0], [1], [0, 0, 1, 1], [], []>} : vector<5x5xf32>, vector<5x8xf32>, vector<5x8xf32> -> vector<5x8xf32>
    %280 = vector.extract_strided_slice %231 {offsets = [0, 24], sizes = [5, 8], strides = [1, 1]} : vector<5x96xf32> to vector<5x8xf32>
    %cst_128 = arith.constant 0.353553385 : f32
    %281 = vector.broadcast %cst_128 : f32 to vector<5x8xf32>
    %282 = arith.mulf %280, %281 : vector<5x8xf32>
    %283 = vector.extract_strided_slice %231 {offsets = [0, 56], sizes = [5, 8], strides = [1, 1]} : vector<5x96xf32> to vector<5x8xf32>
    %284 = vector.extract_strided_slice %231 {offsets = [0, 88], sizes = [5, 8], strides = [1, 1]} : vector<5x96xf32> to vector<5x8xf32>
    %cst_129 = arith.constant dense<0.000000e+00> : vector<5x5xf32>
    %285 = tpu.matmul %282, %283, %cst_129 {dimension_numbers = #tpu.dot_dimension_numbers<[1], [1], [0], [0], [0, 0, 1, 0], [], []>} : vector<5x8xf32>, vector<5x8xf32>, vector<5x5xf32> -> vector<5x5xf32>
    %cst_130 = arith.constant dense<0xFF800000> : vector<5xf32>
    %286 = vector.multi_reduction <maximumf>, %285, %cst_130 [1] : vector<5x5xf32> to vector<5xf32>
    %287 = vector.shape_cast %286 : vector<5xf32> to vector<5x1xf32>
    %288 = vector.broadcast %287 : vector<5x1xf32> to vector<5x5xf32>
    %289 = arith.subf %285, %288 : vector<5x5xf32>
    %290 = math.exp %289 : vector<5x5xf32>
    %cst_131 = arith.constant dense<0.000000e+00> : vector<5xf32>
    %291 = vector.multi_reduction <add>, %290, %cst_131 [1] : vector<5x5xf32> to vector<5xf32>
    %292 = vector.shape_cast %291 : vector<5xf32> to vector<5x1xf32>
    %293 = vector.broadcast %292 : vector<5x1xf32> to vector<5x5xf32>
    %294 = arith.divf %290, %293 : vector<5x5xf32>
    %cst_132 = arith.constant dense<0.000000e+00> : vector<5x8xf32>
    %295 = tpu.matmul %294, %284, %cst_132 {dimension_numbers = #tpu.dot_dimension_numbers<[1], [0], [0], [1], [0, 0, 1, 1], [], []>} : vector<5x5xf32>, vector<5x8xf32>, vector<5x8xf32> -> vector<5x8xf32>
    %296 = tpu.concatenate %247, %263, %279, %295 in 1 : vector<5x8xf32>, vector<5x8xf32>, vector<5x8xf32>, vector<5x8xf32> -> vector<5x32xf32>
    %c1_133 = arith.constant 1 : index
    %c0_134 = arith.constant 0 : index
    %c0_135 = arith.constant 0 : index
    %297 = vector.load %arg10[%c1_133, %c0_134, %c0_135] : memref<2x32x32xf32, #tpu.memory_space<vmem>>, vector<1x32x32xf32>
    %298 = vector.shape_cast %297 : vector<1x32x32xf32> to vector<32x32xf32>
    %cst_136 = arith.constant dense<0.000000e+00> : vector<5x32xf32>
    %299 = tpu.matmul %296, %298, %cst_136 {dimension_numbers = #tpu.dot_dimension_numbers<[1], [0], [0], [1], [0, 0, 1, 1], [], []>} : vector<5x32xf32>, vector<32x32xf32>, vector<5x32xf32> -> vector<5x32xf32>
    %300 = arith.addf %198, %299 : vector<5x32xf32>
    %c1_137 = arith.constant 1 : index
    %c0_138 = arith.constant 0 : index
    %c0_139 = arith.constant 0 : index
    %301 = vector.load %arg11[%c1_137, %c0_138, %c0_139] : memref<2x1x32xf32, #tpu.memory_space<vmem>>, vector<1x1x32xf32>
    %302 = vector.shape_cast %301 : vector<1x1x32xf32> to vector<1x32xf32>
    %303 = vector.broadcast %302 : vector<1x32xf32> to vector<5x32xf32>
    %304 = arith.addf %300, %303 : vector<5x32xf32>
    %c1_140 = arith.constant 1 : index
    %c0_141 = arith.constant 0 : index
    %c0_142 = arith.constant 0 : index
    %305 = vector.load %arg12[%c1_140, %c0_141, %c0_142] : memref<2x1x32xf32, #tpu.memory_space<vmem>>, vector<1x1x32xf32>
    %306 = vector.shape_cast %305 : vector<1x1x32xf32> to vector<1x32xf32>
    %c1_143 = arith.constant 1 : index
    %c0_144 = arith.constant 0 : index
    %c0_145 = arith.constant 0 : index
    %307 = vector.load %arg13[%c1_143, %c0_144, %c0_145] : memref<2x1x32xf32, #tpu.memory_space<vmem>>, vector<1x1x32xf32>
    %308 = vector.shape_cast %307 : vector<1x1x32xf32> to vector<1x32xf32>
    %cst_146 = arith.constant dense<0.000000e+00> : vector<5xf32>
    %309 = vector.multi_reduction <add>, %304, %cst_146 [1] : vector<5x32xf32> to vector<5xf32>
    %310 = vector.shape_cast %309 : vector<5xf32> to vector<5x1xf32>
    %cst_147 = arith.constant 3.200000e+01 : f32
    %311 = vector.broadcast %cst_147 : f32 to vector<5x1xf32>
    %312 = arith.divf %310, %311 : vector<5x1xf32>
    %313 = vector.broadcast %312 : vector<5x1xf32> to vector<5x32xf32>
    %314 = arith.subf %304, %313 : vector<5x32xf32>
    %315 = arith.mulf %314, %314 : vector<5x32xf32>
    %cst_148 = arith.constant dense<0.000000e+00> : vector<5xf32>
    %316 = vector.multi_reduction <add>, %315, %cst_148 [1] : vector<5x32xf32> to vector<5xf32>
    %317 = vector.shape_cast %316 : vector<5xf32> to vector<5x1xf32>
    %cst_149 = arith.constant 3.200000e+01 : f32
    %318 = vector.broadcast %cst_149 : f32 to vector<5x1xf32>
    %319 = arith.divf %317, %318 : vector<5x1xf32>
    %320 = vector.broadcast %312 : vector<5x1xf32> to vector<5x32xf32>
    %321 = arith.subf %304, %320 : vector<5x32xf32>
    %cst_150 = arith.constant 9.99999997E-7 : f32
    %322 = vector.broadcast %cst_150 : f32 to vector<5x1xf32>
    %323 = arith.addf %319, %322 : vector<5x1xf32>
    %324 = math.rsqrt %323 : vector<5x1xf32>
    %325 = vector.broadcast %324 : vector<5x1xf32> to vector<5x32xf32>
    %326 = arith.mulf %321, %325 : vector<5x32xf32>
    %327 = vector.broadcast %306 : vector<1x32xf32> to vector<5x32xf32>
    %328 = arith.mulf %326, %327 : vector<5x32xf32>
    %329 = vector.broadcast %308 : vector<1x32xf32> to vector<5x32xf32>
    %330 = arith.addf %328, %329 : vector<5x32xf32>
    %c1_151 = arith.constant 1 : index
    %c0_152 = arith.constant 0 : index
    %c0_153 = arith.constant 0 : index
    %331 = vector.load %arg14[%c1_151, %c0_152, %c0_153] : memref<2x32x128xf32, #tpu.memory_space<vmem>>, vector<1x32x128xf32>
    %332 = vector.shape_cast %331 : vector<1x32x128xf32> to vector<32x128xf32>
    %cst_154 = arith.constant dense<0.000000e+00> : vector<5x128xf32>
    %333 = tpu.matmul %330, %332, %cst_154 {dimension_numbers = #tpu.dot_dimension_numbers<[1], [0], [0], [1], [0, 0, 1, 1], [], []>} : vector<5x32xf32>, vector<32x128xf32>, vector<5x128xf32> -> vector<5x128xf32>
    %c1_155 = arith.constant 1 : index
    %c0_156 = arith.constant 0 : index
    %c0_157 = arith.constant 0 : index
    %334 = vector.load %arg15[%c1_155, %c0_156, %c0_157] : memref<2x1x128xf32, #tpu.memory_space<vmem>>, vector<1x1x128xf32>
    %335 = vector.shape_cast %334 : vector<1x1x128xf32> to vector<1x128xf32>
    %336 = vector.broadcast %335 : vector<1x128xf32> to vector<5x128xf32>
    %337 = arith.addf %333, %336 : vector<5x128xf32>
    %cst_158 = arith.constant 5.000000e-01 : f32
    %338 = vector.broadcast %cst_158 : f32 to vector<5x128xf32>
    %339 = arith.mulf %338, %337 : vector<5x128xf32>
    %cst_159 = arith.constant 0.707106769 : f32
    %340 = vector.broadcast %cst_159 : f32 to vector<5x128xf32>
    %341 = arith.mulf %337, %340 : vector<5x128xf32>
    %cst_160 = arith.constant 0.000000e+00 : f32
    %342 = vector.broadcast %cst_160 : f32 to vector<5x128xf32>
    %343 = arith.cmpf oge, %341, %342 : vector<5x128xf32>
    %cst_161 = arith.constant 1.000000e+00 : f32
    %cst_162 = arith.constant -1.000000e+00 : f32
    %344 = vector.broadcast %cst_161 : f32 to vector<5x128xf32>
    %345 = vector.broadcast %cst_162 : f32 to vector<5x128xf32>
    %346 = arith.select %343, %344, %345 : vector<5x128xi1>, vector<5x128xf32>
    %347 = math.absf %341 : vector<5x128xf32>
    %cst_163 = arith.constant 0.327591091 : f32
    %348 = vector.broadcast %cst_163 : f32 to vector<5x128xf32>
    %349 = arith.mulf %348, %347 : vector<5x128xf32>
    %cst_164 = arith.constant 1.000000e+00 : f32
    %350 = vector.broadcast %cst_164 : f32 to vector<5x128xf32>
    %351 = arith.addf %350, %349 : vector<5x128xf32>
    %cst_165 = arith.constant 1.000000e+00 : f32
    %352 = vector.broadcast %cst_165 : f32 to vector<5x128xf32>
    %353 = arith.divf %352, %351 : vector<5x128xf32>
    %cst_166 = arith.constant 1.06140542 : f32
    %354 = vector.broadcast %cst_166 : f32 to vector<5x128xf32>
    %355 = arith.mulf %353, %354 : vector<5x128xf32>
    %cst_167 = arith.constant -1.45315206 : f32
    %356 = vector.broadcast %cst_167 : f32 to vector<5x128xf32>
    %357 = arith.addf %356, %355 : vector<5x128xf32>
    %358 = arith.mulf %353, %357 : vector<5x128xf32>
    %cst_168 = arith.constant 1.42141378 : f32
    %359 = vector.broadcast %cst_168 : f32 to vector<5x128xf32>
    %360 = arith.addf %359, %358 : vector<5x128xf32>
    %361 = arith.mulf %353, %360 : vector<5x128xf32>
    %cst_169 = arith.constant -0.284496725 : f32
    %362 = vector.broadcast %cst_169 : f32 to vector<5x128xf32>
    %363 = arith.addf %362, %361 : vector<5x128xf32>
    %364 = arith.mulf %353, %363 : vector<5x128xf32>
    %cst_170 = arith.constant 0.254829586 : f32
    %365 = vector.broadcast %cst_170 : f32 to vector<5x128xf32>
    %366 = arith.addf %365, %364 : vector<5x128xf32>
    %367 = arith.mulf %353, %366 : vector<5x128xf32>
    %cst_171 = arith.constant 0.000000e+00 : f32
    %368 = vector.broadcast %cst_171 : f32 to vector<5x128xf32>
    %369 = arith.subf %368, %347 : vector<5x128xf32>
    %370 = arith.mulf %369, %347 : vector<5x128xf32>
    %371 = math.exp %370 : vector<5x128xf32>
    %372 = arith.mulf %367, %371 : vector<5x128xf32>
    %cst_172 = arith.constant 1.000000e+00 : f32
    %373 = vector.broadcast %cst_172 : f32 to vector<5x128xf32>
    %374 = arith.subf %373, %372 : vector<5x128xf32>
    %375 = arith.mulf %346, %374 : vector<5x128xf32>
    %cst_173 = arith.constant 1.000000e+00 : f32
    %376 = vector.broadcast %cst_173 : f32 to vector<5x128xf32>
    %377 = arith.addf %376, %375 : vector<5x128xf32>
    %378 = arith.mulf %339, %377 : vector<5x128xf32>
    %c1_174 = arith.constant 1 : index
    %c0_175 = arith.constant 0 : index
    %c0_176 = arith.constant 0 : index
    %379 = vector.load %arg16[%c1_174, %c0_175, %c0_176] : memref<2x128x32xf32, #tpu.memory_space<vmem>>, vector<1x128x32xf32>
    %380 = vector.shape_cast %379 : vector<1x128x32xf32> to vector<128x32xf32>
    %cst_177 = arith.constant dense<0.000000e+00> : vector<5x32xf32>
    %381 = tpu.matmul %378, %380, %cst_177 {dimension_numbers = #tpu.dot_dimension_numbers<[1], [0], [0], [1], [0, 0, 1, 1], [], []>} : vector<5x128xf32>, vector<128x32xf32>, vector<5x32xf32> -> vector<5x32xf32>
    %382 = arith.addf %304, %381 : vector<5x32xf32>
    %c1_178 = arith.constant 1 : index
    %c0_179 = arith.constant 0 : index
    %c0_180 = arith.constant 0 : index
    %383 = vector.load %arg17[%c1_178, %c0_179, %c0_180] : memref<2x1x32xf32, #tpu.memory_space<vmem>>, vector<1x1x32xf32>
    %384 = vector.shape_cast %383 : vector<1x1x32xf32> to vector<1x32xf32>
    %385 = vector.broadcast %384 : vector<1x32xf32> to vector<5x32xf32>
    %386 = arith.addf %382, %385 : vector<5x32xf32>
    %387 = vector.extract_strided_slice %386 {offsets = [0, 0], sizes = [1, 32], strides = [1, 1]} : vector<5x32xf32> to vector<1x32xf32>
    %c0_181 = arith.constant 0 : index
    %c0_182 = arith.constant 0 : index
    %388 = vector.load %arg18[%c0_181, %c0_182] : memref<1x32xf32, #tpu.memory_space<vmem>>, vector<1x32xf32>
    %c0_183 = arith.constant 0 : index
    %c0_184 = arith.constant 0 : index
    %389 = vector.load %arg19[%c0_183, %c0_184] : memref<1x32xf32, #tpu.memory_space<vmem>>, vector<1x32xf32>
    %cst_185 = arith.constant dense<0.000000e+00> : vector<1xf32>
    %390 = vector.multi_reduction <add>, %387, %cst_185 [1] : vector<1x32xf32> to vector<1xf32>
    %391 = vector.shape_cast %390 : vector<1xf32> to vector<1x1xf32>
    %cst_186 = arith.constant 3.200000e+01 : f32
    %392 = vector.broadcast %cst_186 : f32 to vector<1x1xf32>
    %393 = arith.divf %391, %392 : vector<1x1xf32>
    %394 = vector.broadcast %393 : vector<1x1xf32> to vector<1x32xf32>
    %395 = arith.subf %387, %394 : vector<1x32xf32>
    %396 = arith.mulf %395, %395 : vector<1x32xf32>
    %cst_187 = arith.constant dense<0.000000e+00> : vector<1xf32>
    %397 = vector.multi_reduction <add>, %396, %cst_187 [1] : vector<1x32xf32> to vector<1xf32>
    %398 = vector.shape_cast %397 : vector<1xf32> to vector<1x1xf32>
    %cst_188 = arith.constant 3.200000e+01 : f32
    %399 = vector.broadcast %cst_188 : f32 to vector<1x1xf32>
    %400 = arith.divf %398, %399 : vector<1x1xf32>
    %401 = vector.broadcast %393 : vector<1x1xf32> to vector<1x32xf32>
    %402 = arith.subf %387, %401 : vector<1x32xf32>
    %cst_189 = arith.constant 9.99999997E-7 : f32
    %403 = vector.broadcast %cst_189 : f32 to vector<1x1xf32>
    %404 = arith.addf %400, %403 : vector<1x1xf32>
    %405 = math.rsqrt %404 : vector<1x1xf32>
    %406 = vector.broadcast %405 : vector<1x1xf32> to vector<1x32xf32>
    %407 = arith.mulf %402, %406 : vector<1x32xf32>
    %408 = arith.mulf %407, %388 : vector<1x32xf32>
    %409 = arith.addf %408, %389 : vector<1x32xf32>
    %c0_190 = arith.constant 0 : index
    %c0_191 = arith.constant 0 : index
    %c0_192 = arith.constant 0 : index
    %410 = vector.load %arg20[%c0_190, %c0_191, %c0_192] : memref<1x1x32xf32, #tpu.memory_space<vmem>>, vector<1x1x32xf32>
    %411 = vector.shape_cast %410 : vector<1x1x32xf32> to vector<1x32xf32>
    %412 = vector.shape_cast %409 : vector<1x32xf32> to vector<1x1x32xf32>
    tpu.vector_store %arg20[%c0_190, %c0_191, %c0_192], %412 {strides = array<i32>} : memref<1x1x32xf32, #tpu.memory_space<vmem>>, vector<1x1x32xf32>,
    return
  }
  func.func @transform_0(%arg0: i32) -> (i32, i32, i32) {
    %c0_i32 = arith.constant 0 : i32
    %c0_i32_0 = arith.constant 0 : i32
    %c0_i32_1 = arith.constant 0 : i32
    return %arg0, %c0_i32, %c0_i32_0 : i32, i32, i32
  }
  func.func @transform_1(%arg0: i32) -> (i32, i32) {
    %c0_i32 = arith.constant 0 : i32
    %c0_i32_0 = arith.constant 0 : i32
    %c0_i32_1 = arith.constant 0 : i32
    return %c0_i32, %c0_i32_0 : i32, i32
  }
  func.func @transform_2(%arg0: i32) -> (i32, i32) {
    %c0_i32 = arith.constant 0 : i32
    %c0_i32_0 = arith.constant 0 : i32
    %c0_i32_1 = arith.constant 0 : i32
    return %c0_i32, %c0_i32_0 : i32, i32
  }
  func.func @transform_3(%arg0: i32) -> (i32, i32) {
    %c0_i32 = arith.constant 0 : i32
    %c0_i32_0 = arith.constant 0 : i32
    %c0_i32_1 = arith.constant 0 : i32
    return %c0_i32, %c0_i32_0 : i32, i32
  }
  func.func @transform_4(%arg0: i32) -> (i32, i32) {
    %c0_i32 = arith.constant 0 : i32
    %c0_i32_0 = arith.constant 0 : i32
    %c0_i32_1 = arith.constant 0 : i32
    return %c0_i32, %c0_i32_0 : i32, i32
  }
  func.func @transform_5(%arg0: i32) -> (i32, i32, i32) {
    %c0_i32 = arith.constant 0 : i32
    %c0_i32_0 = arith.constant 0 : i32
    %c0_i32_1 = arith.constant 0 : i32
    %c0_i32_2 = arith.constant 0 : i32
    return %c0_i32, %c0_i32_0, %c0_i32_1 : i32, i32, i32
  }
  func.func @transform_6(%arg0: i32) -> (i32, i32, i32) {
    %c0_i32 = arith.constant 0 : i32
    %c0_i32_0 = arith.constant 0 : i32
    %c0_i32_1 = arith.constant 0 : i32
    %c0_i32_2 = arith.constant 0 : i32
    return %c0_i32, %c0_i32_0, %c0_i32_1 : i32, i32, i32
  }
  func.func @transform_7(%arg0: i32) -> (i32, i32, i32) {
    %c0_i32 = arith.constant 0 : i32
    %c0_i32_0 = arith.constant 0 : i32
    %c0_i32_1 = arith.constant 0 : i32
    %c0_i32_2 = arith.constant 0 : i32
    return %c0_i32, %c0_i32_0, %c0_i32_1 : i32, i32, i32
  }
  func.func @transform_8(%arg0: i32) -> (i32, i32, i32) {
    %c0_i32 = arith.constant 0 : i32
    %c0_i32_0 = arith.constant 0 : i32
    %c0_i32_1 = arith.constant 0 : i32
    %c0_i32_2 = arith.constant 0 : i32
    return %c0_i32, %c0_i32_0, %c0_i32_1 : i32, i32, i32
  }
  func.func @transform_9(%arg0: i32) -> (i32, i32, i32) {
    %c0_i32 = arith.constant 0 : i32
    %c0_i32_0 = arith.constant 0 : i32
    %c0_i32_1 = arith.constant 0 : i32
    %c0_i32_2 = arith.constant 0 : i32
    return %c0_i32, %c0_i32_0, %c0_i32_1 : i32, i32, i32
  }
  func.func @transform_10(%arg0: i32) -> (i32, i32, i32) {
    %c0_i32 = arith.constant 0 : i32
    %c0_i32_0 = arith.constant 0 : i32
    %c0_i32_1 = arith.constant 0 : i32
    %c0_i32_2 = arith.constant 0 : i32
    return %c0_i32, %c0_i32_0, %c0_i32_1 : i32, i32, i32
  }
  func.func @transform_11(%arg0: i32) -> (i32, i32, i32) {
    %c0_i32 = arith.constant 0 : i32
    %c0_i32_0 = arith.constant 0 : i32
    %c0_i32_1 = arith.constant 0 : i32
    %c0_i32_2 = arith.constant 0 : i32
    return %c0_i32, %c0_i32_0, %c0_i32_1 : i32, i32, i32
  }
  func.func @transform_12(%arg0: i32) -> (i32, i32, i32) {
    %c0_i32 = arith.constant 0 : i32
    %c0_i32_0 = arith.constant 0 : i32
    %c0_i32_1 = arith.constant 0 : i32
    %c0_i32_2 = arith.constant 0 : i32
    return %c0_i32, %c0_i32_0, %c0_i32_1 : i32, i32, i32
  }
  func.func @transform_13(%arg0: i32) -> (i32, i32, i32) {
    %c0_i32 = arith.constant 0 : i32
    %c0_i32_0 = arith.constant 0 : i32
    %c0_i32_1 = arith.constant 0 : i32
    %c0_i32_2 = arith.constant 0 : i32
    return %c0_i32, %c0_i32_0, %c0_i32_1 : i32, i32, i32
  }
  func.func @transform_14(%arg0: i32) -> (i32, i32, i32) {
    %c0_i32 = arith.constant 0 : i32
    %c0_i32_0 = arith.constant 0 : i32
    %c0_i32_1 = arith.constant 0 : i32
    %c0_i32_2 = arith.constant 0 : i32
    return %c0_i32, %c0_i32_0, %c0_i32_1 : i32, i32, i32
  }
  func.func @transform_15(%arg0: i32) -> (i32, i32, i32) {
    %c0_i32 = arith.constant 0 : i32
    %c0_i32_0 = arith.constant 0 : i32
    %c0_i32_1 = arith.constant 0 : i32
    %c0_i32_2 = arith.constant 0 : i32
    return %c0_i32, %c0_i32_0, %c0_i32_1 : i32, i32, i32
  }
  func.func @transform_16(%arg0: i32) -> (i32, i32, i32) {
    %c0_i32 = arith.constant 0 : i32
    %c0_i32_0 = arith.constant 0 : i32
    %c0_i32_1 = arith.constant 0 : i32
    %c0_i32_2 = arith.constant 0 : i32
    return %c0_i32, %c0_i32_0, %c0_i32_1 : i32, i32, i32
  }
  func.func @transform_17(%arg0: i32) -> (i32, i32) {
    %c0_i32 = arith.constant 0 : i32
    %c0_i32_0 = arith.constant 0 : i32
    %c0_i32_1 = arith.constant 0 : i32
    return %c0_i32, %c0_i32_0 : i32, i32
  }
  func.func @transform_18(%arg0: i32) -> (i32, i32) {
    %c0_i32 = arith.constant 0 : i32
    %c0_i32_0 = arith.constant 0 : i32
    %c0_i32_1 = arith.constant 0 : i32
    return %c0_i32, %c0_i32_0 : i32, i32
  }
  func.func @transform_19(%arg0: i32) -> (i32, i32, i32) {
    %c0_i32 = arith.constant 0 : i32
    %c0_i32_0 = arith.constant 0 : i32
    %c0_i32_1 = arith.constant 0 : i32
    return %arg0, %c0_i32, %c0_i32_0 : i32, i32, i32
  }
}

</mosaic_0001>

<llo_original>
// kernel: vit_forward.1
$region0: #{vit_forward.1}
  #allocation0 [shape = 'u32[]', space=smem, size = 0x4, offset = 0x4, fixed_abs, tag = 'smem constant byte address 0x4 - core index']
  #allocation1 [shape = 'u32[144,128]{1,0:T(1,128)}', space=vmem, size = 0x12000, scoped, tag = 'internal scratch']
  %s0 = inlined_call_operand.vmem [shape: f32[2,4,192], index: 0, kind: input, shape index: {}]
  %s1 = inlined_call_operand.vmem [shape: f32[192,32], index: 1, kind: input, shape index: {}]
  %s2 = inlined_call_operand.vmem [shape: f32[1,32], index: 2, kind: input, shape index: {}]
  %s3 = inlined_call_operand.vmem [shape: f32[1,32], index: 3, kind: input, shape index: {}]
  %s4 = inlined_call_operand.vmem [shape: f32[5,32], index: 4, kind: input, shape index: {}]
  %s5 = inlined_call_operand.vmem [shape: f32[2,1,32], index: 5, kind: input, shape index: {}]
  %s6 = inlined_call_operand.vmem [shape: f32[2,1,32], index: 6, kind: input, shape index: {}]
  %s7 = inlined_call_operand.vmem [shape: f32[2,32,96], index: 7, kind: input, shape index: {}]
  %s8 = inlined_call_operand.vmem [shape: f32[2,1,96], index: 8, kind: input, shape index: {}]
  %s9 = inlined_call_operand.vmem [shape: f32[2,32,32], index: 9, kind: input, shape index: {}]
  %s10 = inlined_call_operand.vmem [shape: f32[2,1,32], index: 10, kind: input, shape index: {}]
  %s11 = inlined_call_operand.vmem [shape: f32[2,1,32], index: 11, kind: input, shape index: {}]
  %s12 = inlined_call_operand.vmem [shape: f32[2,1,32], index: 12, kind: input, shape index: {}]
  %s13 = inlined_call_operand.vmem [shape: f32[2,32,128], index: 13, kind: input, shape index: {}]
  %s14 = inlined_call_operand.vmem [shape: f32[2,1,128], index: 14, kind: input, shape index: {}]
  %s15 = inlined_call_operand.vmem [shape: f32[2,128,32], index: 15, kind: input, shape index: {}]
  %s16 = inlined_call_operand.vmem [shape: f32[2,1,32], index: 16, kind: input, shape index: {}]
  %s17 = inlined_call_operand.vmem [shape: f32[1,32], index: 17, kind: input, shape index: {}]
  %s18 = inlined_call_operand.vmem [shape: f32[1,32], index: 18, kind: input, shape index: {}]
  %s19 = inlined_call_operand.hbm [shape: f32[2,1,32], index: 19, kind: output, shape index: {}]
  %s20 = sld [smem:[#allocation0]]
  $region109: #{vit_forward.1} parent=0
    _
  %s22 = ssub.s32 1, %s20
  %s23 = scalar_select 0, %s22, %s20
  $region1: #{vit_forward.1} parent=0
    #allocation2 [shape = 'u8[1024]{0}', space=vmem, size = 0x400, scoped, tag = 'output window, operand 0']
    #allocation3 [shape = 's32[2]{0}', space=sflag, size = 0x8, scoped, tag = 'scoped memory for vit_forward.1']
    %24 = vsyncpa [#allocation3], 0
    %s25 = scalar_lea.sflag [#allocation3], 1
    %26 = vsyncpa %s25, 0
    loop: start=0, step=1, limit=4
    $region2: #{vit_forward.1} parent=1 // loop_pre_header
      _
    $region3: #{vit_forward.1} parent=1 // loop_header
      %s28 = sphi 0, %s32
      %p29 = scmp.ge.s32.totalorder %s28, 4
      %s38 = sphi 0, %s40
      %s41 = sphi 0, %s38
      %s42 = sphi 0, %s41
      %s58 = sphi 0, %s42
      %s62 = sphi 0, %s62
      %s64 = sphi 0, %s62
      %s65 = sphi 0, %s64
      %s79 = sphi 0, %s65
      %s83 = sphi 0, %s83
      %s85 = sphi 0, %s83
      %s86 = sphi 0, %s85
      %s100 = sphi 0, %s86
      %s104 = sphi 0, %s104
      %s106 = sphi 0, %s104
      %s107 = sphi 0, %s106
      %s121 = sphi 0, %s107
      %s125 = sphi 0, %s125
      %s127 = sphi 0, %s125
      %s128 = sphi 0, %s127
      %s142 = sphi 0, %s128
      %s146 = sphi 0, %s146
      %s148 = sphi 0, %s146
      %s149 = sphi 0, %s148
      %s163 = sphi 0, %s149
      %s167 = sphi 0, %s167
      %s169 = sphi 0, %s167
      %s170 = sphi 0, %s169
      %s184 = sphi 0, %s170
      %s188 = sphi 0, %s188
      %s190 = sphi 0, %s188
      %s191 = sphi 0, %s190
      %s205 = sphi 0, %s191
      %s209 = sphi 0, %s209
      %s211 = sphi 0, %s209
      %s212 = sphi 0, %s211
      %s226 = sphi 0, %s212
      %s230 = sphi 0, %s230
      %s232 = sphi 0, %s230
      %s233 = sphi 0, %s232
      %s247 = sphi 0, %s233
      %s251 = sphi 0, %s251
      %s253 = sphi 0, %s251
      %s254 = sphi 0, %s253
      %s268 = sphi 0, %s254
      %s272 = sphi 0, %s272
      %s274 = sphi 0, %s272
      %s275 = sphi 0, %s274
      %s289 = sphi 0, %s275
      %s293 = sphi 0, %s293
      %s295 = sphi 0, %s293
      %s296 = sphi 0, %s295
      %s310 = sphi 0, %s296
      %s314 = sphi 0, %s314
      %s316 = sphi 0, %s314
      %s317 = sphi 0, %s316
      %s331 = sphi 0, %s317
      %s335 = sphi 0, %s335
      %s337 = sphi 0, %s335
      %s338 = sphi 0, %s337
      %s352 = sphi 0, %s338
      %s356 = sphi 0, %s356
      %s358 = sphi 0, %s356
      %s359 = sphi 0, %s358
      %s373 = sphi 0, %s359
      %s377 = sphi 0, %s377
      %s379 = sphi 0, %s377
      %s380 = sphi 0, %s379
      %s394 = sphi 0, %s380
      %s398 = sphi 0, %s398
      %s400 = sphi 0, %s398
      %s401 = sphi 0, %s400
      %s415 = sphi 0, %s401
      %s419 = sphi 0, %s419
      %s421 = sphi 0, %s419
      %s422 = sphi 0, %s421
      %s436 = sphi 0, %s422
      %s442 = sphi 0, %s444
      %s445 = sphi 0, %s442
      %s446 = sphi 0, %s445
      %s462 = sphi 0, %s446
    $region4: #{vit_forward.1} parent=1 // loop_header_branch
      %31 = sbr.rel (%p29) target = $region8
    $region5: #{vit_forward.1} parent=1 // loop_body
      %s33 = ssub.s32 %s28, 1
      %s34 = ssub.s32 %s28, 2
      %s35 = sadd.s32 %s28, 1
      %s36 = ssub.s32 %s28, %s35
      %p37 = scmp.eq.s32.totalorder %s36, 0
      %s39 = sadd.s32 %s38, 1
      %s40 = scalar_select %p37, %s38, %s39
      %p43 = pneg %p37
      %p44 = scmp.eq.s32.totalorder %s28, 1
      %p45 = por %p43, %p44
      %p46 = scmp.ne.s32.totalorder %s38, %s41
      %p47 = scmp.eq.s32.totalorder %s28, 0
      %p48 = por %p46, %p47
      %p49 = scmp.ne.s32.totalorder %s38, %s41
      %p50 = scmp.eq.s32.totalorder %s33, 1
      %p51 = por %p49, %p50
      %p52 = scmp.ne.s32.totalorder %s41, %s42
      %p53 = scmp.eq.s32.totalorder %s33, 0
      %p54 = por %p52, %p53
      %p55 = scmp.ne.s32.totalorder %s41, %s42
      %p56 = scmp.eq.s32.totalorder %s34, 1
      %p57 = por %p55, %p56
      %p59 = scmp.ne.s32.totalorder %s42, %s58
      %p60 = scmp.eq.s32.totalorder %s34, 0
      %p61 = por %p59, %p60
      %s63 = sadd.s32 %s62, 1
      %p66 = scmp.eq.s32.totalorder %s28, 1
      %p67 = scmp.ne.s32.totalorder %s62, %s64
      %p68 = scmp.eq.s32.totalorder %s28, 0
      %p69 = por %p67, %p68
      %p70 = scmp.ne.s32.totalorder %s62, %s64
      %p71 = scmp.eq.s32.totalorder %s33, 1
      %p72 = por %p70, %p71
      %p73 = scmp.ne.s32.totalorder %s64, %s65
      %p74 = scmp.eq.s32.totalorder %s33, 0
      %p75 = por %p73, %p74
      %p76 = scmp.ne.s32.totalorder %s64, %s65
      %p77 = scmp.eq.s32.totalorder %s34, 1
      %p78 = por %p76, %p77
      %p80 = scmp.ne.s32.totalorder %s65, %s79
      %p81 = scmp.eq.s32.totalorder %s34, 0
      %p82 = por %p80, %p81
      %s84 = sadd.s32 %s83, 1
      %p87 = scmp.eq.s32.totalorder %s28, 1
      %p88 = scmp.ne.s32.totalorder %s83, %s85
      %p89 = scmp.eq.s32.totalorder %s28, 0
      %p90 = por %p88, %p89
      %p91 = scmp.ne.s32.totalorder %s83, %s85
      %p92 = scmp.eq.s32.totalorder %s33, 1
      %p93 = por %p91, %p92
      %p94 = scmp.ne.s32.totalorder %s85, %s86
      %p95 = scmp.eq.s32.totalorder %s33, 0
      %p96 = por %p94, %p95
      %p97 = scmp.ne.s32.totalorder %s85, %s86
      %p98 = scmp.eq.s32.totalorder %s34, 1
      %p99 = por %p97, %p98
      %p101 = scmp.ne.s32.totalorder %s86, %s100
      %p102 = scmp.eq.s32.totalorder %s34, 0
      %p103 = por %p101, %p102
      %s105 = sadd.s32 %s104, 1
      %p108 = scmp.eq.s32.totalorder %s28, 1
      %p109 = scmp.ne.s32.totalorder %s104, %s106
      %p110 = scmp.eq.s32.totalorder %s28, 0
      %p111 = por %p109, %p110
      %p112 = scmp.ne.s32.totalorder %s104, %s106
      %p113 = scmp.eq.s32.totalorder %s33, 1
      %p114 = por %p112, %p113
      %p115 = scmp.ne.s32.totalorder %s106, %s107
      %p116 = scmp.eq.s32.totalorder %s33, 0
      %p117 = por %p115, %p116
      %p118 = scmp.ne.s32.totalorder %s106, %s107
      %p119 = scmp.eq.s32.totalorder %s34, 1
      %p120 = por %p118, %p119
      %p122 = scmp.ne.s32.totalorder %s107, %s121
      %p123 = scmp.eq.s32.totalorder %s34, 0
      %p124 = por %p122, %p123
      %s126 = sadd.s32 %s125, 1
      %p129 = scmp.eq.s32.totalorder %s28, 1
      %p130 = scmp.ne.s32.totalorder %s125, %s127
      %p131 = scmp.eq.s32.totalorder %s28, 0
      %p132 = por %p130, %p131
      %p133 = scmp.ne.s32.totalorder %s125, %s127
      %p134 = scmp.eq.s32.totalorder %s33, 1
      %p135 = por %p133, %p134
      %p136 = scmp.ne.s32.totalorder %s127, %s128
      %p137 = scmp.eq.s32.totalorder %s33, 0
      %p138 = por %p136, %p137
      %p139 = scmp.ne.s32.totalorder %s127, %s128
      %p140 = scmp.eq.s32.totalorder %s34, 1
      %p141 = por %p139, %p140
      %p143 = scmp.ne.s32.totalorder %s128, %s142
      %p144 = scmp.eq.s32.totalorder %s34, 0
      %p145 = por %p143, %p144
      %s147 = sadd.s32 %s146, 1
      %p150 = scmp.eq.s32.totalorder %s28, 1
      %p151 = scmp.ne.s32.totalorder %s146, %s148
      %p152 = scmp.eq.s32.totalorder %s28, 0
      %p153 = por %p151, %p152
      %p154 = scmp.ne.s32.totalorder %s146, %s148
      %p155 = scmp.eq.s32.totalorder %s33, 1
      %p156 = por %p154, %p155
      %p157 = scmp.ne.s32.totalorder %s148, %s149
      %p158 = scmp.eq.s32.totalorder %s33, 0
      %p159 = por %p157, %p158
      %p160 = scmp.ne.s32.totalorder %s148, %s149
      %p161 = scmp.eq.s32.totalorder %s34, 1
      %p162 = por %p160, %p161
      %p164 = scmp.ne.s32.totalorder %s149, %s163
      %p165 = scmp.eq.s32.totalorder %s34, 0
      %p166 = por %p164, %p165
      %s168 = sadd.s32 %s167, 1
      %p171 = scmp.eq.s32.totalorder %s28, 1
      %p172 = scmp.ne.s32.totalorder %s167, %s169
      %p173 = scmp.eq.s32.totalorder %s28, 0
      %p174 = por %p172, %p173
      %p175 = scmp.ne.s32.totalorder %s167, %s169
      %p176 = scmp.eq.s32.totalorder %s33, 1
      %p177 = por %p175, %p176
      %p178 = scmp.ne.s32.totalorder %s169, %s170
      %p179 = scmp.eq.s32.totalorder %s33, 0
      %p180 = por %p178, %p179
      %p181 = scmp.ne.s32.totalorder %s169, %s170
      %p182 = scmp.eq.s32.totalorder %s34, 1
      %p183 = por %p181, %p182
      %p185 = scmp.ne.s32.totalorder %s170, %s184
      %p186 = scmp.eq.s32.totalorder %s34, 0
      %p187 = por %p185, %p186
      %s189 = sadd.s32 %s188, 1
      %p192 = scmp.eq.s32.totalorder %s28, 1
      %p193 = scmp.ne.s32.totalorder %s188, %s190
      %p194 = scmp.eq.s32.totalorder %s28, 0
      %p195 = por %p193, %p194
      %p196 = scmp.ne.s32.totalorder %s188, %s190
      %p197 = scmp.eq.s32.totalorder %s33, 1
      %p198 = por %p196, %p197
      %p199 = scmp.ne.s32.totalorder %s190, %s191
      %p200 = scmp.eq.s32.totalorder %s33, 0
      %p201 = por %p199, %p200
      %p202 = scmp.ne.s32.totalorder %s190, %s191
      %p203 = scmp.eq.s32.totalorder %s34, 1
      %p204 = por %p202, %p203
      %p206 = scmp.ne.s32.totalorder %s191, %s205
      %p207 = scmp.eq.s32.totalorder %s34, 0
      %p208 = por %p206, %p207
      %s210 = sadd.s32 %s209, 1
      %p213 = scmp.eq.s32.totalorder %s28, 1
      %p214 = scmp.ne.s32.totalorder %s209, %s211
      %p215 = scmp.eq.s32.totalorder %s28, 0
      %p216 = por %p214, %p215
      %p217 = scmp.ne.s32.totalorder %s209, %s211
      %p218 = scmp.eq.s32.totalorder %s33, 1
      %p219 = por %p217, %p218
      %p220 = scmp.ne.s32.totalorder %s211, %s212
      %p221 = scmp.eq.s32.totalorder %s33, 0
      %p222 = por %p220, %p221
      %p223 = scmp.ne.s32.totalorder %s211, %s212
      %p224 = scmp.eq.s32.totalorder %s34, 1
      %p225 = por %p223, %p224
      %p227 = scmp.ne.s32.totalorder %s212, %s226
      %p228 = scmp.eq.s32.totalorder %s34, 0
      %p229 = por %p227, %p228
      %s231 = sadd.s32 %s230, 1
      %p234 = scmp.eq.s32.totalorder %s28, 1
      %p235 = scmp.ne.s32.totalorder %s230, %s232
      %p236 = scmp.eq.s32.totalorder %s28, 0
      %p237 = por %p235, %p236
      %p238 = scmp.ne.s32.totalorder %s230, %s232
      %p239 = scmp.eq.s32.totalorder %s33, 1
      %p240 = por %p238, %p239
      %p241 = scmp.ne.s32.totalorder %s232, %s233
      %p242 = scmp.eq.s32.totalorder %s33, 0
      %p243 = por %p241, %p242
      %p244 = scmp.ne.s32.totalorder %s232, %s233
      %p245 = scmp.eq.s32.totalorder %s34, 1
      %p246 = por %p244, %p245
      %p248 = scmp.ne.s32.totalorder %s233, %s247
      %p249 = scmp.eq.s32.totalorder %s34, 0
      %p250 = por %p248, %p249
      %s252 = sadd.s32 %s251, 1
      %p255 = scmp.eq.s32.totalorder %s28, 1
      %p256 = scmp.ne.s32.totalorder %s251, %s253
      %p257 = scmp.eq.s32.totalorder %s28, 0
      %p258 = por %p256, %p257
      %p259 = scmp.ne.s32.totalorder %s251, %s253
      %p260 = scmp.eq.s32.totalorder %s33, 1
      %p261 = por %p259, %p260
      %p262 = scmp.ne.s32.totalorder %s253, %s254
      %p263 = scmp.eq.s32.totalorder %s33, 0
      %p264 = por %p262, %p263
      %p265 = scmp.ne.s32.totalorder %s253, %s254
      %p266 = scmp.eq.s32.totalorder %s34, 1
      %p267 = por %p265, %p266
      %p269 = scmp.ne.s32.totalorder %s254, %s268
      %p270 = scmp.eq.s32.totalorder %s34, 0
      %p271 = por %p269, %p270
      %s273 = sadd.s32 %s272, 1
      %p276 = scmp.eq.s32.totalorder %s28, 1
      %p277 = scmp.ne.s32.totalorder %s272, %s274
      %p278 = scmp.eq.s32.totalorder %s28, 0
      %p279 = por %p277, %p278
      %p280 = scmp.ne.s32.totalorder %s272, %s274
      %p281 = scmp.eq.s32.totalorder %s33, 1
      %p282 = por %p280, %p281
      %p283 = scmp.ne.s32.totalorder %s274, %s275
      %p284 = scmp.eq.s32.totalorder %s33, 0
      %p285 = por %p283, %p284
      %p286 = scmp.ne.s32.totalorder %s274, %s275
      %p287 = scmp.eq.s32.totalorder %s34, 1
      %p288 = por %p286, %p287
      %p290 = scmp.ne.s32.totalorder %s275, %s289
      %p291 = scmp.eq.s32.totalorder %s34, 0
      %p292 = por %p290, %p291
      %s294 = sadd.s32 %s293, 1
      %p297 = scmp.eq.s32.totalorder %s28, 1
      %p298 = scmp.ne.s32.totalorder %s293, %s295
      %p299 = scmp.eq.s32.totalorder %s28, 0
      %p300 = por %p298, %p299
      %p301 = scmp.ne.s32.totalorder %s293, %s295
      %p302 = scmp.eq.s32.totalorder %s33, 1
      %p303 = por %p301, %p302
      %p304 = scmp.ne.s32.totalorder %s295, %s296
      %p305 = scmp.eq.s32.totalorder %s33, 0
      %p306 = por %p304, %p305
      %p307 = scmp.ne.s32.totalorder %s295, %s296
      %p308 = scmp.eq.s32.totalorder %s34, 1
      %p309 = por %p307, %p308
      %p311 = scmp.ne.s32.totalorder %s296, %s310
      %p312 = scmp.eq.s32.totalorder %s34, 0
      %p313 = por %p311, %p312
      %s315 = sadd.s32 %s314, 1
      %p318 = scmp.eq.s32.totalorder %s28, 1
      %p319 = scmp.ne.s32.totalorder %s314, %s316
      %p320 = scmp.eq.s32.totalorder %s28, 0
      %p321 = por %p319, %p320
      %p322 = scmp.ne.s32.totalorder %s314, %s316
      %p323 = scmp.eq.s32.totalorder %s33, 1
      %p324 = por %p322, %p323
      %p325 = scmp.ne.s32.totalorder %s316, %s317
      %p326 = scmp.eq.s32.totalorder %s33, 0
      %p327 = por %p325, %p326
      %p328 = scmp.ne.s32.totalorder %s316, %s317
      %p329 = scmp.eq.s32.totalorder %s34, 1
      %p330 = por %p328, %p329
      %p332 = scmp.ne.s32.totalorder %s317, %s331
      %p333 = scmp.eq.s32.totalorder %s34, 0
      %p334 = por %p332, %p333
      %s336 = sadd.s32 %s335, 1
      %p339 = scmp.eq.s32.totalorder %s28, 1
      %p340 = scmp.ne.s32.totalorder %s335, %s337
      %p341 = scmp.eq.s32.totalorder %s28, 0
      %p342 = por %p340, %p341
      %p343 = scmp.ne.s32.totalorder %s335, %s337
      %p344 = scmp.eq.s32.totalorder %s33, 1
      %p345 = por %p343, %p344
      %p346 = scmp.ne.s32.totalorder %s337, %s338
      %p347 = scmp.eq.s32.totalorder %s33, 0
      %p348 = por %p346, %p347
      %p349 = scmp.ne.s32.totalorder %s337, %s338
      %p350 = scmp.eq.s32.totalorder %s34, 1
      %p351 = por %p349, %p350
      %p353 = scmp.ne.s32.totalorder %s338, %s352
      %p354 = scmp.eq.s32.totalorder %s34, 0
      %p355 = por %p353, %p354
      %s357 = sadd.s32 %s356, 1
      %p360 = scmp.eq.s32.totalorder %s28, 1
      %p361 = scmp.ne.s32.totalorder %s356, %s358
      %p362 = scmp.eq.s32.totalorder %s28, 0
      %p363 = por %p361, %p362
      %p364 = scmp.ne.s32.totalorder %s356, %s358
      %p365 = scmp.eq.s32.totalorder %s33, 1
      %p366 = por %p364, %p365
      %p367 = scmp.ne.s32.totalorder %s358, %s359
      %p368 = scmp.eq.s32.totalorder %s33, 0
      %p369 = por %p367, %p368
      %p370 = scmp.ne.s32.totalorder %s358, %s359
      %p371 = scmp.eq.s32.totalorder %s34, 1
      %p372 = por %p370, %p371
      %p374 = scmp.ne.s32.totalorder %s359, %s373
      %p375 = scmp.eq.s32.totalorder %s34, 0
      %p376 = por %p374, %p375
      %s378 = sadd.s32 %s377, 1
      %p381 = scmp.eq.s32.totalorder %s28, 1
      %p382 = scmp.ne.s32.totalorder %s377, %s379
      %p383 = scmp.eq.s32.totalorder %s28, 0
      %p384 = por %p382, %p383
      %p385 = scmp.ne.s32.totalorder %s377, %s379
      %p386 = scmp.eq.s32.totalorder %s33, 1
      %p387 = por %p385, %p386
      %p388 = scmp.ne.s32.totalorder %s379, %s380
      %p389 = scmp.eq.s32.totalorder %s33, 0
      %p390 = por %p388, %p389
      %p391 = scmp.ne.s32.totalorder %s379, %s380
      %p392 = scmp.eq.s32.totalorder %s34, 1
      %p393 = por %p391, %p392
      %p395 = scmp.ne.s32.totalorder %s380, %s394
      %p396 = scmp.eq.s32.totalorder %s34, 0
      %p397 = por %p395, %p396
      %s399 = sadd.s32 %s398, 1
      %p402 = scmp.eq.s32.totalorder %s28, 1
      %p403 = scmp.ne.s32.totalorder %s398, %s400
      %p404 = scmp.eq.s32.totalorder %s28, 0
      %p405 = por %p403, %p404
      %p406 = scmp.ne.s32.totalorder %s398, %s400
      %p407 = scmp.eq.s32.totalorder %s33, 1
      %p408 = por %p406, %p407
      %p409 = scmp.ne.s32.totalorder %s400, %s401
      %p410 = scmp.eq.s32.totalorder %s33, 0
      %p411 = por %p409, %p410
      %p412 = scmp.ne.s32.totalorder %s400, %s401
      %p413 = scmp.eq.s32.totalorder %s34, 1
      %p414 = por %p412, %p413
      %p416 = scmp.ne.s32.totalorder %s401, %s415
      %p417 = scmp.eq.s32.totalorder %s34, 0
      %p418 = por %p416, %p417
      %s420 = sadd.s32 %s419, 1
      %p423 = scmp.eq.s32.totalorder %s28, 1
      %p424 = scmp.ne.s32.totalorder %s419, %s421
      %p425 = scmp.eq.s32.totalorder %s28, 0
      %p426 = por %p424, %p425
      %p427 = scmp.ne.s32.totalorder %s419, %s421
      %p428 = scmp.eq.s32.totalorder %s33, 1
      %p429 = por %p427, %p428
      %p430 = scmp.ne.s32.totalorder %s421, %s422
      %p431 = scmp.eq.s32.totalorder %s33, 0
      %p432 = por %p430, %p431
      %p433 = scmp.ne.s32.totalorder %s421, %s422
      %p434 = scmp.eq.s32.totalorder %s34, 1
      %p435 = por %p433, %p434
      %p437 = scmp.ne.s32.totalorder %s422, %s436
      %p438 = scmp.eq.s32.totalorder %s34, 0
      %p439 = por %p437, %p438
      %s440 = ssub.s32 %s28, %s35
      %p441 = scmp.eq.s32.totalorder %s440, 0
      %s443 = sadd.s32 %s442, 1
      %s444 = scalar_select %p441, %s442, %s443
      %p447 = pneg %p441
      %p448 = scmp.eq.s32.totalorder %s28, 1
      %p449 = por %p447, %p448
      %p450 = scmp.ne.s32.totalorder %s442, %s445
      %p451 = scmp.eq.s32.totalorder %s28, 0
      %p452 = por %p450, %p451
      %p453 = scmp.ne.s32.totalorder %s442, %s445
      %p454 = scmp.eq.s32.totalorder %s33, 1
      %p455 = por %p453, %p454
      %p456 = scmp.ne.s32.totalorder %s445, %s446
      %p457 = scmp.eq.s32.totalorder %s33, 0
      %p458 = por %p456, %p457
      %p459 = scmp.ne.s32.totalorder %s445, %s446
      %p460 = scmp.eq.s32.totalorder %s34, 1
      %p461 = por %p459, %p460
      %p463 = scmp.ne.s32.totalorder %s446, %s462
      %p464 = scmp.eq.s32.totalorder %s34, 0
      %p465 = por %p463, %p464
      %p466 = scmp.le.s32.totalorder 1, %s28
      %p467 = scmp.lt.s32.totalorder %s28, 3
      %p468 = pnand %p466, %p467
      %p469 = pneg %p468
      // Predicated region
      $region9: #{vit_forward.1} parent=5 // pred_check
        _
      $region10: #{vit_forward.1} parent=5 // pred_check_branch
        %471 = sbr.rel (%p468) target = $region12
      $region11: #{vit_forward.1} parent=5 // pred_region
        %s472 = ssub.s32 %s28, 1
        // Predicated region
        $region13: #{vit_forward.1} parent=11 // pred_check
          %p473 = pneg %p75
        $region14: #{vit_forward.1} parent=11 // pred_check_branch
          %475 = sbr.rel (%p473) target = $region16
        $region15: #{vit_forward.1} parent=11 // pred_region
          _
        $region16: #{vit_forward.1} parent=11 // pred_fallthru
          _
        // Predicated region
        $region17: #{vit_forward.1} parent=11 // pred_check
          %p476 = pneg %p96
        $region18: #{vit_forward.1} parent=11 // pred_check_branch
          %478 = sbr.rel (%p476) target = $region20
        $region19: #{vit_forward.1} parent=11 // pred_region
          _
        $region20: #{vit_forward.1} parent=11 // pred_fallthru
          _
        // Predicated region
        $region21: #{vit_forward.1} parent=11 // pred_check
          %p479 = pneg %p117
        $region22: #{vit_forward.1} parent=11 // pred_check_branch
          %481 = sbr.rel (%p479) target = $region24
        $region23: #{vit_forward.1} parent=11 // pred_region
          _
        $region24: #{vit_forward.1} parent=11 // pred_fallthru
          _
        // Predicated region
        $region25: #{vit_forward.1} parent=11 // pred_check
          %p482 = pneg %p138
        $region26: #{vit_forward.1} parent=11 // pred_check_branch
          %484 = sbr.rel (%p482) target = $region28
        $region27: #{vit_forward.1} parent=11 // pred_region
          _
        $region28: #{vit_forward.1} parent=11 // pred_fallthru
          _
        // Predicated region
        $region29: #{vit_forward.1} parent=11 // pred_check
          %p485 = pneg %p159
        $region30: #{vit_forward.1} parent=11 // pred_check_branch
          %487 = sbr.rel (%p485) target = $region32
        $region31: #{vit_forward.1} parent=11 // pred_region
          _
        $region32: #{vit_forward.1} parent=11 // pred_fallthru
          _
        // Predicated region
        $region33: #{vit_forward.1} parent=11 // pred_check
          %p488 = pneg %p180
        $region34: #{vit_forward.1} parent=11 // pred_check_branch
          %490 = sbr.rel (%p488) target = $region36
        $region35: #{vit_forward.1} parent=11 // pred_region
          _
        $region36: #{vit_forward.1} parent=11 // pred_fallthru
          _
        // Predicated region
        $region37: #{vit_forward.1} parent=11 // pred_check
          %p491 = pneg %p201
        $region38: #{vit_forward.1} parent=11 // pred_check_branch
          %493 = sbr.rel (%p491) target = $region40
        $region39: #{vit_forward.1} parent=11 // pred_region
          _
        $region40: #{vit_forward.1} parent=11 // pred_fallthru
          _
        // Predicated region
        $region41: #{vit_forward.1} parent=11 // pred_check
          %p494 = pneg %p222
        $region42: #{vit_forward.1} parent=11 // pred_check_branch
          %496 = sbr.rel (%p494) target = $region44
        $region43: #{vit_forward.1} parent=11 // pred_region
          _
        $region44: #{vit_forward.1} parent=11 // pred_fallthru
          _
        // Predicated region
        $region45: #{vit_forward.1} parent=11 // pred_check
          %p497 = pneg %p243
        $region46: #{vit_forward.1} parent=11 // pred_check_branch
          %499 = sbr.rel (%p497) target = $region48
        $region47: #{vit_forward.1} parent=11 // pred_region
          _
        $region48: #{vit_forward.1} parent=11 // pred_fallthru
          _
        // Predicated region
        $region49: #{vit_forward.1} parent=11 // pred_check
          %p500 = pneg %p264
        $region50: #{vit_forward.1} parent=11 // pred_check_branch
          %502 = sbr.rel (%p500) target = $region52
        $region51: #{vit_forward.1} parent=11 // pred_region
          _
        $region52: #{vit_forward.1} parent=11 // pred_fallthru
          _
        // Predicated region
        $region53: #{vit_forward.1} parent=11 // pred_check
          %p503 = pneg %p285
        $region54: #{vit_forward.1} parent=11 // pred_check_branch
          %505 = sbr.rel (%p503) target = $region56
        $region55: #{vit_forward.1} parent=11 // pred_region
          _
        $region56: #{vit_forward.1} parent=11 // pred_fallthru
          _
        // Predicated region
        $region57: #{vit_forward.1} parent=11 // pred_check
          %p506 = pneg %p306
        $region58: #{vit_forward.1} parent=11 // pred_check_branch
          %508 = sbr.rel (%p506) target = $region60
        $region59: #{vit_forward.1} parent=11 // pred_region
          _
        $region60: #{vit_forward.1} parent=11 // pred_fallthru
          _
        // Predicated region
        $region61: #{vit_forward.1} parent=11 // pred_check
          %p509 = pneg %p327
        $region62: #{vit_forward.1} parent=11 // pred_check_branch
          %511 = sbr.rel (%p509) target = $region64
        $region63: #{vit_forward.1} parent=11 // pred_region
          _
        $region64: #{vit_forward.1} parent=11 // pred_fallthru
          _
        // Predicated region
        $region65: #{vit_forward.1} parent=11 // pred_check
          %p512 = pneg %p348
        $region66: #{vit_forward.1} parent=11 // pred_check_branch
          %514 = sbr.rel (%p512) target = $region68
        $region67: #{vit_forward.1} parent=11 // pred_region
          _
        $region68: #{vit_forward.1} parent=11 // pred_fallthru
          _
        // Predicated region
        $region69: #{vit_forward.1} parent=11 // pred_check
          %p515 = pneg %p369
        $region70: #{vit_forward.1} parent=11 // pred_check_branch
          %517 = sbr.rel (%p515) target = $region72
        $region71: #{vit_forward.1} parent=11 // pred_region
          _
        $region72: #{vit_forward.1} parent=11 // pred_fallthru
          _
        // Predicated region
        $region73: #{vit_forward.1} parent=11 // pred_check
          %p518 = pneg %p390
        $region74: #{vit_forward.1} parent=11 // pred_check_branch
          %520 = sbr.rel (%p518) target = $region76
        $region75: #{vit_forward.1} parent=11 // pred_region
          _
        $region76: #{vit_forward.1} parent=11 // pred_fallthru
          _
        // Predicated region
        $region77: #{vit_forward.1} parent=11 // pred_check
          %p521 = pneg %p411
        $region78: #{vit_forward.1} parent=11 // pred_check_branch
          %523 = sbr.rel (%p521) target = $region80
        $region79: #{vit_forward.1} parent=11 // pred_region
          _
        $region80: #{vit_forward.1} parent=11 // pred_fallthru
          _
        // Predicated region
        $region81: #{vit_forward.1} parent=11 // pred_check
          %p524 = pneg %p432
        $region82: #{vit_forward.1} parent=11 // pred_check_branch
          %526 = sbr.rel (%p524) target = $region84
        $region83: #{vit_forward.1} parent=11 // pred_region
          _
        $region84: #{vit_forward.1} parent=11 // pred_fallthru
          _
      $region12: #{vit_forward.1} parent=5 // pred_fallthru
        _
      %p527 = scmp.lt.s32.totalorder %s28, 2
      // Predicated region
      $region85: #{vit_forward.1} parent=5 // pred_check
        %p528 = pneg %p527
      $region86: #{vit_forward.1} parent=5 // pred_check_branch
        %530 = sbr.rel (%p528) target = $region88
      $region87: #{vit_forward.1} parent=5 // pred_region
        // Predicated region
        $region89: #{vit_forward.1} parent=87 // pred_check
          %p531 = pneg %p48
        $region90: #{vit_forward.1} parent=87 // pred_check_branch
          %533 = sbr.rel (%p531) target = $region92
        $region91: #{vit_forward.1} parent=87 // pred_region
          %p534 = scmp.lt.s32.totalorder %s28, 1
          %s535 = scalar_select %p534, %s28, 1
          %s536 = smul.addr %s535, 2
          %s537 = smul.addr %s536, 4
          %s538 = scalar_lea.vmem %s0, %s537
        $region92: #{vit_forward.1} parent=87 // pred_fallthru
          _
      $region88: #{vit_forward.1} parent=5 // pred_fallthru
        _
      %p539 = scmp.le.s32.totalorder 1, %s28
      %p540 = scmp.lt.s32.totalorder %s28, 3
      %p541 = pnand %p539, %p540
      %p542 = pneg %p541
      // Predicated region
      $region93: #{vit_forward.1} parent=5 // pred_check
        _
      $region94: #{vit_forward.1} parent=5 // pred_check_branch
        %544 = sbr.rel (%p541) target = $region96
      $region95: #{vit_forward.1} parent=5 // pred_region
        %s545 = ssub.s32 %s28, 1
        %p546 = scmp.lt.s32.totalorder %s33, 1
        %s547 = scalar_select %p546, %s33, 1
        %s548 = smul.addr %s547, 2
        %s549 = smul.addr %s548, 4
        %s550 = scalar_lea.vmem %s0, %s549
        %p551 = pneg %p54
        %p552 = pneg %p51
        %p553 = pneg %p75
        %p554 = pneg %p72
        %p555 = pneg %p96
        %p556 = pneg %p93
        %p557 = pneg %p117
        %p558 = pneg %p114
        %p559 = pneg %p138
        %p560 = pneg %p135
        %p561 = pneg %p159
        %p562 = pneg %p156
        %p563 = pneg %p180
        %p564 = pneg %p177
        %p565 = pneg %p201
        %p566 = pneg %p198
        %p567 = pneg %p222
        %p568 = pneg %p219
        %p569 = pneg %p243
        %p570 = pneg %p240
        %p571 = pneg %p264
        %p572 = pneg %p261
        %p573 = pneg %p285
        %p574 = pneg %p282
        %p575 = pneg %p306
        %p576 = pneg %p303
        %p577 = pneg %p327
        %p578 = pneg %p324
        %p579 = pneg %p348
        %p580 = pneg %p345
        %p581 = pneg %p369
        %p582 = pneg %p366
        %p583 = pneg %p390
        %p584 = pneg %p387
        %p585 = pneg %p411
        %p586 = pneg %p408
        %p587 = pneg %p432
        %p588 = pneg %p429
        %p589 = pneg %p458
        %p590 = pneg %p455
        %s591 = sand.u32 %s445, 1
        %s592 = scalar_lea.sflag [#allocation3], %s591
        %s593 = sand.u32 %s445, 1
        %s594 = scalar_lea.vmem [#allocation2], %s593
        %p595 = scmp.lt.s32.totalorder %s33, 1
        %s596 = scalar_select %p595, %s33, 1
        %s597 = smul.addr %s596, 2
        %s598 = smul.addr %s597, 4
        %s599 = scalar_lea.vmem %s0, %s598
        %v600 = vld [vmem:[%s599] sm:$0xff]
        %v601 = vld [vmem:[%s1] sm:$0xff]
        %v602 = vld [vmem:[%s1 + $0x8] sm:$0xff]
        %v603 = vld [vmem:[%s1 + $0x10] sm:$0xff]
        %v604 = vld [vmem:[%s1 + $0x18] sm:$0xff]
        %v605 = vld [vmem:[%s1 + $0x20] sm:$0xff]
        %v606 = vld [vmem:[%s1 + $0x28] sm:$0xff]
        %v607 = vld [vmem:[%s1 + $0x30] sm:$0xff]
        %v608 = vld [vmem:[%s1 + $0x38] sm:$0xff]
        %v609 = vld [vmem:[%s1 + $0x40] sm:$0xff]
        %v610 = vld [vmem:[%s1 + $0x48] sm:$0xff]
        %v611 = vld [vmem:[%s1 + $0x50] sm:$0xff]
        %v612 = vld [vmem:[%s1 + $0x58] sm:$0xff]
        %v613 = vld [vmem:[%s1 + $0x60] sm:$0xff]
        %v614 = vld [vmem:[%s1 + $0x68] sm:$0xff]
        %v615 = vld [vmem:[%s1 + $0x70] sm:$0xff]
        %v616 = vld [vmem:[%s1 + $0x78] sm:$0xff]
        %v617 = vld [vmem:[%s1 + $0x80] sm:$0xff]
        %v618 = vld [vmem:[%s1 + $0x88] sm:$0xff]
        %v619 = vld [vmem:[%s1 + $0x90] sm:$0xff]
        %v620 = vld [vmem:[%s1 + $0x98] sm:$0xff]
        %v621 = vld [vmem:[%s1 + $0xa0] sm:$0xff]
        %v622 = vld [vmem:[%s1 + $0xa8] sm:$0xff]
        %v623 = vld [vmem:[%s1 + $0xb0] sm:$0xff]
        %v624 = vld [vmem:[%s1 + $0xb8] sm:$0xff]
        %v625 = vld [vmem:[%s2] sm:$0x1]
        %v627 = vlaneseq
        %v628 = vshrl.u32 %v627, 7
        %v629 = vsub.s32 0, %v628
        %v630 = vrot.slane %v625, %v629
        %v633 = vcombine.high %v600, %v600
        %vm634 = vcmask 523264
        %v635 = vsel %vm634, %v633, 0
        %637 = vmatprep.subr.mxu0 0.0
        %638 = vmatpush1.msra.mxu0 %v616
        %639 = vmatprep.subr.mxu0 0.0
        %640 = vmatpush1.msra.mxu0 %v615
        %641 = vmatprep.subr.mxu0 0.0
        %642 = vmatpush1.msra.mxu0 %v614
        %643 = vmatprep.subr.mxu0 0.0
        %644 = vmatpush1.msra.mxu0 %v613
        %645 = vmatprep.subr.mxu0 0.0
        %646 = vmatpush1.msra.mxu0 %v612
        %647 = vmatprep.subr.mxu0 0.0
        %648 = vmatpush1.msra.mxu0 %v611
        %649 = vmatprep.subr.mxu0 0.0
        %650 = vmatpush1.msra.mxu0 %v610
        %651 = vmatprep.subr.mxu0 0.0
        %652 = vmatpush1.msra.mxu0 %v609
        %653 = vmatprep.subr.mxu0 0.0
        %654 = vmatpush1.msra.mxu0 %v608
        %655 = vmatprep.subr.mxu0 0.0
        %656 = vmatpush1.msra.mxu0 %v607
        %657 = vmatprep.subr.mxu0 0.0
        %658 = vmatpush1.msra.mxu0 %v606
        %659 = vmatprep.subr.mxu0 0.0
        %660 = vmatpush1.msra.mxu0 %v605
        %661 = vmatprep.subr.mxu0 0.0
        %662 = vmatpush1.msra.mxu0 %v604
        %663 = vmatprep.subr.mxu0 0.0
        %664 = vmatpush1.msra.mxu0 %v603
        %665 = vmatprep.subr.mxu0 0.0
        %666 = vmatpush1.msra.mxu0 %v602
        %667 = vmatprep.subr.mxu0 0.0
        %668 = vmatpush1.msra.mxu0 %v601
        %669 = vmatprep.subr.mxu0 0.0
        %670 = vmatpush2.msra.mxu0 0.0
        %671 = vmatprep.subr.mxu0 0.0
        %672 = vmatpush2.msra.mxu0 0.0
        %673 = vmatprep.subr.mxu0 0.0
        %674 = vmatpush2.msra.mxu0 0.0
        %675 = vmatprep.subr.mxu0 0.0
        %676 = vmatpush2.msra.mxu0 0.0
        %677 = vmatprep.subr.mxu0 0.0
        %678 = vmatpush2.msra.mxu0 0.0
        %679 = vmatprep.subr.mxu0 0.0
        %680 = vmatpush2.msra.mxu0 0.0
        %681 = vmatprep.subr.mxu0 0.0
        %682 = vmatpush2.msra.mxu0 0.0
        %683 = vmatprep.subr.mxu0 0.0
        %684 = vmatpush2.msra.mxu0 0.0
        %685 = vmatprep.subr.mxu0 0.0
        %686 = vmatpush2.msra.mxu0 %v624
        %687 = vmatprep.subr.mxu0 0.0
        %688 = vmatpush2.msra.mxu0 %v623
        %689 = vmatprep.subr.mxu0 0.0
        %690 = vmatpush2.msra.mxu0 %v622
        %691 = vmatprep.subr.mxu0 0.0
        %692 = vmatpush2.msra.mxu0 %v621
        %693 = vmatprep.subr.mxu0 0.0
        %694 = vmatpush2.msra.mxu0 %v620
        %695 = vmatprep.subr.mxu0 0.0
        %696 = vmatpush2.msra.mxu0 %v619
        %697 = vmatprep.subr.mxu0 0.0
        %698 = vmatpush2.msra.mxu0 %v618
        %699 = vmatprep.subr.mxu0 0.0
        %700 = vmatpush2.msra.mxu0 %v617
        %701 = vmatprep.mubr.f32.mxu0 %v635
        %702 = vmatmul.mubr.f32.gmra.mxu0 %v600
        %v703 = vpop.f32.mrf.mxu0
        %v704 = vadd.f32 %v630, %v703
        %v705 = vpop.f32.mrf.mxu0
        %706 = vdwg.mxu0
        %v707 = vld [vmem:[%s3] sm:$0x1]
        %v709 = vrot.slane %v704, 7
        %vm711 = vcmask 1040384
        %v712 = vsel %vm711, %v707, %v709
        %v713 = vld [vmem:[%s4] sm:$0x1f]
        %v714 = vadd.f32 %v712, %v713
        %v715 = vld [vmem:[%s5] sm:$0x1]
        %v716 = vld [vmem:[%s6] sm:$0x1]
        %vm717 = vcmask 258048
        %v718 = vsel %vm717, %v714, 0.0
        %719 = vadd.xlane.f32.xlu0 %v718
        %v720 = vpop.xlane.xlu0 %719
        %v721 = vrcp.pop 32.0
        %v722 = vmul.f32 %v720, %v721
        %v723 = vsub.f32 %v714, %v722
        %v724 = vmul.f32 %v723, %v723
        %v725 = vsel %vm717, %v724, 0.0
        %726 = vadd.xlane.f32.xlu0 %v725
        %v727 = vpop.xlane.xlu0 %726
        %v728 = vmul.f32 %v727, %v721
        %v729 = vadd.f32 %v728, 1e-06
        %v730 = vrsqrt.pop %v729
        %v731 = vmul.f32 %v723, %v730
        %v733 = vlaneseq
        %v734 = vshrl.u32 %v733, 7
        %v735 = vsub.s32 0, %v734
        %v736 = vrot.slane %v715, %v735
        %v738 = vmul.f32 %v731, %v736
        %v740 = vlaneseq
        %v741 = vshrl.u32 %v740, 7
        %v742 = vsub.s32 0, %v741
        %v743 = vrot.slane %v716, %v742
        %v745 = vadd.f32 %v738, %v743
        %v746 = vld [vmem:[%s7] sm:$0xff]
        %v747 = vld [vmem:[%s7 + $0x8] sm:$0xff]
        %v748 = vld [vmem:[%s7 + $0x10] sm:$0xff]
        %v749 = vld [vmem:[%s7 + $0x18] sm:$0xff]
        %v750 = vld [vmem:[%s8] sm:$0x1]
        %v752 = vlaneseq
        %v753 = vshrl.u32 %v752, 7
        %v754 = vsub.s32 0, %v753
        %v755 = vrot.slane %v750, %v754
        %vm757 = vcmask 261120
        %v759 = vsel %vm757, %v745, 0
        %761 = vmatprep.subr.mxu0 0.0
        %762 = vmatpush1.msra.mxu0 0.0
        %763 = vmatprep.subr.mxu0 0.0
        %764 = vmatpush1.msra.mxu0 0.0
        %765 = vmatprep.subr.mxu0 0.0
        %766 = vmatpush1.msra.mxu0 0.0
        %767 = vmatprep.subr.mxu0 0.0
        %768 = vmatpush1.msra.mxu0 0.0
        %769 = vmatprep.subr.mxu0 0.0
        %770 = vmatpush1.msra.mxu0 0.0
        %771 = vmatprep.subr.mxu0 0.0
        %772 = vmatpush1.msra.mxu0 0.0
        %773 = vmatprep.subr.mxu0 0.0
        %774 = vmatpush1.msra.mxu0 0.0
        %775 = vmatprep.subr.mxu0 0.0
        %776 = vmatpush1.msra.mxu0 0.0
        %777 = vmatprep.subr.mxu0 0.0
        %778 = vmatpush1.msra.mxu0 0.0
        %779 = vmatprep.subr.mxu0 0.0
        %780 = vmatpush1.msra.mxu0 0.0
        %781 = vmatprep.subr.mxu0 0.0
        %782 = vmatpush1.msra.mxu0 0.0
        %783 = vmatprep.subr.mxu0 0.0
        %784 = vmatpush1.msra.mxu0 0.0
        %785 = vmatprep.subr.mxu0 0.0
        %786 = vmatpush1.msra.mxu0 %v749
        %787 = vmatprep.subr.mxu0 0.0
        %788 = vmatpush1.msra.mxu0 %v748
        %789 = vmatprep.subr.mxu0 0.0
        %790 = vmatpush1.msra.mxu0 %v747
        %791 = vmatprep.subr.mxu0 0.0
        %792 = vmatpush1.msra.mxu0 %v746
        %793 = vmatprep.subr.mxu0 0.0
        %794 = vmatpush2.msra.mxu0 0.0
        %795 = vmatprep.subr.mxu0 0.0
        %796 = vmatpush2.msra.mxu0 0.0
        %797 = vmatprep.subr.mxu0 0.0
        %798 = vmatpush2.msra.mxu0 0.0
        %799 = vmatprep.subr.mxu0 0.0
        %800 = vmatpush2.msra.mxu0 0.0
        %801 = vmatprep.subr.mxu0 0.0
        %802 = vmatpush2.msra.mxu0 0.0
        %803 = vmatprep.subr.mxu0 0.0
        %804 = vmatpush2.msra.mxu0 0.0
        %805 = vmatprep.subr.mxu0 0.0
        %806 = vmatpush2.msra.mxu0 0.0
        %807 = vmatprep.subr.mxu0 0.0
        %808 = vmatpush2.msra.mxu0 0.0
        %809 = vmatprep.subr.mxu0 0.0
        %810 = vmatpush2.msra.mxu0 0.0
        %811 = vmatprep.subr.mxu0 0.0
        %812 = vmatpush2.msra.mxu0 0.0
        %813 = vmatprep.subr.mxu0 0.0
        %814 = vmatpush2.msra.mxu0 0.0
        %815 = vmatprep.subr.mxu0 0.0
        %816 = vmatpush2.msra.mxu0 0.0
        %817 = vmatprep.subr.mxu0 0.0
        %818 = vmatpush2.msra.mxu0 0.0
        %819 = vmatprep.subr.mxu0 0.0
        %820 = vmatpush2.msra.mxu0 0.0
        %821 = vmatprep.subr.mxu0 0.0
        %822 = vmatpush2.msra.mxu0 0.0
        %823 = vmatprep.subr.mxu0 0.0
        %824 = vmatpush2.msra.mxu0 0.0
        %825 = vmatprep.mubr.f32.mxu0 0.0
        %826 = vmatmul.mubr.f32.gmra.mxu0 %v759
        %v827 = vpop.f32.mrf.mxu0
        %v828 = vadd.f32 %v755, %v827
        %v829 = vpop.f32.mrf.mxu0
        %830 = vdwg.mxu0
        %v831 = vmul.f32 %v828, 0.35355338
        %833 = vrot.lane.b32.xlu0 %v828, 96
        %v834 = vpop.permute.xlu0 %833
        %vm835 = vcmask 64512
        %v837 = vsel %vm835, %v831, 0
        %v839 = vsel %vm835, %v834, 0
        %841 = vmatprep.subr.mxu0 0.0
        %842 = vmatpush1.xpose.msra.mxu0 0.0
        %843 = vmatprep.subr.mxu0 0.0
        %844 = vmatpush1.xpose.msra.mxu0 0.0
        %845 = vmatprep.subr.mxu0 0.0
        %846 = vmatpush1.xpose.msra.mxu0 0.0
        %847 = vmatprep.subr.mxu0 0.0
        %848 = vmatpush1.xpose.msra.mxu0 0.0
        %849 = vmatprep.subr.mxu0 0.0
        %850 = vmatpush1.xpose.msra.mxu0 0.0
        %851 = vmatprep.subr.mxu0 0.0
        %852 = vmatpush1.xpose.msra.mxu0 0.0
        %853 = vmatprep.subr.mxu0 0.0
        %854 = vmatpush1.xpose.msra.mxu0 0.0
        %855 = vmatprep.subr.mxu0 0.0
        %856 = vmatpush1.xpose.msra.mxu0 0.0
        %857 = vmatprep.subr.mxu0 0.0
        %858 = vmatpush1.xpose.msra.mxu0 0.0
        %859 = vmatprep.subr.mxu0 0.0
        %860 = vmatpush1.xpose.msra.mxu0 0.0
        %861 = vmatprep.subr.mxu0 0.0
        %862 = vmatpush1.xpose.msra.mxu0 0.0
        %863 = vmatprep.subr.mxu0 0.0
        %864 = vmatpush1.xpose.msra.mxu0 0.0
        %865 = vmatprep.subr.mxu0 0.0
        %866 = vmatpush1.xpose.msra.mxu0 0.0
        %867 = vmatprep.subr.mxu0 0.0
        %868 = vmatpush1.xpose.msra.mxu0 0.0
        %869 = vmatprep.subr.mxu0 0.0
        %870 = vmatpush1.xpose.msra.mxu0 0.0
        %871 = vmatprep.subr.mxu0 0.0
        %872 = vmatpush1.xpose.msra.mxu0 %v839
        %873 = vmatprep.subr.mxu0 0.0
        %874 = vmatpush2.xpose.msra.mxu0 0.0
        %875 = vmatprep.subr.mxu0 0.0
        %876 = vmatpush2.xpose.msra.mxu0 0.0
        %877 = vmatprep.subr.mxu0 0.0
        %878 = vmatpush2.xpose.msra.mxu0 0.0
        %879 = vmatprep.subr.mxu0 0.0
        %880 = vmatpush2.xpose.msra.mxu0 0.0
        %881 = vmatprep.subr.mxu0 0.0
        %882 = vmatpush2.xpose.msra.mxu0 0.0
        %883 = vmatprep.subr.mxu0 0.0
        %884 = vmatpush2.xpose.msra.mxu0 0.0
        %885 = vmatprep.subr.mxu0 0.0
        %886 = vmatpush2.xpose.msra.mxu0 0.0
        %887 = vmatprep.subr.mxu0 0.0
        %888 = vmatpush2.xpose.msra.mxu0 0.0
        %889 = vmatprep.subr.mxu0 0.0
        %890 = vmatpush2.xpose.msra.mxu0 0.0
        %891 = vmatprep.subr.mxu0 0.0
        %892 = vmatpush2.xpose.msra.mxu0 0.0
        %893 = vmatprep.subr.mxu0 0.0
        %894 = vmatpush2.xpose.msra.mxu0 0.0
        %895 = vmatprep.subr.mxu0 0.0
        %896 = vmatpush2.xpose.msra.mxu0 0.0
        %897 = vmatprep.subr.mxu0 0.0
        %898 = vmatpush2.xpose.msra.mxu0 0.0
        %899 = vmatprep.subr.mxu0 0.0
        %900 = vmatpush2.xpose.msra.mxu0 0.0
        %901 = vmatprep.subr.mxu0 0.0
        %902 = vmatpush2.xpose.msra.mxu0 0.0
        %903 = vmatprep.subr.mxu0 0.0
        %904 = vmatpush2.xpose.msra.mxu0 0.0
        %905 = vmatprep.mubr.f32.mxu0 0.0
        %906 = vmatmul.mubr.f32.gmra.mxu0 %v837
        %v907 = vpop.f32.mrf.mxu0
        %v908 = vadd.f32 0.0, %v907
        %v909 = vpop.f32.mrf.mxu0
        %910 = vdwg.mxu0
        %vm911 = vcmask 36864
        %v912 = vsel %vm911, %v908, -inf
        %913 = vmax.xlane.f32.xlu0 %v912
        %v914 = vpop.xlane.xlu0 %913
        %v915 = vsub.f32 %v908, %v914
        %v916 = vmul.f32 %v915, 1.442695
        %v917 = vpow.pop %v916
        %v918 = vsel %vm911, %v917, 0.0
        %919 = vadd.xlane.f32.xlu0 %v918
        %v920 = vpop.xlane.xlu0 %919
        %v921 = vrcp.pop %v920
        %v922 = vmul.f32 %v917, %v921
        %923 = vrot.lane.b32.xlu0 %v828, 64
        %v924 = vpop.permute.xlu0 %923
        %vm925 = vcmask 39936
        %v927 = vsel %vm925, %v922, 0
        %vm929 = vcmask 1044480
        %v930 = vsel %vm929, %v924, 0
        %932 = vmatprep.subr.mxu0 0.0
        %933 = vmatpush1.msra.mxu0 0.0
        %934 = vmatprep.subr.mxu0 0.0
        %935 = vmatpush1.msra.mxu0 0.0
        %936 = vmatprep.subr.mxu0 0.0
        %937 = vmatpush1.msra.mxu0 0.0
        %938 = vmatprep.subr.mxu0 0.0
        %939 = vmatpush1.msra.mxu0 0.0
        %940 = vmatprep.subr.mxu0 0.0
        %941 = vmatpush1.msra.mxu0 0.0
        %942 = vmatprep.subr.mxu0 0.0
        %943 = vmatpush1.msra.mxu0 0.0
        %944 = vmatprep.subr.mxu0 0.0
        %945 = vmatpush1.msra.mxu0 0.0
        %946 = vmatprep.subr.mxu0 0.0
        %947 = vmatpush1.msra.mxu0 0.0
        %948 = vmatprep.subr.mxu0 0.0
        %949 = vmatpush1.msra.mxu0 0.0
        %950 = vmatprep.subr.mxu0 0.0
        %951 = vmatpush1.msra.mxu0 0.0
        %952 = vmatprep.subr.mxu0 0.0
        %953 = vmatpush1.msra.mxu0 0.0
        %954 = vmatprep.subr.mxu0 0.0
        %955 = vmatpush1.msra.mxu0 0.0
        %956 = vmatprep.subr.mxu0 0.0
        %957 = vmatpush1.msra.mxu0 0.0
        %958 = vmatprep.subr.mxu0 0.0
        %959 = vmatpush1.msra.mxu0 0.0
        %960 = vmatprep.subr.mxu0 0.0
        %961 = vmatpush1.msra.mxu0 0.0
        %962 = vmatprep.subr.mxu0 0.0
        %963 = vmatpush1.msra.mxu0 %v930
        %964 = vmatprep.subr.mxu0 0.0
        %965 = vmatpush2.msra.mxu0 0.0
        %966 = vmatprep.subr.mxu0 0.0
        %967 = vmatpush2.msra.mxu0 0.0
        %968 = vmatprep.subr.mxu0 0.0
        %969 = vmatpush2.msra.mxu0 0.0
        %970 = vmatprep.subr.mxu0 0.0
        %971 = vmatpush2.msra.mxu0 0.0
        %972 = vmatprep.subr.mxu0 0.0
        %973 = vmatpush2.msra.mxu0 0.0
        %974 = vmatprep.subr.mxu0 0.0
        %975 = vmatpush2.msra.mxu0 0.0
        %976 = vmatprep.subr.mxu0 0.0
        %977 = vmatpush2.msra.mxu0 0.0
        %978 = vmatprep.subr.mxu0 0.0
        %979 = vmatpush2.msra.mxu0 0.0
        %980 = vmatprep.subr.mxu0 0.0
        %981 = vmatpush2.msra.mxu0 0.0
        %982 = vmatprep.subr.mxu0 0.0
        %983 = vmatpush2.msra.mxu0 0.0
        %984 = vmatprep.subr.mxu0 0.0
        %985 = vmatpush2.msra.mxu0 0.0
        %986 = vmatprep.subr.mxu0 0.0
        %987 = vmatpush2.msra.mxu0 0.0
        %988 = vmatprep.subr.mxu0 0.0
        %989 = vmatpush2.msra.mxu0 0.0
        %990 = vmatprep.subr.mxu0 0.0
        %991 = vmatpush2.msra.mxu0 0.0
        %992 = vmatprep.subr.mxu0 0.0
        %993 = vmatpush2.msra.mxu0 0.0
        %994 = vmatprep.subr.mxu0 0.0
        %995 = vmatpush2.msra.mxu0 0.0
        %996 = vmatprep.mubr.f32.mxu0 0.0
        %997 = vmatmul.mubr.f32.gmra.mxu0 %v927
        %v998 = vpop.f32.mrf.mxu0
        %v999 = vadd.f32 0.0, %v998
        %v1000 = vpop.f32.mrf.mxu0
        %1001 = vdwg.mxu0
        %1002 = vrot.lane.b32.xlu0 %v831, 120
        %v1003 = vpop.permute.xlu0 %1002
        %1004 = vrot.lane.b32.xlu0 %v828, 88
        %v1005 = vpop.permute.xlu0 %1004
        %v1006 = vsel %vm835, %v1003, 0
        %v1008 = vsel %vm835, %v1005, 0
        %1010 = vmatprep.subr.mxu0 0.0
        %1011 = vmatpush1.xpose.msra.mxu0 0.0
        %1012 = vmatprep.subr.mxu0 0.0
        %1013 = vmatpush1.xpose.msra.mxu0 0.0
        %1014 = vmatprep.subr.mxu0 0.0
        %1015 = vmatpush1.xpose.msra.mxu0 0.0
        %1016 = vmatprep.subr.mxu0 0.0
        %1017 = vmatpush1.xpose.msra.mxu0 0.0
        %1018 = vmatprep.subr.mxu0 0.0
        %1019 = vmatpush1.xpose.msra.mxu0 0.0
        %1020 = vmatprep.subr.mxu0 0.0
        %1021 = vmatpush1.xpose.msra.mxu0 0.0
        %1022 = vmatprep.subr.mxu0 0.0
        %1023 = vmatpush1.xpose.msra.mxu0 0.0
        %1024 = vmatprep.subr.mxu0 0.0
        %1025 = vmatpush1.xpose.msra.mxu0 0.0
        %1026 = vmatprep.subr.mxu0 0.0
        %1027 = vmatpush1.xpose.msra.mxu0 0.0
        %1028 = vmatprep.subr.mxu0 0.0
        %1029 = vmatpush1.xpose.msra.mxu0 0.0
        %1030 = vmatprep.subr.mxu0 0.0
        %1031 = vmatpush1.xpose.msra.mxu0 0.0
        %1032 = vmatprep.subr.mxu0 0.0
        %1033 = vmatpush1.xpose.msra.mxu0 0.0
        %1034 = vmatprep.subr.mxu0 0.0
        %1035 = vmatpush1.xpose.msra.mxu0 0.0
        %1036 = vmatprep.subr.mxu0 0.0
        %1037 = vmatpush1.xpose.msra.mxu0 0.0
        %1038 = vmatprep.subr.mxu0 0.0
        %1039 = vmatpush1.xpose.msra.mxu0 0.0
        %1040 = vmatprep.subr.mxu0 0.0
        %1041 = vmatpush1.xpose.msra.mxu0 %v1008
        %1042 = vmatprep.subr.mxu0 0.0
        %1043 = vmatpush2.xpose.msra.mxu0 0.0
        %1044 = vmatprep.subr.mxu0 0.0
        %1045 = vmatpush2.xpose.msra.mxu0 0.0
        %1046 = vmatprep.subr.mxu0 0.0
        %1047 = vmatpush2.xpose.msra.mxu0 0.0
        %1048 = vmatprep.subr.mxu0 0.0
        %1049 = vmatpush2.xpose.msra.mxu0 0.0
        %1050 = vmatprep.subr.mxu0 0.0
        %1051 = vmatpush2.xpose.msra.mxu0 0.0
        %1052 = vmatprep.subr.mxu0 0.0
        %1053 = vmatpush2.xpose.msra.mxu0 0.0
        %1054 = vmatprep.subr.mxu0 0.0
        %1055 = vmatpush2.xpose.msra.mxu0 0.0
        %1056 = vmatprep.subr.mxu0 0.0
        %1057 = vmatpush2.xpose.msra.mxu0 0.0
        %1058 = vmatprep.subr.mxu0 0.0
        %1059 = vmatpush2.xpose.msra.mxu0 0.0
        %1060 = vmatprep.subr.mxu0 0.0
        %1061 = vmatpush2.xpose.msra.mxu0 0.0
        %1062 = vmatprep.subr.mxu0 0.0
        %1063 = vmatpush2.xpose.msra.mxu0 0.0
        %1064 = vmatprep.subr.mxu0 0.0
        %1065 = vmatpush2.xpose.msra.mxu0 0.0
        %1066 = vmatprep.subr.mxu0 0.0
        %1067 = vmatpush2.xpose.msra.mxu0 0.0
        %1068 = vmatprep.subr.mxu0 0.0
        %1069 = vmatpush2.xpose.msra.mxu0 0.0
        %1070 = vmatprep.subr.mxu0 0.0
        %1071 = vmatpush2.xpose.msra.mxu0 0.0
        %1072 = vmatprep.subr.mxu0 0.0
        %1073 = vmatpush2.xpose.msra.mxu0 0.0
        %1074 = vmatprep.mubr.f32.mxu0 0.0
        %1075 = vmatmul.mubr.f32.gmra.mxu0 %v1006
        %v1076 = vpop.f32.mrf.mxu0
        %v1077 = vadd.f32 0.0, %v1076
        %v1078 = vpop.f32.mrf.mxu0
        %1079 = vdwg.mxu0
        %v1080 = vsel %vm911, %v1077, -inf
        %1081 = vmax.xlane.f32.xlu0 %v1080
        %v1082 = vpop.xlane.xlu0 %1081
        %v1083 = vsub.f32 %v1077, %v1082
        %v1084 = vmul.f32 %v1083, 1.442695
        %v1085 = vpow.pop %v1084
        %v1086 = vsel %vm911, %v1085, 0.0
        %1087 = vadd.xlane.f32.xlu0 %v1086
        %v1088 = vpop.xlane.xlu0 %1087
        %v1089 = vrcp.pop %v1088
        %v1090 = vmul.f32 %v1085, %v1089
        %1091 = vrot.lane.b32.xlu0 %v828, 56
        %v1092 = vpop.permute.xlu0 %1091
        %v1094 = vsel %vm925, %v1090, 0
        %v1096 = vsel %vm929, %v1092, 0
        %1098 = vmatprep.subr.mxu0 0.0
        %1099 = vmatpush1.msra.mxu0 0.0
        %1100 = vmatprep.subr.mxu0 0.0
        %1101 = vmatpush1.msra.mxu0 0.0
        %1102 = vmatprep.subr.mxu0 0.0
        %1103 = vmatpush1.msra.mxu0 0.0
        %1104 = vmatprep.subr.mxu0 0.0
        %1105 = vmatpush1.msra.mxu0 0.0
        %1106 = vmatprep.subr.mxu0 0.0
        %1107 = vmatpush1.msra.mxu0 0.0
        %1108 = vmatprep.subr.mxu0 0.0
        %1109 = vmatpush1.msra.mxu0 0.0
        %1110 = vmatprep.subr.mxu0 0.0
        %1111 = vmatpush1.msra.mxu0 0.0
        %1112 = vmatprep.subr.mxu0 0.0
        %1113 = vmatpush1.msra.mxu0 0.0
        %1114 = vmatprep.subr.mxu0 0.0
        %1115 = vmatpush1.msra.mxu0 0.0
        %1116 = vmatprep.subr.mxu0 0.0
        %1117 = vmatpush1.msra.mxu0 0.0
        %1118 = vmatprep.subr.mxu0 0.0
        %1119 = vmatpush1.msra.mxu0 0.0
        %1120 = vmatprep.subr.mxu0 0.0
        %1121 = vmatpush1.msra.mxu0 0.0
        %1122 = vmatprep.subr.mxu0 0.0
        %1123 = vmatpush1.msra.mxu0 0.0
        %1124 = vmatprep.subr.mxu0 0.0
        %1125 = vmatpush1.msra.mxu0 0.0
        %1126 = vmatprep.subr.mxu0 0.0
        %1127 = vmatpush1.msra.mxu0 0.0
        %1128 = vmatprep.subr.mxu0 0.0
        %1129 = vmatpush1.msra.mxu0 %v1096
        %1130 = vmatprep.subr.mxu0 0.0
        %1131 = vmatpush2.msra.mxu0 0.0
        %1132 = vmatprep.subr.mxu0 0.0
        %1133 = vmatpush2.msra.mxu0 0.0
        %1134 = vmatprep.subr.mxu0 0.0
        %1135 = vmatpush2.msra.mxu0 0.0
        %1136 = vmatprep.subr.mxu0 0.0
        %1137 = vmatpush2.msra.mxu0 0.0
        %1138 = vmatprep.subr.mxu0 0.0
        %1139 = vmatpush2.msra.mxu0 0.0
        %1140 = vmatprep.subr.mxu0 0.0
        %1141 = vmatpush2.msra.mxu0 0.0
        %1142 = vmatprep.subr.mxu0 0.0
        %1143 = vmatpush2.msra.mxu0 0.0
        %1144 = vmatprep.subr.mxu0 0.0
        %1145 = vmatpush2.msra.mxu0 0.0
        %1146 = vmatprep.subr.mxu0 0.0
        %1147 = vmatpush2.msra.mxu0 0.0
        %1148 = vmatprep.subr.mxu0 0.0
        %1149 = vmatpush2.msra.mxu0 0.0
        %1150 = vmatprep.subr.mxu0 0.0
        %1151 = vmatpush2.msra.mxu0 0.0
        %1152 = vmatprep.subr.mxu0 0.0
        %1153 = vmatpush2.msra.mxu0 0.0
        %1154 = vmatprep.subr.mxu0 0.0
        %1155 = vmatpush2.msra.mxu0 0.0
        %1156 = vmatprep.subr.mxu0 0.0
        %1157 = vmatpush2.msra.mxu0 0.0
        %1158 = vmatprep.subr.mxu0 0.0
        %1159 = vmatpush2.msra.mxu0 0.0
        %1160 = vmatprep.subr.mxu0 0.0
        %1161 = vmatpush2.msra.mxu0 0.0
        %1162 = vmatprep.mubr.f32.mxu0 0.0
        %1163 = vmatmul.mubr.f32.gmra.mxu0 %v1094
        %v1164 = vpop.f32.mrf.mxu0
        %v1165 = vadd.f32 0.0, %v1164
        %v1166 = vpop.f32.mrf.mxu0
        %1167 = vdwg.mxu0
        %1168 = vrot.lane.b32.xlu0 %v831, 112
        %v1169 = vpop.permute.xlu0 %1168
        %1170 = vrot.lane.b32.xlu0 %v828, 80
        %v1171 = vpop.permute.xlu0 %1170
        %v1172 = vsel %vm835, %v1169, 0
        %v1174 = vsel %vm835, %v1171, 0
        %1176 = vmatprep.subr.mxu0 0.0
        %1177 = vmatpush1.xpose.msra.mxu0 0.0
        %1178 = vmatprep.subr.mxu0 0.0
        %1179 = vmatpush1.xpose.msra.mxu0 0.0
        %1180 = vmatprep.subr.mxu0 0.0
        %1181 = vmatpush1.xpose.msra.mxu0 0.0
        %1182 = vmatprep.subr.mxu0 0.0
        %1183 = vmatpush1.xpose.msra.mxu0 0.0
        %1184 = vmatprep.subr.mxu0 0.0
        %1185 = vmatpush1.xpose.msra.mxu0 0.0
        %1186 = vmatprep.subr.mxu0 0.0
        %1187 = vmatpush1.xpose.msra.mxu0 0.0
        %1188 = vmatprep.subr.mxu0 0.0
        %1189 = vmatpush1.xpose.msra.mxu0 0.0
        %1190 = vmatprep.subr.mxu0 0.0
        %1191 = vmatpush1.xpose.msra.mxu0 0.0
        %1192 = vmatprep.subr.mxu0 0.0
        %1193 = vmatpush1.xpose.msra.mxu0 0.0
        %1194 = vmatprep.subr.mxu0 0.0
        %1195 = vmatpush1.xpose.msra.mxu0 0.0
        %1196 = vmatprep.subr.mxu0 0.0
        %1197 = vmatpush1.xpose.msra.mxu0 0.0
        %1198 = vmatprep.subr.mxu0 0.0
        %1199 = vmatpush1.xpose.msra.mxu0 0.0
        %1200 = vmatprep.subr.mxu0 0.0
        %1201 = vmatpush1.xpose.msra.mxu0 0.0
        %1202 = vmatprep.subr.mxu0 0.0
        %1203 = vmatpush1.xpose.msra.mxu0 0.0
        %1204 = vmatprep.subr.mxu0 0.0
        %1205 = vmatpush1.xpose.msra.mxu0 0.0
        %1206 = vmatprep.subr.mxu0 0.0
        %1207 = vmatpush1.xpose.msra.mxu0 %v1174
        %1208 = vmatprep.subr.mxu0 0.0
        %1209 = vmatpush2.xpose.msra.mxu0 0.0
        %1210 = vmatprep.subr.mxu0 0.0
        %1211 = vmatpush2.xpose.msra.mxu0 0.0
        %1212 = vmatprep.subr.mxu0 0.0
        %1213 = vmatpush2.xpose.msra.mxu0 0.0
        %1214 = vmatprep.subr.mxu0 0.0
        %1215 = vmatpush2.xpose.msra.mxu0 0.0
        %1216 = vmatprep.subr.mxu0 0.0
        %1217 = vmatpush2.xpose.msra.mxu0 0.0
        %1218 = vmatprep.subr.mxu0 0.0
        %1219 = vmatpush2.xpose.msra.mxu0 0.0
        %1220 = vmatprep.subr.mxu0 0.0
        %1221 = vmatpush2.xpose.msra.mxu0 0.0
        %1222 = vmatprep.subr.mxu0 0.0
        %1223 = vmatpush2.xpose.msra.mxu0 0.0
        %1224 = vmatprep.subr.mxu0 0.0
        %1225 = vmatpush2.xpose.msra.mxu0 0.0
        %1226 = vmatprep.subr.mxu0 0.0
        %1227 = vmatpush2.xpose.msra.mxu0 0.0
        %1228 = vmatprep.subr.mxu0 0.0
        %1229 = vmatpush2.xpose.msra.mxu0 0.0
        %1230 = vmatprep.subr.mxu0 0.0
        %1231 = vmatpush2.xpose.msra.mxu0 0.0
        %1232 = vmatprep.subr.mxu0 0.0
        %1233 = vmatpush2.xpose.msra.mxu0 0.0
        %1234 = vmatprep.subr.mxu0 0.0
        %1235 = vmatpush2.xpose.msra.mxu0 0.0
        %1236 = vmatprep.subr.mxu0 0.0
        %1237 = vmatpush2.xpose.msra.mxu0 0.0
        %1238 = vmatprep.subr.mxu0 0.0
        %1239 = vmatpush2.xpose.msra.mxu0 0.0
        %1240 = vmatprep.mubr.f32.mxu0 0.0
        %1241 = vmatmul.mubr.f32.gmra.mxu0 %v1172
        %v1242 = vpop.f32.mrf.mxu0
        %v1243 = vadd.f32 0.0, %v1242
        %v1244 = vpop.f32.mrf.mxu0
        %1245 = vdwg.mxu0
        %v1246 = vsel %vm911, %v1243, -inf
        %1247 = vmax.xlane.f32.xlu0 %v1246
        %v1248 = vpop.xlane.xlu0 %1247
        %v1249 = vsub.f32 %v1243, %v1248
        %v1250 = vmul.f32 %v1249, 1.442695
        %v1251 = vpow.pop %v1250
        %v1252 = vsel %vm911, %v1251, 0.0
        %1253 = vadd.xlane.f32.xlu0 %v1252
        %v1254 = vpop.xlane.xlu0 %1253
        %v1255 = vrcp.pop %v1254
        %v1256 = vmul.f32 %v1251, %v1255
        %1257 = vrot.lane.b32.xlu0 %v828, 48
        %v1258 = vpop.permute.xlu0 %1257
        %v1260 = vsel %vm925, %v1256, 0
        %v1262 = vsel %vm929, %v1258, 0
        %1264 = vmatprep.subr.mxu0 0.0
        %1265 = vmatpush1.msra.mxu0 0.0
        %1266 = vmatprep.subr.mxu0 0.0
        %1267 = vmatpush1.msra.mxu0 0.0
        %1268 = vmatprep.subr.mxu0 0.0
        %1269 = vmatpush1.msra.mxu0 0.0
        %1270 = vmatprep.subr.mxu0 0.0
        %1271 = vmatpush1.msra.mxu0 0.0
        %1272 = vmatprep.subr.mxu0 0.0
        %1273 = vmatpush1.msra.mxu0 0.0
        %1274 = vmatprep.subr.mxu0 0.0
        %1275 = vmatpush1.msra.mxu0 0.0
        %1276 = vmatprep.subr.mxu0 0.0
        %1277 = vmatpush1.msra.mxu0 0.0
        %1278 = vmatprep.subr.mxu0 0.0
        %1279 = vmatpush1.msra.mxu0 0.0
        %1280 = vmatprep.subr.mxu0 0.0
        %1281 = vmatpush1.msra.mxu0 0.0
        %1282 = vmatprep.subr.mxu0 0.0
        %1283 = vmatpush1.msra.mxu0 0.0
        %1284 = vmatprep.subr.mxu0 0.0
        %1285 = vmatpush1.msra.mxu0 0.0
        %1286 = vmatprep.subr.mxu0 0.0
        %1287 = vmatpush1.msra.mxu0 0.0
        %1288 = vmatprep.subr.mxu0 0.0
        %1289 = vmatpush1.msra.mxu0 0.0
        %1290 = vmatprep.subr.mxu0 0.0
        %1291 = vmatpush1.msra.mxu0 0.0
        %1292 = vmatprep.subr.mxu0 0.0
        %1293 = vmatpush1.msra.mxu0 0.0
        %1294 = vmatprep.subr.mxu0 0.0
        %1295 = vmatpush1.msra.mxu0 %v1262
        %1296 = vmatprep.subr.mxu0 0.0
        %1297 = vmatpush2.msra.mxu0 0.0
        %1298 = vmatprep.subr.mxu0 0.0
        %1299 = vmatpush2.msra.mxu0 0.0
        %1300 = vmatprep.subr.mxu0 0.0
        %1301 = vmatpush2.msra.mxu0 0.0
        %1302 = vmatprep.subr.mxu0 0.0
        %1303 = vmatpush2.msra.mxu0 0.0
        %1304 = vmatprep.subr.mxu0 0.0
        %1305 = vmatpush2.msra.mxu0 0.0
        %1306 = vmatprep.subr.mxu0 0.0
        %1307 = vmatpush2.msra.mxu0 0.0
        %1308 = vmatprep.subr.mxu0 0.0
        %1309 = vmatpush2.msra.mxu0 0.0
        %1310 = vmatprep.subr.mxu0 0.0
        %1311 = vmatpush2.msra.mxu0 0.0
        %1312 = vmatprep.subr.mxu0 0.0
        %1313 = vmatpush2.msra.mxu0 0.0
        %1314 = vmatprep.subr.mxu0 0.0
        %1315 = vmatpush2.msra.mxu0 0.0
        %1316 = vmatprep.subr.mxu0 0.0
        %1317 = vmatpush2.msra.mxu0 0.0
        %1318 = vmatprep.subr.mxu0 0.0
        %1319 = vmatpush2.msra.mxu0 0.0
        %1320 = vmatprep.subr.mxu0 0.0
        %1321 = vmatpush2.msra.mxu0 0.0
        %1322 = vmatprep.subr.mxu0 0.0
        %1323 = vmatpush2.msra.mxu0 0.0
        %1324 = vmatprep.subr.mxu0 0.0
        %1325 = vmatpush2.msra.mxu0 0.0
        %1326 = vmatprep.subr.mxu0 0.0
        %1327 = vmatpush2.msra.mxu0 0.0
        %1328 = vmatprep.mubr.f32.mxu0 0.0
        %1329 = vmatmul.mubr.f32.gmra.mxu0 %v1260
        %v1330 = vpop.f32.mrf.mxu0
        %v1331 = vadd.f32 0.0, %v1330
        %v1332 = vpop.f32.mrf.mxu0
        %1333 = vdwg.mxu0
        %1334 = vrot.lane.b32.xlu0 %v831, 104
        %v1335 = vpop.permute.xlu0 %1334
        %1336 = vrot.lane.b32.xlu0 %v828, 72
        %v1337 = vpop.permute.xlu0 %1336
        %v1338 = vsel %vm835, %v1335, 0
        %v1340 = vsel %vm835, %v1337, 0
        %1342 = vmatprep.subr.mxu0 0.0
        %1343 = vmatpush1.xpose.msra.mxu0 0.0
        %1344 = vmatprep.subr.mxu0 0.0
        %1345 = vmatpush1.xpose.msra.mxu0 0.0
        %1346 = vmatprep.subr.mxu0 0.0
        %1347 = vmatpush1.xpose.msra.mxu0 0.0
        %1348 = vmatprep.subr.mxu0 0.0
        %1349 = vmatpush1.xpose.msra.mxu0 0.0
        %1350 = vmatprep.subr.mxu0 0.0
        %1351 = vmatpush1.xpose.msra.mxu0 0.0
        %1352 = vmatprep.subr.mxu0 0.0
        %1353 = vmatpush1.xpose.msra.mxu0 0.0
        %1354 = vmatprep.subr.mxu0 0.0
        %1355 = vmatpush1.xpose.msra.mxu0 0.0
        %1356 = vmatprep.subr.mxu0 0.0
        %1357 = vmatpush1.xpose.msra.mxu0 0.0
        %1358 = vmatprep.subr.mxu0 0.0
        %1359 = vmatpush1.xpose.msra.mxu0 0.0
        %1360 = vmatprep.subr.mxu0 0.0
        %1361 = vmatpush1.xpose.msra.mxu0 0.0
        %1362 = vmatprep.subr.mxu0 0.0
        %1363 = vmatpush1.xpose.msra.mxu0 0.0
        %1364 = vmatprep.subr.mxu0 0.0
        %1365 = vmatpush1.xpose.msra.mxu0 0.0
        %1366 = vmatprep.subr.mxu0 0.0
        %1367 = vmatpush1.xpose.msra.mxu0 0.0
        %1368 = vmatprep.subr.mxu0 0.0
        %1369 = vmatpush1.xpose.msra.mxu0 0.0
        %1370 = vmatprep.subr.mxu0 0.0
        %1371 = vmatpush1.xpose.msra.mxu0 0.0
        %1372 = vmatprep.subr.mxu0 0.0
        %1373 = vmatpush1.xpose.msra.mxu0 %v1340
        %1374 = vmatprep.subr.mxu0 0.0
        %1375 = vmatpush2.xpose.msra.mxu0 0.0
        %1376 = vmatprep.subr.mxu0 0.0
        %1377 = vmatpush2.xpose.msra.mxu0 0.0
        %1378 = vmatprep.subr.mxu0 0.0
        %1379 = vmatpush2.xpose.msra.mxu0 0.0
        %1380 = vmatprep.subr.mxu0 0.0
        %1381 = vmatpush2.xpose.msra.mxu0 0.0
        %1382 = vmatprep.subr.mxu0 0.0
        %1383 = vmatpush2.xpose.msra.mxu0 0.0
        %1384 = vmatprep.subr.mxu0 0.0
        %1385 = vmatpush2.xpose.msra.mxu0 0.0
        %1386 = vmatprep.subr.mxu0 0.0
        %1387 = vmatpush2.xpose.msra.mxu0 0.0
        %1388 = vmatprep.subr.mxu0 0.0
        %1389 = vmatpush2.xpose.msra.mxu0 0.0
        %1390 = vmatprep.subr.mxu0 0.0
        %1391 = vmatpush2.xpose.msra.mxu0 0.0
        %1392 = vmatprep.subr.mxu0 0.0
        %1393 = vmatpush2.xpose.msra.mxu0 0.0
        %1394 = vmatprep.subr.mxu0 0.0
        %1395 = vmatpush2.xpose.msra.mxu0 0.0
        %1396 = vmatprep.subr.mxu0 0.0
        %1397 = vmatpush2.xpose.msra.mxu0 0.0
        %1398 = vmatprep.subr.mxu0 0.0
        %1399 = vmatpush2.xpose.msra.mxu0 0.0
        %1400 = vmatprep.subr.mxu0 0.0
        %1401 = vmatpush2.xpose.msra.mxu0 0.0
        %1402 = vmatprep.subr.mxu0 0.0
        %1403 = vmatpush2.xpose.msra.mxu0 0.0
        %1404 = vmatprep.subr.mxu0 0.0
        %1405 = vmatpush2.xpose.msra.mxu0 0.0
        %1406 = vmatprep.mubr.f32.mxu0 0.0
        %1407 = vmatmul.mubr.f32.gmra.mxu0 %v1338
        %v1408 = vpop.f32.mrf.mxu0
        %v1409 = vadd.f32 0.0, %v1408
        %v1410 = vpop.f32.mrf.mxu0
        %1411 = vdwg.mxu0
        %v1412 = vsel %vm911, %v1409, -inf
        %1413 = vmax.xlane.f32.xlu0 %v1412
        %v1414 = vpop.xlane.xlu0 %1413
        %v1415 = vsub.f32 %v1409, %v1414
        %v1416 = vmul.f32 %v1415, 1.442695
        %v1417 = vpow.pop %v1416
        %v1418 = vsel %vm911, %v1417, 0.0
        %1419 = vadd.xlane.f32.xlu0 %v1418
        %v1420 = vpop.xlane.xlu0 %1419
        %v1421 = vrcp.pop %v1420
        %v1422 = vmul.f32 %v1417, %v1421
        %1423 = vrot.lane.b32.xlu0 %v828, 40
        %v1424 = vpop.permute.xlu0 %1423
        %v1426 = vsel %vm925, %v1422, 0
        %v1428 = vsel %vm929, %v1424, 0
        %1430 = vmatprep.subr.mxu0 0.0
        %1431 = vmatpush1.msra.mxu0 0.0
        %1432 = vmatprep.subr.mxu0 0.0
        %1433 = vmatpush1.msra.mxu0 0.0
        %1434 = vmatprep.subr.mxu0 0.0
        %1435 = vmatpush1.msra.mxu0 0.0
        %1436 = vmatprep.subr.mxu0 0.0
        %1437 = vmatpush1.msra.mxu0 0.0
        %1438 = vmatprep.subr.mxu0 0.0
        %1439 = vmatpush1.msra.mxu0 0.0
        %1440 = vmatprep.subr.mxu0 0.0
        %1441 = vmatpush1.msra.mxu0 0.0
        %1442 = vmatprep.subr.mxu0 0.0
        %1443 = vmatpush1.msra.mxu0 0.0
        %1444 = vmatprep.subr.mxu0 0.0
        %1445 = vmatpush1.msra.mxu0 0.0
        %1446 = vmatprep.subr.mxu0 0.0
        %1447 = vmatpush1.msra.mxu0 0.0
        %1448 = vmatprep.subr.mxu0 0.0
        %1449 = vmatpush1.msra.mxu0 0.0
        %1450 = vmatprep.subr.mxu0 0.0
        %1451 = vmatpush1.msra.mxu0 0.0
        %1452 = vmatprep.subr.mxu0 0.0
        %1453 = vmatpush1.msra.mxu0 0.0
        %1454 = vmatprep.subr.mxu0 0.0
        %1455 = vmatpush1.msra.mxu0 0.0
        %1456 = vmatprep.subr.mxu0 0.0
        %1457 = vmatpush1.msra.mxu0 0.0
        %1458 = vmatprep.subr.mxu0 0.0
        %1459 = vmatpush1.msra.mxu0 0.0
        %1460 = vmatprep.subr.mxu0 0.0
        %1461 = vmatpush1.msra.mxu0 %v1428
        %1462 = vmatprep.subr.mxu0 0.0
        %1463 = vmatpush2.msra.mxu0 0.0
        %1464 = vmatprep.subr.mxu0 0.0
        %1465 = vmatpush2.msra.mxu0 0.0
        %1466 = vmatprep.subr.mxu0 0.0
        %1467 = vmatpush2.msra.mxu0 0.0
        %1468 = vmatprep.subr.mxu0 0.0
        %1469 = vmatpush2.msra.mxu0 0.0
        %1470 = vmatprep.subr.mxu0 0.0
        %1471 = vmatpush2.msra.mxu0 0.0
        %1472 = vmatprep.subr.mxu0 0.0
        %1473 = vmatpush2.msra.mxu0 0.0
        %1474 = vmatprep.subr.mxu0 0.0
        %1475 = vmatpush2.msra.mxu0 0.0
        %1476 = vmatprep.subr.mxu0 0.0
        %1477 = vmatpush2.msra.mxu0 0.0
        %1478 = vmatprep.subr.mxu0 0.0
        %1479 = vmatpush2.msra.mxu0 0.0
        %1480 = vmatprep.subr.mxu0 0.0
        %1481 = vmatpush2.msra.mxu0 0.0
        %1482 = vmatprep.subr.mxu0 0.0
        %1483 = vmatpush2.msra.mxu0 0.0
        %1484 = vmatprep.subr.mxu0 0.0
        %1485 = vmatpush2.msra.mxu0 0.0
        %1486 = vmatprep.subr.mxu0 0.0
        %1487 = vmatpush2.msra.mxu0 0.0
        %1488 = vmatprep.subr.mxu0 0.0
        %1489 = vmatpush2.msra.mxu0 0.0
        %1490 = vmatprep.subr.mxu0 0.0
        %1491 = vmatpush2.msra.mxu0 0.0
        %1492 = vmatprep.subr.mxu0 0.0
        %1493 = vmatpush2.msra.mxu0 0.0
        %1494 = vmatprep.mubr.f32.mxu0 0.0
        %1495 = vmatmul.mubr.f32.gmra.mxu0 %v1426
        %v1496 = vpop.f32.mrf.mxu0
        %v1497 = vadd.f32 0.0, %v1496
        %v1498 = vpop.f32.mrf.mxu0
        %1499 = vdwg.mxu0
        %1501 = vrot.lane.b32.xlu0 %v1165, 8
        %v1502 = vpop.permute.xlu0 %1501
        %1505 = vrot.lane.b32.xlu0 %v1331, 16
        %v1506 = vpop.permute.xlu0 %1505
        %1509 = vrot.lane.b32.xlu0 %v1497, 24
        %v1510 = vpop.permute.xlu0 %1509
        %v1512 = vsel %vm835, %v999, %v1502
        %vm1513 = vcmask 130048
        %v1514 = vsel %vm1513, %v1512, %v1506
        %vm1515 = vcmask 195584
        %v1516 = vsel %vm1515, %v1514, %v1510
        %v1517 = vld [vmem:[%s9] sm:$0xff]
        %v1518 = vld [vmem:[%s9 + $0x8] sm:$0xff]
        %v1519 = vld [vmem:[%s9 + $0x10] sm:$0xff]
        %v1520 = vld [vmem:[%s9 + $0x18] sm:$0xff]
        %v1522 = vsel %vm757, %v1516, 0
        %1524 = vmatprep.subr.mxu0 0.0
        %1525 = vmatpush1.msra.mxu0 0.0
        %1526 = vmatprep.subr.mxu0 0.0
        %1527 = vmatpush1.msra.mxu0 0.0
        %1528 = vmatprep.subr.mxu0 0.0
        %1529 = vmatpush1.msra.mxu0 0.0
        %1530 = vmatprep.subr.mxu0 0.0
        %1531 = vmatpush1.msra.mxu0 0.0
        %1532 = vmatprep.subr.mxu0 0.0
        %1533 = vmatpush1.msra.mxu0 0.0
        %1534 = vmatprep.subr.mxu0 0.0
        %1535 = vmatpush1.msra.mxu0 0.0
        %1536 = vmatprep.subr.mxu0 0.0
        %1537 = vmatpush1.msra.mxu0 0.0
        %1538 = vmatprep.subr.mxu0 0.0
        %1539 = vmatpush1.msra.mxu0 0.0
        %1540 = vmatprep.subr.mxu0 0.0
        %1541 = vmatpush1.msra.mxu0 0.0
        %1542 = vmatprep.subr.mxu0 0.0
        %1543 = vmatpush1.msra.mxu0 0.0
        %1544 = vmatprep.subr.mxu0 0.0
        %1545 = vmatpush1.msra.mxu0 0.0
        %1546 = vmatprep.subr.mxu0 0.0
        %1547 = vmatpush1.msra.mxu0 0.0
        %1548 = vmatprep.subr.mxu0 0.0
        %1549 = vmatpush1.msra.mxu0 %v1520
        %1550 = vmatprep.subr.mxu0 0.0
        %1551 = vmatpush1.msra.mxu0 %v1519
        %1552 = vmatprep.subr.mxu0 0.0
        %1553 = vmatpush1.msra.mxu0 %v1518
        %1554 = vmatprep.subr.mxu0 0.0
        %1555 = vmatpush1.msra.mxu0 %v1517
        %1556 = vmatprep.subr.mxu0 0.0
        %1557 = vmatpush2.msra.mxu0 0.0
        %1558 = vmatprep.subr.mxu0 0.0
        %1559 = vmatpush2.msra.mxu0 0.0
        %1560 = vmatprep.subr.mxu0 0.0
        %1561 = vmatpush2.msra.mxu0 0.0
        %1562 = vmatprep.subr.mxu0 0.0
        %1563 = vmatpush2.msra.mxu0 0.0
        %1564 = vmatprep.subr.mxu0 0.0
        %1565 = vmatpush2.msra.mxu0 0.0
        %1566 = vmatprep.subr.mxu0 0.0
        %1567 = vmatpush2.msra.mxu0 0.0
        %1568 = vmatprep.subr.mxu0 0.0
        %1569 = vmatpush2.msra.mxu0 0.0
        %1570 = vmatprep.subr.mxu0 0.0
        %1571 = vmatpush2.msra.mxu0 0.0
        %1572 = vmatprep.subr.mxu0 0.0
        %1573 = vmatpush2.msra.mxu0 0.0
        %1574 = vmatprep.subr.mxu0 0.0
        %1575 = vmatpush2.msra.mxu0 0.0
        %1576 = vmatprep.subr.mxu0 0.0
        %1577 = vmatpush2.msra.mxu0 0.0
        %1578 = vmatprep.subr.mxu0 0.0
        %1579 = vmatpush2.msra.mxu0 0.0
        %1580 = vmatprep.subr.mxu0 0.0
        %1581 = vmatpush2.msra.mxu0 0.0
        %1582 = vmatprep.subr.mxu0 0.0
        %1583 = vmatpush2.msra.mxu0 0.0
        %1584 = vmatprep.subr.mxu0 0.0
        %1585 = vmatpush2.msra.mxu0 0.0
        %1586 = vmatprep.subr.mxu0 0.0
        %1587 = vmatpush2.msra.mxu0 0.0
        %1588 = vmatprep.mubr.f32.mxu0 0.0
        %1589 = vmatmul.mubr.f32.gmra.mxu0 %v1522
        %v1590 = vpop.f32.mrf.mxu0
        %v1591 = vadd.f32 0.0, %v1590
        %v1592 = vpop.f32.mrf.mxu0
        %1593 = vdwg.mxu0
        %v1594 = vadd.f32 %v714, %v1591
        %v1595 = vld [vmem:[%s10] sm:$0x1]
        %v1597 = vlaneseq
        %v1598 = vshrl.u32 %v1597, 7
        %v1599 = vsub.s32 0, %v1598
        %v1600 = vrot.slane %v1595, %v1599
        %v1602 = vadd.f32 %v1594, %v1600
        %v1603 = vld [vmem:[%s11] sm:$0x1]
        %v1604 = vld [vmem:[%s12] sm:$0x1]
        %v1605 = vsel %vm717, %v1602, 0.0
        %1606 = vadd.xlane.f32.xlu0 %v1605
        %v1607 = vpop.xlane.xlu0 %1606
        %v1608 = vmul.f32 %v1607, %v721
        %v1609 = vsub.f32 %v1602, %v1608
        %v1610 = vmul.f32 %v1609, %v1609
        %v1611 = vsel %vm717, %v1610, 0.0
        %1612 = vadd.xlane.f32.xlu0 %v1611
        %v1613 = vpop.xlane.xlu0 %1612
        %v1614 = vmul.f32 %v1613, %v721
        %v1615 = vadd.f32 %v1614, 1e-06
        %v1616 = vrsqrt.pop %v1615
        %v1617 = vmul.f32 %v1609, %v1616
        %v1619 = vlaneseq
        %v1620 = vshrl.u32 %v1619, 7
        %v1621 = vsub.s32 0, %v1620
        %v1622 = vrot.slane %v1603, %v1621
        %v1624 = vmul.f32 %v1617, %v1622
        %v1626 = vlaneseq
        %v1627 = vshrl.u32 %v1626, 7
        %v1628 = vsub.s32 0, %v1627
        %v1629 = vrot.slane %v1604, %v1628
        %v1631 = vadd.f32 %v1624, %v1629
        %v1632 = vld [vmem:[%s13] sm:$0xff]
        %v1633 = vld [vmem:[%s13 + $0x8] sm:$0xff]
        %v1634 = vld [vmem:[%s13 + $0x10] sm:$0xff]
        %v1635 = vld [vmem:[%s13 + $0x18] sm:$0xff]
        %v1636 = vld [vmem:[%s14] sm:$0x1]
        %v1638 = vlaneseq
        %v1639 = vshrl.u32 %v1638, 7
        %v1640 = vsub.s32 0, %v1639
        %v1641 = vrot.slane %v1636, %v1640
        %v1644 = vsel %vm757, %v1631, 0
        %1646 = vmatprep.subr.mxu0 0.0
        %1647 = vmatpush1.msra.mxu0 0.0
        %1648 = vmatprep.subr.mxu0 0.0
        %1649 = vmatpush1.msra.mxu0 0.0
        %1650 = vmatprep.subr.mxu0 0.0
        %1651 = vmatpush1.msra.mxu0 0.0
        %1652 = vmatprep.subr.mxu0 0.0
        %1653 = vmatpush1.msra.mxu0 0.0
        %1654 = vmatprep.subr.mxu0 0.0
        %1655 = vmatpush1.msra.mxu0 0.0
        %1656 = vmatprep.subr.mxu0 0.0
        %1657 = vmatpush1.msra.mxu0 0.0
        %1658 = vmatprep.subr.mxu0 0.0
        %1659 = vmatpush1.msra.mxu0 0.0
        %1660 = vmatprep.subr.mxu0 0.0
        %1661 = vmatpush1.msra.mxu0 0.0
        %1662 = vmatprep.subr.mxu0 0.0
        %1663 = vmatpush1.msra.mxu0 0.0
        %1664 = vmatprep.subr.mxu0 0.0
        %1665 = vmatpush1.msra.mxu0 0.0
        %1666 = vmatprep.subr.mxu0 0.0
        %1667 = vmatpush1.msra.mxu0 0.0
        %1668 = vmatprep.subr.mxu0 0.0
        %1669 = vmatpush1.msra.mxu0 0.0
        %1670 = vmatprep.subr.mxu0 0.0
        %1671 = vmatpush1.msra.mxu0 %v1635
        %1672 = vmatprep.subr.mxu0 0.0
        %1673 = vmatpush1.msra.mxu0 %v1634
        %1674 = vmatprep.subr.mxu0 0.0
        %1675 = vmatpush1.msra.mxu0 %v1633
        %1676 = vmatprep.subr.mxu0 0.0
        %1677 = vmatpush1.msra.mxu0 %v1632
        %1678 = vmatprep.subr.mxu0 0.0
        %1679 = vmatpush2.msra.mxu0 0.0
        %1680 = vmatprep.subr.mxu0 0.0
        %1681 = vmatpush2.msra.mxu0 0.0
        %1682 = vmatprep.subr.mxu0 0.0
        %1683 = vmatpush2.msra.mxu0 0.0
        %1684 = vmatprep.subr.mxu0 0.0
        %1685 = vmatpush2.msra.mxu0 0.0
        %1686 = vmatprep.subr.mxu0 0.0
        %1687 = vmatpush2.msra.mxu0 0.0
        %1688 = vmatprep.subr.mxu0 0.0
        %1689 = vmatpush2.msra.mxu0 0.0
        %1690 = vmatprep.subr.mxu0 0.0
        %1691 = vmatpush2.msra.mxu0 0.0
        %1692 = vmatprep.subr.mxu0 0.0
        %1693 = vmatpush2.msra.mxu0 0.0
        %1694 = vmatprep.subr.mxu0 0.0
        %1695 = vmatpush2.msra.mxu0 0.0
        %1696 = vmatprep.subr.mxu0 0.0
        %1697 = vmatpush2.msra.mxu0 0.0
        %1698 = vmatprep.subr.mxu0 0.0
        %1699 = vmatpush2.msra.mxu0 0.0
        %1700 = vmatprep.subr.mxu0 0.0
        %1701 = vmatpush2.msra.mxu0 0.0
        %1702 = vmatprep.subr.mxu0 0.0
        %1703 = vmatpush2.msra.mxu0 0.0
        %1704 = vmatprep.subr.mxu0 0.0
        %1705 = vmatpush2.msra.mxu0 0.0
        %1706 = vmatprep.subr.mxu0 0.0
        %1707 = vmatpush2.msra.mxu0 0.0
        %1708 = vmatprep.subr.mxu0 0.0
        %1709 = vmatpush2.msra.mxu0 0.0
        %1710 = vmatprep.mubr.f32.mxu0 0.0
        %1711 = vmatmul.mubr.f32.gmra.mxu0 %v1644
        %v1712 = vpop.f32.mrf.mxu0
        %v1713 = vadd.f32 %v1641, %v1712
        %v1714 = vpop.f32.mrf.mxu0
        %1715 = vdwg.mxu0
        %v1716 = vmul.f32 %v1713, 0.5
        %v1717 = vmul.f32 %v1713, 0.70710677
        %vm1718 = vcmp.ge.f32.partialorder %v1717, 0.0
        %v1719 = vsel %vm1718, 1.0, -1.0
        %v1720 = vand.u32 2147483647, %v1717
        %v1721 = vmul.f32 %v1720, 0.3275911
        %v1722 = vadd.f32 %v1721, 1.0
        %v1723 = vrcp.pop %v1722
        %v1724 = vmul.f32 1.0, %v1723
        %v1725 = vmul.f32 %v1724, 1.0614054
        %v1726 = vadd.f32 %v1725, -1.4531521
        %v1727 = vmul.f32 %v1724, %v1726
        %v1728 = vadd.f32 %v1727, 1.4214138
        %v1729 = vmul.f32 %v1724, %v1728
        %v1730 = vadd.f32 %v1729, -0.28449672
        %v1731 = vmul.f32 %v1724, %v1730
        %v1732 = vadd.f32 %v1731, 0.2548296
        %v1733 = vmul.f32 %v1724, %v1732
        %v1734 = vsub.f32 0.0, %v1720
        %v1735 = vmul.f32 %v1734, %v1720
        %v1736 = vmul.f32 %v1735, 1.442695
        %v1737 = vpow.pop %v1736
        %v1738 = vmul.f32 %v1733, %v1737
        %v1739 = vsub.f32 1.0, %v1738
        %v1740 = vmul.f32 %v1719, %v1739
        %v1741 = vadd.f32 %v1740, 1.0
        %v1742 = vmul.f32 %v1716, %v1741
        %v1743 = vld [vmem:[%s15] sm:$0xff]
        %v1744 = vld [vmem:[%s15 + $0x8] sm:$0xff]
        %v1745 = vld [vmem:[%s15 + $0x10] sm:$0xff]
        %v1746 = vld [vmem:[%s15 + $0x18] sm:$0xff]
        %v1747 = vld [vmem:[%s15 + $0x20] sm:$0xff]
        %v1748 = vld [vmem:[%s15 + $0x28] sm:$0xff]
        %v1749 = vld [vmem:[%s15 + $0x30] sm:$0xff]
        %v1750 = vld [vmem:[%s15 + $0x38] sm:$0xff]
        %v1751 = vld [vmem:[%s15 + $0x40] sm:$0xff]
        %v1752 = vld [vmem:[%s15 + $0x48] sm:$0xff]
        %v1753 = vld [vmem:[%s15 + $0x50] sm:$0xff]
        %v1754 = vld [vmem:[%s15 + $0x58] sm:$0xff]
        %v1755 = vld [vmem:[%s15 + $0x60] sm:$0xff]
        %v1756 = vld [vmem:[%s15 + $0x68] sm:$0xff]
        %v1757 = vld [vmem:[%s15 + $0x70] sm:$0xff]
        %v1758 = vld [vmem:[%s15 + $0x78] sm:$0xff]
        %1759 = vmatprep.subr.mxu0 0.0
        %1760 = vmatpush1.msra.mxu0 %v1758
        %1761 = vmatprep.subr.mxu0 0.0
        %1762 = vmatpush1.msra.mxu0 %v1757
        %1763 = vmatprep.subr.mxu0 0.0
        %1764 = vmatpush1.msra.mxu0 %v1756
        %1765 = vmatprep.subr.mxu0 0.0
        %1766 = vmatpush1.msra.mxu0 %v1755
        %1767 = vmatprep.subr.mxu0 0.0
        %1768 = vmatpush1.msra.mxu0 %v1754
        %1769 = vmatprep.subr.mxu0 0.0
        %1770 = vmatpush1.msra.mxu0 %v1753
        %1771 = vmatprep.subr.mxu0 0.0
        %1772 = vmatpush1.msra.mxu0 %v1752
        %1773 = vmatprep.subr.mxu0 0.0
        %1774 = vmatpush1.msra.mxu0 %v1751
        %1775 = vmatprep.subr.mxu0 0.0
        %1776 = vmatpush1.msra.mxu0 %v1750
        %1777 = vmatprep.subr.mxu0 0.0
        %1778 = vmatpush1.msra.mxu0 %v1749
        %1779 = vmatprep.subr.mxu0 0.0
        %1780 = vmatpush1.msra.mxu0 %v1748
        %1781 = vmatprep.subr.mxu0 0.0
        %1782 = vmatpush1.msra.mxu0 %v1747
        %1783 = vmatprep.subr.mxu0 0.0
        %1784 = vmatpush1.msra.mxu0 %v1746
        %1785 = vmatprep.subr.mxu0 0.0
        %1786 = vmatpush1.msra.mxu0 %v1745
        %1787 = vmatprep.subr.mxu0 0.0
        %1788 = vmatpush1.msra.mxu0 %v1744
        %1789 = vmatprep.subr.mxu0 0.0
        %1790 = vmatpush1.msra.mxu0 %v1743
        %1791 = vmatprep.subr.mxu0 0.0
        %1792 = vmatpush2.msra.mxu0 0.0
        %1793 = vmatprep.subr.mxu0 0.0
        %1794 = vmatpush2.msra.mxu0 0.0
        %1795 = vmatprep.subr.mxu0 0.0
        %1796 = vmatpush2.msra.mxu0 0.0
        %1797 = vmatprep.subr.mxu0 0.0
        %1798 = vmatpush2.msra.mxu0 0.0
        %1799 = vmatprep.subr.mxu0 0.0
        %1800 = vmatpush2.msra.mxu0 0.0
        %1801 = vmatprep.subr.mxu0 0.0
        %1802 = vmatpush2.msra.mxu0 0.0
        %1803 = vmatprep.subr.mxu0 0.0
        %1804 = vmatpush2.msra.mxu0 0.0
        %1805 = vmatprep.subr.mxu0 0.0
        %1806 = vmatpush2.msra.mxu0 0.0
        %1807 = vmatprep.subr.mxu0 0.0
        %1808 = vmatpush2.msra.mxu0 0.0
        %1809 = vmatprep.subr.mxu0 0.0
        %1810 = vmatpush2.msra.mxu0 0.0
        %1811 = vmatprep.subr.mxu0 0.0
        %1812 = vmatpush2.msra.mxu0 0.0
        %1813 = vmatprep.subr.mxu0 0.0
        %1814 = vmatpush2.msra.mxu0 0.0
        %1815 = vmatprep.subr.mxu0 0.0
        %1816 = vmatpush2.msra.mxu0 0.0
        %1817 = vmatprep.subr.mxu0 0.0
        %1818 = vmatpush2.msra.mxu0 0.0
        %1819 = vmatprep.subr.mxu0 0.0
        %1820 = vmatpush2.msra.mxu0 0.0
        %1821 = vmatprep.subr.mxu0 0.0
        %1822 = vmatpush2.msra.mxu0 0.0
        %1823 = vmatprep.mubr.f32.mxu0 0.0
        %1824 = vmatmul.mubr.f32.gmra.mxu0 %v1742
        %v1825 = vpop.f32.mrf.mxu0
        %v1826 = vadd.f32 0.0, %v1825
        %v1827 = vpop.f32.mrf.mxu0
        %1828 = vdwg.mxu0
        %v1829 = vadd.f32 %v1602, %v1826
        %v1830 = vld [vmem:[%s16] sm:$0x1]
        %v1832 = vlaneseq
        %v1833 = vshrl.u32 %v1832, 7
        %v1834 = vsub.s32 0, %v1833
        %v1835 = vrot.slane %v1830, %v1834
        %v1837 = vadd.f32 %v1829, %v1835
        %s1838 = scalar_lea.vmem %s5, 1
        %v1839 = vld [vmem:[%s1838] sm:$0x1]
        %s1840 = scalar_lea.vmem %s6, 1
        %v1841 = vld [vmem:[%s1840] sm:$0x1]
        %v1842 = vsel %vm717, %v1837, 0.0
        %1843 = vadd.xlane.f32.xlu0 %v1842
        %v1844 = vpop.xlane.xlu0 %1843
        %v1845 = vmul.f32 %v1844, %v721
        %v1846 = vsub.f32 %v1837, %v1845
        %v1847 = vmul.f32 %v1846, %v1846
        %v1848 = vsel %vm717, %v1847, 0.0
        %1849 = vadd.xlane.f32.xlu0 %v1848
        %v1850 = vpop.xlane.xlu0 %1849
        %v1851 = vmul.f32 %v1850, %v721
        %v1852 = vadd.f32 %v1851, 1e-06
        %v1853 = vrsqrt.pop %v1852
        %v1854 = vmul.f32 %v1846, %v1853
        %v1856 = vlaneseq
        %v1857 = vshrl.u32 %v1856, 7
        %v1858 = vsub.s32 0, %v1857
        %v1859 = vrot.slane %v1839, %v1858
        %v1861 = vmul.f32 %v1854, %v1859
        %v1863 = vlaneseq
        %v1864 = vshrl.u32 %v1863, 7
        %v1865 = vsub.s32 0, %v1864
        %v1866 = vrot.slane %v1841, %v1865
        %v1868 = vadd.f32 %v1861, %v1866
        %s1869 = scalar_lea.vmem %s7, 32
        %v1870 = vld [vmem:[%s1869] sm:$0xff]
        %v1871 = vld [vmem:[%s1869 + $0x8] sm:$0xff]
        %v1872 = vld [vmem:[%s1869 + $0x10] sm:$0xff]
        %v1873 = vld [vmem:[%s1869 + $0x18] sm:$0xff]
        %s1874 = scalar_lea.vmem %s8, 1
        %v1875 = vld [vmem:[%s1874] sm:$0x1]
        %v1877 = vlaneseq
        %v1878 = vshrl.u32 %v1877, 7
        %v1879 = vsub.s32 0, %v1878
        %v1880 = vrot.slane %v1875, %v1879
        %v1883 = vsel %vm757, %v1868, 0
        %1885 = vmatprep.subr.mxu0 0.0
        %1886 = vmatpush1.msra.mxu0 0.0
        %1887 = vmatprep.subr.mxu0 0.0
        %1888 = vmatpush1.msra.mxu0 0.0
        %1889 = vmatprep.subr.mxu0 0.0
        %1890 = vmatpush1.msra.mxu0 0.0
        %1891 = vmatprep.subr.mxu0 0.0
        %1892 = vmatpush1.msra.mxu0 0.0
        %1893 = vmatprep.subr.mxu0 0.0
        %1894 = vmatpush1.msra.mxu0 0.0
        %1895 = vmatprep.subr.mxu0 0.0
        %1896 = vmatpush1.msra.mxu0 0.0
        %1897 = vmatprep.subr.mxu0 0.0
        %1898 = vmatpush1.msra.mxu0 0.0
        %1899 = vmatprep.subr.mxu0 0.0
        %1900 = vmatpush1.msra.mxu0 0.0
        %1901 = vmatprep.subr.mxu0 0.0
        %1902 = vmatpush1.msra.mxu0 0.0
        %1903 = vmatprep.subr.mxu0 0.0
        %1904 = vmatpush1.msra.mxu0 0.0
        %1905 = vmatprep.subr.mxu0 0.0
        %1906 = vmatpush1.msra.mxu0 0.0
        %1907 = vmatprep.subr.mxu0 0.0
        %1908 = vmatpush1.msra.mxu0 0.0
        %1909 = vmatprep.subr.mxu0 0.0
        %1910 = vmatpush1.msra.mxu0 %v1873
        %1911 = vmatprep.subr.mxu0 0.0
        %1912 = vmatpush1.msra.mxu0 %v1872
        %1913 = vmatprep.subr.mxu0 0.0
        %1914 = vmatpush1.msra.mxu0 %v1871
        %1915 = vmatprep.subr.mxu0 0.0
        %1916 = vmatpush1.msra.mxu0 %v1870
        %1917 = vmatprep.subr.mxu0 0.0
        %1918 = vmatpush2.msra.mxu0 0.0
        %1919 = vmatprep.subr.mxu0 0.0
        %1920 = vmatpush2.msra.mxu0 0.0
        %1921 = vmatprep.subr.mxu0 0.0
        %1922 = vmatpush2.msra.mxu0 0.0
        %1923 = vmatprep.subr.mxu0 0.0
        %1924 = vmatpush2.msra.mxu0 0.0
        %1925 = vmatprep.subr.mxu0 0.0
        %1926 = vmatpush2.msra.mxu0 0.0
        %1927 = vmatprep.subr.mxu0 0.0
        %1928 = vmatpush2.msra.mxu0 0.0
        %1929 = vmatprep.subr.mxu0 0.0
        %1930 = vmatpush2.msra.mxu0 0.0
        %1931 = vmatprep.subr.mxu0 0.0
        %1932 = vmatpush2.msra.mxu0 0.0
        %1933 = vmatprep.subr.mxu0 0.0
        %1934 = vmatpush2.msra.mxu0 0.0
        %1935 = vmatprep.subr.mxu0 0.0
        %1936 = vmatpush2.msra.mxu0 0.0
        %1937 = vmatprep.subr.mxu0 0.0
        %1938 = vmatpush2.msra.mxu0 0.0
        %1939 = vmatprep.subr.mxu0 0.0
        %1940 = vmatpush2.msra.mxu0 0.0
        %1941 = vmatprep.subr.mxu0 0.0
        %1942 = vmatpush2.msra.mxu0 0.0
        %1943 = vmatprep.subr.mxu0 0.0
        %1944 = vmatpush2.msra.mxu0 0.0
        %1945 = vmatprep.subr.mxu0 0.0
        %1946 = vmatpush2.msra.mxu0 0.0
        %1947 = vmatprep.subr.mxu0 0.0
        %1948 = vmatpush2.msra.mxu0 0.0
        %1949 = vmatprep.mubr.f32.mxu0 0.0
        %1950 = vmatmul.mubr.f32.gmra.mxu0 %v1883
        %v1951 = vpop.f32.mrf.mxu0
        %v1952 = vadd.f32 %v1880, %v1951
        %v1953 = vpop.f32.mrf.mxu0
        %1954 = vdwg.mxu0
        %v1955 = vmul.f32 %v1952, 0.35355338
        %1957 = vrot.lane.b32.xlu0 %v1952, 96
        %v1958 = vpop.permute.xlu0 %1957
        %v1960 = vsel %vm835, %v1955, 0
        %v1962 = vsel %vm835, %v1958, 0
        %1964 = vmatprep.subr.mxu0 0.0
        %1965 = vmatpush1.xpose.msra.mxu0 0.0
        %1966 = vmatprep.subr.mxu0 0.0
        %1967 = vmatpush1.xpose.msra.mxu0 0.0
        %1968 = vmatprep.subr.mxu0 0.0
        %1969 = vmatpush1.xpose.msra.mxu0 0.0
        %1970 = vmatprep.subr.mxu0 0.0
        %1971 = vmatpush1.xpose.msra.mxu0 0.0
        %1972 = vmatprep.subr.mxu0 0.0
        %1973 = vmatpush1.xpose.msra.mxu0 0.0
        %1974 = vmatprep.subr.mxu0 0.0
        %1975 = vmatpush1.xpose.msra.mxu0 0.0
        %1976 = vmatprep.subr.mxu0 0.0
        %1977 = vmatpush1.xpose.msra.mxu0 0.0
        %1978 = vmatprep.subr.mxu0 0.0
        %1979 = vmatpush1.xpose.msra.mxu0 0.0
        %1980 = vmatprep.subr.mxu0 0.0
        %1981 = vmatpush1.xpose.msra.mxu0 0.0
        %1982 = vmatprep.subr.mxu0 0.0
        %1983 = vmatpush1.xpose.msra.mxu0 0.0
        %1984 = vmatprep.subr.mxu0 0.0
        %1985 = vmatpush1.xpose.msra.mxu0 0.0
        %1986 = vmatprep.subr.mxu0 0.0
        %1987 = vmatpush1.xpose.msra.mxu0 0.0
        %1988 = vmatprep.subr.mxu0 0.0
        %1989 = vmatpush1.xpose.msra.mxu0 0.0
        %1990 = vmatprep.subr.mxu0 0.0
        %1991 = vmatpush1.xpose.msra.mxu0 0.0
        %1992 = vmatprep.subr.mxu0 0.0
        %1993 = vmatpush1.xpose.msra.mxu0 0.0
        %1994 = vmatprep.subr.mxu0 0.0
        %1995 = vmatpush1.xpose.msra.mxu0 %v1962
        %1996 = vmatprep.subr.mxu0 0.0
        %1997 = vmatpush2.xpose.msra.mxu0 0.0
        %1998 = vmatprep.subr.mxu0 0.0
        %1999 = vmatpush2.xpose.msra.mxu0 0.0
        %2000 = vmatprep.subr.mxu0 0.0
        %2001 = vmatpush2.xpose.msra.mxu0 0.0
        %2002 = vmatprep.subr.mxu0 0.0
        %2003 = vmatpush2.xpose.msra.mxu0 0.0
        %2004 = vmatprep.subr.mxu0 0.0
        %2005 = vmatpush2.xpose.msra.mxu0 0.0
        %2006 = vmatprep.subr.mxu0 0.0
        %2007 = vmatpush2.xpose.msra.mxu0 0.0
        %2008 = vmatprep.subr.mxu0 0.0
        %2009 = vmatpush2.xpose.msra.mxu0 0.0
        %2010 = vmatprep.subr.mxu0 0.0
        %2011 = vmatpush2.xpose.msra.mxu0 0.0
        %2012 = vmatprep.subr.mxu0 0.0
        %2013 = vmatpush2.xpose.msra.mxu0 0.0
        %2014 = vmatprep.subr.mxu0 0.0
        %2015 = vmatpush2.xpose.msra.mxu0 0.0
        %2016 = vmatprep.subr.mxu0 0.0
        %2017 = vmatpush2.xpose.msra.mxu0 0.0
        %2018 = vmatprep.subr.mxu0 0.0
        %2019 = vmatpush2.xpose.msra.mxu0 0.0
        %2020 = vmatprep.subr.mxu0 0.0
        %2021 = vmatpush2.xpose.msra.mxu0 0.0
        %2022 = vmatprep.subr.mxu0 0.0
        %2023 = vmatpush2.xpose.msra.mxu0 0.0
        %2024 = vmatprep.subr.mxu0 0.0
        %2025 = vmatpush2.xpose.msra.mxu0 0.0
        %2026 = vmatprep.subr.mxu0 0.0
        %2027 = vmatpush2.xpose.msra.mxu0 0.0
        %2028 = vmatprep.mubr.f32.mxu0 0.0
        %2029 = vmatmul.mubr.f32.gmra.mxu0 %v1960
        %v2030 = vpop.f32.mrf.mxu0
        %v2031 = vadd.f32 0.0, %v2030
        %v2032 = vpop.f32.mrf.mxu0
        %2033 = vdwg.mxu0
        %v2034 = vsel %vm911, %v2031, -inf
        %2035 = vmax.xlane.f32.xlu0 %v2034
        %v2036 = vpop.xlane.xlu0 %2035
        %v2037 = vsub.f32 %v2031, %v2036
        %v2038 = vmul.f32 %v2037, 1.442695
        %v2039 = vpow.pop %v2038
        %v2040 = vsel %vm911, %v2039, 0.0
        %2041 = vadd.xlane.f32.xlu0 %v2040
        %v2042 = vpop.xlane.xlu0 %2041
        %v2043 = vrcp.pop %v2042
        %v2044 = vmul.f32 %v2039, %v2043
        %2045 = vrot.lane.b32.xlu0 %v1952, 64
        %v2046 = vpop.permute.xlu0 %2045
        %v2048 = vsel %vm925, %v2044, 0
        %v2050 = vsel %vm929, %v2046, 0
        %2052 = vmatprep.subr.mxu0 0.0
        %2053 = vmatpush1.msra.mxu0 0.0
        %2054 = vmatprep.subr.mxu0 0.0
        %2055 = vmatpush1.msra.mxu0 0.0
        %2056 = vmatprep.subr.mxu0 0.0
        %2057 = vmatpush1.msra.mxu0 0.0
        %2058 = vmatprep.subr.mxu0 0.0
        %2059 = vmatpush1.msra.mxu0 0.0
        %2060 = vmatprep.subr.mxu0 0.0
        %2061 = vmatpush1.msra.mxu0 0.0
        %2062 = vmatprep.subr.mxu0 0.0
        %2063 = vmatpush1.msra.mxu0 0.0
        %2064 = vmatprep.subr.mxu0 0.0
        %2065 = vmatpush1.msra.mxu0 0.0
        %2066 = vmatprep.subr.mxu0 0.0
        %2067 = vmatpush1.msra.mxu0 0.0
        %2068 = vmatprep.subr.mxu0 0.0
        %2069 = vmatpush1.msra.mxu0 0.0
        %2070 = vmatprep.subr.mxu0 0.0
        %2071 = vmatpush1.msra.mxu0 0.0
        %2072 = vmatprep.subr.mxu0 0.0
        %2073 = vmatpush1.msra.mxu0 0.0
        %2074 = vmatprep.subr.mxu0 0.0
        %2075 = vmatpush1.msra.mxu0 0.0
        %2076 = vmatprep.subr.mxu0 0.0
        %2077 = vmatpush1.msra.mxu0 0.0
        %2078 = vmatprep.subr.mxu0 0.0
        %2079 = vmatpush1.msra.mxu0 0.0
        %2080 = vmatprep.subr.mxu0 0.0
        %2081 = vmatpush1.msra.mxu0 0.0
        %2082 = vmatprep.subr.mxu0 0.0
        %2083 = vmatpush1.msra.mxu0 %v2050
        %2084 = vmatprep.subr.mxu0 0.0
        %2085 = vmatpush2.msra.mxu0 0.0
        %2086 = vmatprep.subr.mxu0 0.0
        %2087 = vmatpush2.msra.mxu0 0.0
        %2088 = vmatprep.subr.mxu0 0.0
        %2089 = vmatpush2.msra.mxu0 0.0
        %2090 = vmatprep.subr.mxu0 0.0
        %2091 = vmatpush2.msra.mxu0 0.0
        %2092 = vmatprep.subr.mxu0 0.0
        %2093 = vmatpush2.msra.mxu0 0.0
        %2094 = vmatprep.subr.mxu0 0.0
        %2095 = vmatpush2.msra.mxu0 0.0
        %2096 = vmatprep.subr.mxu0 0.0
        %2097 = vmatpush2.msra.mxu0 0.0
        %2098 = vmatprep.subr.mxu0 0.0
        %2099 = vmatpush2.msra.mxu0 0.0
        %2100 = vmatprep.subr.mxu0 0.0
        %2101 = vmatpush2.msra.mxu0 0.0
        %2102 = vmatprep.subr.mxu0 0.0
        %2103 = vmatpush2.msra.mxu0 0.0
        %2104 = vmatprep.subr.mxu0 0.0
        %2105 = vmatpush2.msra.mxu0 0.0
        %2106 = vmatprep.subr.mxu0 0.0
        %2107 = vmatpush2.msra.mxu0 0.0
        %2108 = vmatprep.subr.mxu0 0.0
        %2109 = vmatpush2.msra.mxu0 0.0
        %2110 = vmatprep.subr.mxu0 0.0
        %2111 = vmatpush2.msra.mxu0 0.0
        %2112 = vmatprep.subr.mxu0 0.0
        %2113 = vmatpush2.msra.mxu0 0.0
        %2114 = vmatprep.subr.mxu0 0.0
        %2115 = vmatpush2.msra.mxu0 0.0
        %2116 = vmatprep.mubr.f32.mxu0 0.0
        %2117 = vmatmul.mubr.f32.gmra.mxu0 %v2048
        %v2118 = vpop.f32.mrf.mxu0
        %v2119 = vadd.f32 0.0, %v2118
        %v2120 = vpop.f32.mrf.mxu0
        %2121 = vdwg.mxu0
        %2122 = vrot.lane.b32.xlu0 %v1955, 120
        %v2123 = vpop.permute.xlu0 %2122
        %2124 = vrot.lane.b32.xlu0 %v1952, 88
        %v2125 = vpop.permute.xlu0 %2124
        %v2126 = vsel %vm835, %v2123, 0
        %v2128 = vsel %vm835, %v2125, 0
        %2130 = vmatprep.subr.mxu0 0.0
        %2131 = vmatpush1.xpose.msra.mxu0 0.0
        %2132 = vmatprep.subr.mxu0 0.0
        %2133 = vmatpush1.xpose.msra.mxu0 0.0
        %2134 = vmatprep.subr.mxu0 0.0
        %2135 = vmatpush1.xpose.msra.mxu0 0.0
        %2136 = vmatprep.subr.mxu0 0.0
        %2137 = vmatpush1.xpose.msra.mxu0 0.0
        %2138 = vmatprep.subr.mxu0 0.0
        %2139 = vmatpush1.xpose.msra.mxu0 0.0
        %2140 = vmatprep.subr.mxu0 0.0
        %2141 = vmatpush1.xpose.msra.mxu0 0.0
        %2142 = vmatprep.subr.mxu0 0.0
        %2143 = vmatpush1.xpose.msra.mxu0 0.0
        %2144 = vmatprep.subr.mxu0 0.0
        %2145 = vmatpush1.xpose.msra.mxu0 0.0
        %2146 = vmatprep.subr.mxu0 0.0
        %2147 = vmatpush1.xpose.msra.mxu0 0.0
        %2148 = vmatprep.subr.mxu0 0.0
        %2149 = vmatpush1.xpose.msra.mxu0 0.0
        %2150 = vmatprep.subr.mxu0 0.0
        %2151 = vmatpush1.xpose.msra.mxu0 0.0
        %2152 = vmatprep.subr.mxu0 0.0
        %2153 = vmatpush1.xpose.msra.mxu0 0.0
        %2154 = vmatprep.subr.mxu0 0.0
        %2155 = vmatpush1.xpose.msra.mxu0 0.0
        %2156 = vmatprep.subr.mxu0 0.0
        %2157 = vmatpush1.xpose.msra.mxu0 0.0
        %2158 = vmatprep.subr.mxu0 0.0
        %2159 = vmatpush1.xpose.msra.mxu0 0.0
        %2160 = vmatprep.subr.mxu0 0.0
        %2161 = vmatpush1.xpose.msra.mxu0 %v2128
        %2162 = vmatprep.subr.mxu0 0.0
        %2163 = vmatpush2.xpose.msra.mxu0 0.0
        %2164 = vmatprep.subr.mxu0 0.0
        %2165 = vmatpush2.xpose.msra.mxu0 0.0
        %2166 = vmatprep.subr.mxu0 0.0
        %2167 = vmatpush2.xpose.msra.mxu0 0.0
        %2168 = vmatprep.subr.mxu0 0.0
        %2169 = vmatpush2.xpose.msra.mxu0 0.0
        %2170 = vmatprep.subr.mxu0 0.0
        %2171 = vmatpush2.xpose.msra.mxu0 0.0
        %2172 = vmatprep.subr.mxu0 0.0
        %2173 = vmatpush2.xpose.msra.mxu0 0.0
        %2174 = vmatprep.subr.mxu0 0.0
        %2175 = vmatpush2.xpose.msra.mxu0 0.0
        %2176 = vmatprep.subr.mxu0 0.0
        %2177 = vmatpush2.xpose.msra.mxu0 0.0
        %2178 = vmatprep.subr.mxu0 0.0
        %2179 = vmatpush2.xpose.msra.mxu0 0.0
        %2180 = vmatprep.subr.mxu0 0.0
        %2181 = vmatpush2.xpose.msra.mxu0 0.0
        %2182 = vmatprep.subr.mxu0 0.0
        %2183 = vmatpush2.xpose.msra.mxu0 0.0
        %2184 = vmatprep.subr.mxu0 0.0
        %2185 = vmatpush2.xpose.msra.mxu0 0.0
        %2186 = vmatprep.subr.mxu0 0.0
        %2187 = vmatpush2.xpose.msra.mxu0 0.0
        %2188 = vmatprep.subr.mxu0 0.0
        %2189 = vmatpush2.xpose.msra.mxu0 0.0
        %2190 = vmatprep.subr.mxu0 0.0
        %2191 = vmatpush2.xpose.msra.mxu0 0.0
        %2192 = vmatprep.subr.mxu0 0.0
        %2193 = vmatpush2.xpose.msra.mxu0 0.0
        %2194 = vmatprep.mubr.f32.mxu0 0.0
        %2195 = vmatmul.mubr.f32.gmra.mxu0 %v2126
        %v2196 = vpop.f32.mrf.mxu0
        %v2197 = vadd.f32 0.0, %v2196
        %v2198 = vpop.f32.mrf.mxu0
        %2199 = vdwg.mxu0
        %v2200 = vsel %vm911, %v2197, -inf
        %2201 = vmax.xlane.f32.xlu0 %v2200
        %v2202 = vpop.xlane.xlu0 %2201
        %v2203 = vsub.f32 %v2197, %v2202
        %v2204 = vmul.f32 %v2203, 1.442695
        %v2205 = vpow.pop %v2204
        %v2206 = vsel %vm911, %v2205, 0.0
        %2207 = vadd.xlane.f32.xlu0 %v2206
        %v2208 = vpop.xlane.xlu0 %2207
        %v2209 = vrcp.pop %v2208
        %v2210 = vmul.f32 %v2205, %v2209
        %2211 = vrot.lane.b32.xlu0 %v1952, 56
        %v2212 = vpop.permute.xlu0 %2211
        %v2214 = vsel %vm925, %v2210, 0
        %v2216 = vsel %vm929, %v2212, 0
        %2218 = vmatprep.subr.mxu0 0.0
        %2219 = vmatpush1.msra.mxu0 0.0
        %2220 = vmatprep.subr.mxu0 0.0
        %2221 = vmatpush1.msra.mxu0 0.0
        %2222 = vmatprep.subr.mxu0 0.0
        %2223 = vmatpush1.msra.mxu0 0.0
        %2224 = vmatprep.subr.mxu0 0.0
        %2225 = vmatpush1.msra.mxu0 0.0
        %2226 = vmatprep.subr.mxu0 0.0
        %2227 = vmatpush1.msra.mxu0 0.0
        %2228 = vmatprep.subr.mxu0 0.0
        %2229 = vmatpush1.msra.mxu0 0.0
        %2230 = vmatprep.subr.mxu0 0.0
        %2231 = vmatpush1.msra.mxu0 0.0
        %2232 = vmatprep.subr.mxu0 0.0
        %2233 = vmatpush1.msra.mxu0 0.0
        %2234 = vmatprep.subr.mxu0 0.0
        %2235 = vmatpush1.msra.mxu0 0.0
        %2236 = vmatprep.subr.mxu0 0.0
        %2237 = vmatpush1.msra.mxu0 0.0
        %2238 = vmatprep.subr.mxu0 0.0
        %2239 = vmatpush1.msra.mxu0 0.0
        %2240 = vmatprep.subr.mxu0 0.0
        %2241 = vmatpush1.msra.mxu0 0.0
        %2242 = vmatprep.subr.mxu0 0.0
        %2243 = vmatpush1.msra.mxu0 0.0
        %2244 = vmatprep.subr.mxu0 0.0
        %2245 = vmatpush1.msra.mxu0 0.0
        %2246 = vmatprep.subr.mxu0 0.0
        %2247 = vmatpush1.msra.mxu0 0.0
        %2248 = vmatprep.subr.mxu0 0.0
        %2249 = vmatpush1.msra.mxu0 %v2216
        %2250 = vmatprep.subr.mxu0 0.0
        %2251 = vmatpush2.msra.mxu0 0.0
        %2252 = vmatprep.subr.mxu0 0.0
        %2253 = vmatpush2.msra.mxu0 0.0
        %2254 = vmatprep.subr.mxu0 0.0
        %2255 = vmatpush2.msra.mxu0 0.0
        %2256 = vmatprep.subr.mxu0 0.0
        %2257 = vmatpush2.msra.mxu0 0.0
        %2258 = vmatprep.subr.mxu0 0.0
        %2259 = vmatpush2.msra.mxu0 0.0
        %2260 = vmatprep.subr.mxu0 0.0
        %2261 = vmatpush2.msra.mxu0 0.0
        %2262 = vmatprep.subr.mxu0 0.0
        %2263 = vmatpush2.msra.mxu0 0.0
        %2264 = vmatprep.subr.mxu0 0.0
        %2265 = vmatpush2.msra.mxu0 0.0
        %2266 = vmatprep.subr.mxu0 0.0
        %2267 = vmatpush2.msra.mxu0 0.0
        %2268 = vmatprep.subr.mxu0 0.0
        %2269 = vmatpush2.msra.mxu0 0.0
        %2270 = vmatprep.subr.mxu0 0.0
        %2271 = vmatpush2.msra.mxu0 0.0
        %2272 = vmatprep.subr.mxu0 0.0
        %2273 = vmatpush2.msra.mxu0 0.0
        %2274 = vmatprep.subr.mxu0 0.0
        %2275 = vmatpush2.msra.mxu0 0.0
        %2276 = vmatprep.subr.mxu0 0.0
        %2277 = vmatpush2.msra.mxu0 0.0
        %2278 = vmatprep.subr.mxu0 0.0
        %2279 = vmatpush2.msra.mxu0 0.0
        %2280 = vmatprep.subr.mxu0 0.0
        %2281 = vmatpush2.msra.mxu0 0.0
        %2282 = vmatprep.mubr.f32.mxu0 0.0
        %2283 = vmatmul.mubr.f32.gmra.mxu0 %v2214
        %v2284 = vpop.f32.mrf.mxu0
        %v2285 = vadd.f32 0.0, %v2284
        %v2286 = vpop.f32.mrf.mxu0
        %2287 = vdwg.mxu0
        %2288 = vrot.lane.b32.xlu0 %v1955, 112
        %v2289 = vpop.permute.xlu0 %2288
        %2290 = vrot.lane.b32.xlu0 %v1952, 80
        %v2291 = vpop.permute.xlu0 %2290
        %v2292 = vsel %vm835, %v2289, 0
        %v2294 = vsel %vm835, %v2291, 0
        %2296 = vmatprep.subr.mxu0 0.0
        %2297 = vmatpush1.xpose.msra.mxu0 0.0
        %2298 = vmatprep.subr.mxu0 0.0
        %2299 = vmatpush1.xpose.msra.mxu0 0.0
        %2300 = vmatprep.subr.mxu0 0.0
        %2301 = vmatpush1.xpose.msra.mxu0 0.0
        %2302 = vmatprep.subr.mxu0 0.0
        %2303 = vmatpush1.xpose.msra.mxu0 0.0
        %2304 = vmatprep.subr.mxu0 0.0
        %2305 = vmatpush1.xpose.msra.mxu0 0.0
        %2306 = vmatprep.subr.mxu0 0.0
        %2307 = vmatpush1.xpose.msra.mxu0 0.0
        %2308 = vmatprep.subr.mxu0 0.0
        %2309 = vmatpush1.xpose.msra.mxu0 0.0
        %2310 = vmatprep.subr.mxu0 0.0
        %2311 = vmatpush1.xpose.msra.mxu0 0.0
        %2312 = vmatprep.subr.mxu0 0.0
        %2313 = vmatpush1.xpose.msra.mxu0 0.0
        %2314 = vmatprep.subr.mxu0 0.0
        %2315 = vmatpush1.xpose.msra.mxu0 0.0
        %2316 = vmatprep.subr.mxu0 0.0
        %2317 = vmatpush1.xpose.msra.mxu0 0.0
        %2318 = vmatprep.subr.mxu0 0.0
        %2319 = vmatpush1.xpose.msra.mxu0 0.0
        %2320 = vmatprep.subr.mxu0 0.0
        %2321 = vmatpush1.xpose.msra.mxu0 0.0
        %2322 = vmatprep.subr.mxu0 0.0
        %2323 = vmatpush1.xpose.msra.mxu0 0.0
        %2324 = vmatprep.subr.mxu0 0.0
        %2325 = vmatpush1.xpose.msra.mxu0 0.0
        %2326 = vmatprep.subr.mxu0 0.0
        %2327 = vmatpush1.xpose.msra.mxu0 %v2294
        %2328 = vmatprep.subr.mxu0 0.0
        %2329 = vmatpush2.xpose.msra.mxu0 0.0
        %2330 = vmatprep.subr.mxu0 0.0
        %2331 = vmatpush2.xpose.msra.mxu0 0.0
        %2332 = vmatprep.subr.mxu0 0.0
        %2333 = vmatpush2.xpose.msra.mxu0 0.0
        %2334 = vmatprep.subr.mxu0 0.0
        %2335 = vmatpush2.xpose.msra.mxu0 0.0
        %2336 = vmatprep.subr.mxu0 0.0
        %2337 = vmatpush2.xpose.msra.mxu0 0.0
        %2338 = vmatprep.subr.mxu0 0.0
        %2339 = vmatpush2.xpose.msra.mxu0 0.0
        %2340 = vmatprep.subr.mxu0 0.0
        %2341 = vmatpush2.xpose.msra.mxu0 0.0
        %2342 = vmatprep.subr.mxu0 0.0
        %2343 = vmatpush2.xpose.msra.mxu0 0.0
        %2344 = vmatprep.subr.mxu0 0.0
        %2345 = vmatpush2.xpose.msra.mxu0 0.0
        %2346 = vmatprep.subr.mxu0 0.0
        %2347 = vmatpush2.xpose.msra.mxu0 0.0
        %2348 = vmatprep.subr.mxu0 0.0
        %2349 = vmatpush2.xpose.msra.mxu0 0.0
        %2350 = vmatprep.subr.mxu0 0.0
        %2351 = vmatpush2.xpose.msra.mxu0 0.0
        %2352 = vmatprep.subr.mxu0 0.0
        %2353 = vmatpush2.xpose.msra.mxu0 0.0
        %2354 = vmatprep.subr.mxu0 0.0
        %2355 = vmatpush2.xpose.msra.mxu0 0.0
        %2356 = vmatprep.subr.mxu0 0.0
        %2357 = vmatpush2.xpose.msra.mxu0 0.0
        %2358 = vmatprep.subr.mxu0 0.0
        %2359 = vmatpush2.xpose.msra.mxu0 0.0
        %2360 = vmatprep.mubr.f32.mxu0 0.0
        %2361 = vmatmul.mubr.f32.gmra.mxu0 %v2292
        %v2362 = vpop.f32.mrf.mxu0
        %v2363 = vadd.f32 0.0, %v2362
        %v2364 = vpop.f32.mrf.mxu0
        %2365 = vdwg.mxu0
        %v2366 = vsel %vm911, %v2363, -inf
        %2367 = vmax.xlane.f32.xlu0 %v2366
        %v2368 = vpop.xlane.xlu0 %2367
        %v2369 = vsub.f32 %v2363, %v2368
        %v2370 = vmul.f32 %v2369, 1.442695
        %v2371 = vpow.pop %v2370
        %v2372 = vsel %vm911, %v2371, 0.0
        %2373 = vadd.xlane.f32.xlu0 %v2372
        %v2374 = vpop.xlane.xlu0 %2373
        %v2375 = vrcp.pop %v2374
        %v2376 = vmul.f32 %v2371, %v2375
        %2377 = vrot.lane.b32.xlu0 %v1952, 48
        %v2378 = vpop.permute.xlu0 %2377
        %v2380 = vsel %vm925, %v2376, 0
        %v2382 = vsel %vm929, %v2378, 0
        %2384 = vmatprep.subr.mxu0 0.0
        %2385 = vmatpush1.msra.mxu0 0.0
        %2386 = vmatprep.subr.mxu0 0.0
        %2387 = vmatpush1.msra.mxu0 0.0
        %2388 = vmatprep.subr.mxu0 0.0
        %2389 = vmatpush1.msra.mxu0 0.0
        %2390 = vmatprep.subr.mxu0 0.0
        %2391 = vmatpush1.msra.mxu0 0.0
        %2392 = vmatprep.subr.mxu0 0.0
        %2393 = vmatpush1.msra.mxu0 0.0
        %2394 = vmatprep.subr.mxu0 0.0
        %2395 = vmatpush1.msra.mxu0 0.0
        %2396 = vmatprep.subr.mxu0 0.0
        %2397 = vmatpush1.msra.mxu0 0.0
        %2398 = vmatprep.subr.mxu0 0.0
        %2399 = vmatpush1.msra.mxu0 0.0
        %2400 = vmatprep.subr.mxu0 0.0
        %2401 = vmatpush1.msra.mxu0 0.0
        %2402 = vmatprep.subr.mxu0 0.0
        %2403 = vmatpush1.msra.mxu0 0.0
        %2404 = vmatprep.subr.mxu0 0.0
        %2405 = vmatpush1.msra.mxu0 0.0
        %2406 = vmatprep.subr.mxu0 0.0
        %2407 = vmatpush1.msra.mxu0 0.0
        %2408 = vmatprep.subr.mxu0 0.0
        %2409 = vmatpush1.msra.mxu0 0.0
        %2410 = vmatprep.subr.mxu0 0.0
        %2411 = vmatpush1.msra.mxu0 0.0
        %2412 = vmatprep.subr.mxu0 0.0
        %2413 = vmatpush1.msra.mxu0 0.0
        %2414 = vmatprep.subr.mxu0 0.0
        %2415 = vmatpush1.msra.mxu0 %v2382
        %2416 = vmatprep.subr.mxu0 0.0
        %2417 = vmatpush2.msra.mxu0 0.0
        %2418 = vmatprep.subr.mxu0 0.0
        %2419 = vmatpush2.msra.mxu0 0.0
        %2420 = vmatprep.subr.mxu0 0.0
        %2421 = vmatpush2.msra.mxu0 0.0
        %2422 = vmatprep.subr.mxu0 0.0
        %2423 = vmatpush2.msra.mxu0 0.0
        %2424 = vmatprep.subr.mxu0 0.0
        %2425 = vmatpush2.msra.mxu0 0.0
        %2426 = vmatprep.subr.mxu0 0.0
        %2427 = vmatpush2.msra.mxu0 0.0
        %2428 = vmatprep.subr.mxu0 0.0
        %2429 = vmatpush2.msra.mxu0 0.0
        %2430 = vmatprep.subr.mxu0 0.0
        %2431 = vmatpush2.msra.mxu0 0.0
        %2432 = vmatprep.subr.mxu0 0.0
        %2433 = vmatpush2.msra.mxu0 0.0
        %2434 = vmatprep.subr.mxu0 0.0
        %2435 = vmatpush2.msra.mxu0 0.0
        %2436 = vmatprep.subr.mxu0 0.0
        %2437 = vmatpush2.msra.mxu0 0.0
        %2438 = vmatprep.subr.mxu0 0.0
        %2439 = vmatpush2.msra.mxu0 0.0
        %2440 = vmatprep.subr.mxu0 0.0
        %2441 = vmatpush2.msra.mxu0 0.0
        %2442 = vmatprep.subr.mxu0 0.0
        %2443 = vmatpush2.msra.mxu0 0.0
        %2444 = vmatprep.subr.mxu0 0.0
        %2445 = vmatpush2.msra.mxu0 0.0
        %2446 = vmatprep.subr.mxu0 0.0
        %2447 = vmatpush2.msra.mxu0 0.0
        %2448 = vmatprep.mubr.f32.mxu0 0.0
        %2449 = vmatmul.mubr.f32.gmra.mxu0 %v2380
        %v2450 = vpop.f32.mrf.mxu0
        %v2451 = vadd.f32 0.0, %v2450
        %v2452 = vpop.f32.mrf.mxu0
        %2453 = vdwg.mxu0
        %2454 = vrot.lane.b32.xlu0 %v1955, 104
        %v2455 = vpop.permute.xlu0 %2454
        %2456 = vrot.lane.b32.xlu0 %v1952, 72
        %v2457 = vpop.permute.xlu0 %2456
        %v2458 = vsel %vm835, %v2455, 0
        %v2460 = vsel %vm835, %v2457, 0
        %2462 = vmatprep.subr.mxu0 0.0
        %2463 = vmatpush1.xpose.msra.mxu0 0.0
        %2464 = vmatprep.subr.mxu0 0.0
        %2465 = vmatpush1.xpose.msra.mxu0 0.0
        %2466 = vmatprep.subr.mxu0 0.0
        %2467 = vmatpush1.xpose.msra.mxu0 0.0
        %2468 = vmatprep.subr.mxu0 0.0
        %2469 = vmatpush1.xpose.msra.mxu0 0.0
        %2470 = vmatprep.subr.mxu0 0.0
        %2471 = vmatpush1.xpose.msra.mxu0 0.0
        %2472 = vmatprep.subr.mxu0 0.0
        %2473 = vmatpush1.xpose.msra.mxu0 0.0
        %2474 = vmatprep.subr.mxu0 0.0
        %2475 = vmatpush1.xpose.msra.mxu0 0.0
        %2476 = vmatprep.subr.mxu0 0.0
        %2477 = vmatpush1.xpose.msra.mxu0 0.0
        %2478 = vmatprep.subr.mxu0 0.0
        %2479 = vmatpush1.xpose.msra.mxu0 0.0
        %2480 = vmatprep.subr.mxu0 0.0
        %2481 = vmatpush1.xpose.msra.mxu0 0.0
        %2482 = vmatprep.subr.mxu0 0.0
        %2483 = vmatpush1.xpose.msra.mxu0 0.0
        %2484 = vmatprep.subr.mxu0 0.0
        %2485 = vmatpush1.xpose.msra.mxu0 0.0
        %2486 = vmatprep.subr.mxu0 0.0
        %2487 = vmatpush1.xpose.msra.mxu0 0.0
        %2488 = vmatprep.subr.mxu0 0.0
        %2489 = vmatpush1.xpose.msra.mxu0 0.0
        %2490 = vmatprep.subr.mxu0 0.0
        %2491 = vmatpush1.xpose.msra.mxu0 0.0
        %2492 = vmatprep.subr.mxu0 0.0
        %2493 = vmatpush1.xpose.msra.mxu0 %v2460
        %2494 = vmatprep.subr.mxu0 0.0
        %2495 = vmatpush2.xpose.msra.mxu0 0.0
        %2496 = vmatprep.subr.mxu0 0.0
        %2497 = vmatpush2.xpose.msra.mxu0 0.0
        %2498 = vmatprep.subr.mxu0 0.0
        %2499 = vmatpush2.xpose.msra.mxu0 0.0
        %2500 = vmatprep.subr.mxu0 0.0
        %2501 = vmatpush2.xpose.msra.mxu0 0.0
        %2502 = vmatprep.subr.mxu0 0.0
        %2503 = vmatpush2.xpose.msra.mxu0 0.0
        %2504 = vmatprep.subr.mxu0 0.0
        %2505 = vmatpush2.xpose.msra.mxu0 0.0
        %2506 = vmatprep.subr.mxu0 0.0
        %2507 = vmatpush2.xpose.msra.mxu0 0.0
        %2508 = vmatprep.subr.mxu0 0.0
        %2509 = vmatpush2.xpose.msra.mxu0 0.0
        %2510 = vmatprep.subr.mxu0 0.0
        %2511 = vmatpush2.xpose.msra.mxu0 0.0
        %2512 = vmatprep.subr.mxu0 0.0
        %2513 = vmatpush2.xpose.msra.mxu0 0.0
        %2514 = vmatprep.subr.mxu0 0.0
        %2515 = vmatpush2.xpose.msra.mxu0 0.0
        %2516 = vmatprep.subr.mxu0 0.0
        %2517 = vmatpush2.xpose.msra.mxu0 0.0
        %2518 = vmatprep.subr.mxu0 0.0
        %2519 = vmatpush2.xpose.msra.mxu0 0.0
        %2520 = vmatprep.subr.mxu0 0.0
        %2521 = vmatpush2.xpose.msra.mxu0 0.0
        %2522 = vmatprep.subr.mxu0 0.0
        %2523 = vmatpush2.xpose.msra.mxu0 0.0
        %2524 = vmatprep.subr.mxu0 0.0
        %2525 = vmatpush2.xpose.msra.mxu0 0.0
        %2526 = vmatprep.mubr.f32.mxu0 0.0
        %2527 = vmatmul.mubr.f32.gmra.mxu0 %v2458
        %v2528 = vpop.f32.mrf.mxu0
        %v2529 = vadd.f32 0.0, %v2528
        %v2530 = vpop.f32.mrf.mxu0
        %2531 = vdwg.mxu0
        %v2532 = vsel %vm911, %v2529, -inf
        %2533 = vmax.xlane.f32.xlu0 %v2532
        %v2534 = vpop.xlane.xlu0 %2533
        %v2535 = vsub.f32 %v2529, %v2534
        %v2536 = vmul.f32 %v2535, 1.442695
        %v2537 = vpow.pop %v2536
        %v2538 = vsel %vm911, %v2537, 0.0
        %2539 = vadd.xlane.f32.xlu0 %v2538
        %v2540 = vpop.xlane.xlu0 %2539
        %v2541 = vrcp.pop %v2540
        %v2542 = vmul.f32 %v2537, %v2541
        %2543 = vrot.lane.b32.xlu0 %v1952, 40
        %v2544 = vpop.permute.xlu0 %2543
        %v2546 = vsel %vm925, %v2542, 0
        %v2548 = vsel %vm929, %v2544, 0
        %2550 = vmatprep.subr.mxu0 0.0
        %2551 = vmatpush1.msra.mxu0 0.0
        %2552 = vmatprep.subr.mxu0 0.0
        %2553 = vmatpush1.msra.mxu0 0.0
        %2554 = vmatprep.subr.mxu0 0.0
        %2555 = vmatpush1.msra.mxu0 0.0
        %2556 = vmatprep.subr.mxu0 0.0
        %2557 = vmatpush1.msra.mxu0 0.0
        %2558 = vmatprep.subr.mxu0 0.0
        %2559 = vmatpush1.msra.mxu0 0.0
        %2560 = vmatprep.subr.mxu0 0.0
        %2561 = vmatpush1.msra.mxu0 0.0
        %2562 = vmatprep.subr.mxu0 0.0
        %2563 = vmatpush1.msra.mxu0 0.0
        %2564 = vmatprep.subr.mxu0 0.0
        %2565 = vmatpush1.msra.mxu0 0.0
        %2566 = vmatprep.subr.mxu0 0.0
        %2567 = vmatpush1.msra.mxu0 0.0
        %2568 = vmatprep.subr.mxu0 0.0
        %2569 = vmatpush1.msra.mxu0 0.0
        %2570 = vmatprep.subr.mxu0 0.0
        %2571 = vmatpush1.msra.mxu0 0.0
        %2572 = vmatprep.subr.mxu0 0.0
        %2573 = vmatpush1.msra.mxu0 0.0
        %2574 = vmatprep.subr.mxu0 0.0
        %2575 = vmatpush1.msra.mxu0 0.0
        %2576 = vmatprep.subr.mxu0 0.0
        %2577 = vmatpush1.msra.mxu0 0.0
        %2578 = vmatprep.subr.mxu0 0.0
        %2579 = vmatpush1.msra.mxu0 0.0
        %2580 = vmatprep.subr.mxu0 0.0
        %2581 = vmatpush1.msra.mxu0 %v2548
        %2582 = vmatprep.subr.mxu0 0.0
        %2583 = vmatpush2.msra.mxu0 0.0
        %2584 = vmatprep.subr.mxu0 0.0
        %2585 = vmatpush2.msra.mxu0 0.0
        %2586 = vmatprep.subr.mxu0 0.0
        %2587 = vmatpush2.msra.mxu0 0.0
        %2588 = vmatprep.subr.mxu0 0.0
        %2589 = vmatpush2.msra.mxu0 0.0
        %2590 = vmatprep.subr.mxu0 0.0
        %2591 = vmatpush2.msra.mxu0 0.0
        %2592 = vmatprep.subr.mxu0 0.0
        %2593 = vmatpush2.msra.mxu0 0.0
        %2594 = vmatprep.subr.mxu0 0.0
        %2595 = vmatpush2.msra.mxu0 0.0
        %2596 = vmatprep.subr.mxu0 0.0
        %2597 = vmatpush2.msra.mxu0 0.0
        %2598 = vmatprep.subr.mxu0 0.0
        %2599 = vmatpush2.msra.mxu0 0.0
        %2600 = vmatprep.subr.mxu0 0.0
        %2601 = vmatpush2.msra.mxu0 0.0
        %2602 = vmatprep.subr.mxu0 0.0
        %2603 = vmatpush2.msra.mxu0 0.0
        %2604 = vmatprep.subr.mxu0 0.0
        %2605 = vmatpush2.msra.mxu0 0.0
        %2606 = vmatprep.subr.mxu0 0.0
        %2607 = vmatpush2.msra.mxu0 0.0
        %2608 = vmatprep.subr.mxu0 0.0
        %2609 = vmatpush2.msra.mxu0 0.0
        %2610 = vmatprep.subr.mxu0 0.0
        %2611 = vmatpush2.msra.mxu0 0.0
        %2612 = vmatprep.subr.mxu0 0.0
        %2613 = vmatpush2.msra.mxu0 0.0
        %2614 = vmatprep.mubr.f32.mxu0 0.0
        %2615 = vmatmul.mubr.f32.gmra.mxu0 %v2546
        %v2616 = vpop.f32.mrf.mxu0
        %v2617 = vadd.f32 0.0, %v2616
        %v2618 = vpop.f32.mrf.mxu0
        %2619 = vdwg.mxu0
        %2621 = vrot.lane.b32.xlu0 %v2285, 8
        %v2622 = vpop.permute.xlu0 %2621
        %2625 = vrot.lane.b32.xlu0 %v2451, 16
        %v2626 = vpop.permute.xlu0 %2625
        %2629 = vrot.lane.b32.xlu0 %v2617, 24
        %v2630 = vpop.permute.xlu0 %2629
        %v2632 = vsel %vm835, %v2119, %v2622
        %v2633 = vsel %vm1513, %v2632, %v2626
        %v2634 = vsel %vm1515, %v2633, %v2630
        %s2635 = scalar_lea.vmem %s9, 32
        %v2636 = vld [vmem:[%s2635] sm:$0xff]
        %v2637 = vld [vmem:[%s2635 + $0x8] sm:$0xff]
        %v2638 = vld [vmem:[%s2635 + $0x10] sm:$0xff]
        %v2639 = vld [vmem:[%s2635 + $0x18] sm:$0xff]
        %v2641 = vsel %vm757, %v2634, 0
        %2643 = vmatprep.subr.mxu0 0.0
        %2644 = vmatpush1.msra.mxu0 0.0
        %2645 = vmatprep.subr.mxu0 0.0
        %2646 = vmatpush1.msra.mxu0 0.0
        %2647 = vmatprep.subr.mxu0 0.0
        %2648 = vmatpush1.msra.mxu0 0.0
        %2649 = vmatprep.subr.mxu0 0.0
        %2650 = vmatpush1.msra.mxu0 0.0
        %2651 = vmatprep.subr.mxu0 0.0
        %2652 = vmatpush1.msra.mxu0 0.0
        %2653 = vmatprep.subr.mxu0 0.0
        %2654 = vmatpush1.msra.mxu0 0.0
        %2655 = vmatprep.subr.mxu0 0.0
        %2656 = vmatpush1.msra.mxu0 0.0
        %2657 = vmatprep.subr.mxu0 0.0
        %2658 = vmatpush1.msra.mxu0 0.0
        %2659 = vmatprep.subr.mxu0 0.0
        %2660 = vmatpush1.msra.mxu0 0.0
        %2661 = vmatprep.subr.mxu0 0.0
        %2662 = vmatpush1.msra.mxu0 0.0
        %2663 = vmatprep.subr.mxu0 0.0
        %2664 = vmatpush1.msra.mxu0 0.0
        %2665 = vmatprep.subr.mxu0 0.0
        %2666 = vmatpush1.msra.mxu0 0.0
        %2667 = vmatprep.subr.mxu0 0.0
        %2668 = vmatpush1.msra.mxu0 %v2639
        %2669 = vmatprep.subr.mxu0 0.0
        %2670 = vmatpush1.msra.mxu0 %v2638
        %2671 = vmatprep.subr.mxu0 0.0
        %2672 = vmatpush1.msra.mxu0 %v2637
        %2673 = vmatprep.subr.mxu0 0.0
        %2674 = vmatpush1.msra.mxu0 %v2636
        %2675 = vmatprep.subr.mxu0 0.0
        %2676 = vmatpush2.msra.mxu0 0.0
        %2677 = vmatprep.subr.mxu0 0.0
        %2678 = vmatpush2.msra.mxu0 0.0
        %2679 = vmatprep.subr.mxu0 0.0
        %2680 = vmatpush2.msra.mxu0 0.0
        %2681 = vmatprep.subr.mxu0 0.0
        %2682 = vmatpush2.msra.mxu0 0.0
        %2683 = vmatprep.subr.mxu0 0.0
        %2684 = vmatpush2.msra.mxu0 0.0
        %2685 = vmatprep.subr.mxu0 0.0
        %2686 = vmatpush2.msra.mxu0 0.0
        %2687 = vmatprep.subr.mxu0 0.0
        %2688 = vmatpush2.msra.mxu0 0.0
        %2689 = vmatprep.subr.mxu0 0.0
        %2690 = vmatpush2.msra.mxu0 0.0
        %2691 = vmatprep.subr.mxu0 0.0
        %2692 = vmatpush2.msra.mxu0 0.0
        %2693 = vmatprep.subr.mxu0 0.0
        %2694 = vmatpush2.msra.mxu0 0.0
        %2695 = vmatprep.subr.mxu0 0.0
        %2696 = vmatpush2.msra.mxu0 0.0
        %2697 = vmatprep.subr.mxu0 0.0
        %2698 = vmatpush2.msra.mxu0 0.0
        %2699 = vmatprep.subr.mxu0 0.0
        %2700 = vmatpush2.msra.mxu0 0.0
        %2701 = vmatprep.subr.mxu0 0.0
        %2702 = vmatpush2.msra.mxu0 0.0
        %2703 = vmatprep.subr.mxu0 0.0
        %2704 = vmatpush2.msra.mxu0 0.0
        %2705 = vmatprep.subr.mxu0 0.0
        %2706 = vmatpush2.msra.mxu0 0.0
        %2707 = vmatprep.mubr.f32.mxu0 0.0
        %2708 = vmatmul.mubr.f32.gmra.mxu0 %v2641
        %v2709 = vpop.f32.mrf.mxu0
        %v2710 = vadd.f32 0.0, %v2709
        %v2711 = vpop.f32.mrf.mxu0
        %2712 = vdwg.mxu0
        %v2713 = vadd.f32 %v1837, %v2710
        %s2714 = scalar_lea.vmem %s10, 1
        %v2715 = vld [vmem:[%s2714] sm:$0x1]
        %v2717 = vlaneseq
        %v2718 = vshrl.u32 %v2717, 7
        %v2719 = vsub.s32 0, %v2718
        %v2720 = vrot.slane %v2715, %v2719
        %v2722 = vadd.f32 %v2713, %v2720
        %s2723 = scalar_lea.vmem %s11, 1
        %v2724 = vld [vmem:[%s2723] sm:$0x1]
        %s2725 = scalar_lea.vmem %s12, 1
        %v2726 = vld [vmem:[%s2725] sm:$0x1]
        %v2727 = vsel %vm717, %v2722, 0.0
        %2728 = vadd.xlane.f32.xlu0 %v2727
        %v2729 = vpop.xlane.xlu0 %2728
        %v2730 = vmul.f32 %v2729, %v721
        %v2731 = vsub.f32 %v2722, %v2730
        %v2732 = vmul.f32 %v2731, %v2731
        %v2733 = vsel %vm717, %v2732, 0.0
        %2734 = vadd.xlane.f32.xlu0 %v2733
        %v2735 = vpop.xlane.xlu0 %2734
        %v2736 = vmul.f32 %v2735, %v721
        %v2737 = vadd.f32 %v2736, 1e-06
        %v2738 = vrsqrt.pop %v2737
        %v2739 = vmul.f32 %v2731, %v2738
        %v2741 = vlaneseq
        %v2742 = vshrl.u32 %v2741, 7
        %v2743 = vsub.s32 0, %v2742
        %v2744 = vrot.slane %v2724, %v2743
        %v2746 = vmul.f32 %v2739, %v2744
        %v2748 = vlaneseq
        %v2749 = vshrl.u32 %v2748, 7
        %v2750 = vsub.s32 0, %v2749
        %v2751 = vrot.slane %v2726, %v2750
        %v2753 = vadd.f32 %v2746, %v2751
        %s2754 = scalar_lea.vmem %s13, 32
        %v2755 = vld [vmem:[%s2754] sm:$0xff]
        %v2756 = vld [vmem:[%s2754 + $0x8] sm:$0xff]
        %v2757 = vld [vmem:[%s2754 + $0x10] sm:$0xff]
        %v2758 = vld [vmem:[%s2754 + $0x18] sm:$0xff]
        %s2759 = scalar_lea.vmem %s14, 1
        %v2760 = vld [vmem:[%s2759] sm:$0x1]
        %v2762 = vlaneseq
        %v2763 = vshrl.u32 %v2762, 7
        %v2764 = vsub.s32 0, %v2763
        %v2765 = vrot.slane %v2760, %v2764
        %v2768 = vsel %vm757, %v2753, 0
        %2770 = vmatprep.subr.mxu0 0.0
        %2771 = vmatpush1.msra.mxu0 0.0
        %2772 = vmatprep.subr.mxu0 0.0
        %2773 = vmatpush1.msra.mxu0 0.0
        %2774 = vmatprep.subr.mxu0 0.0
        %2775 = vmatpush1.msra.mxu0 0.0
        %2776 = vmatprep.subr.mxu0 0.0
        %2777 = vmatpush1.msra.mxu0 0.0
        %2778 = vmatprep.subr.mxu0 0.0
        %2779 = vmatpush1.msra.mxu0 0.0
        %2780 = vmatprep.subr.mxu0 0.0
        %2781 = vmatpush1.msra.mxu0 0.0
        %2782 = vmatprep.subr.mxu0 0.0
        %2783 = vmatpush1.msra.mxu0 0.0
        %2784 = vmatprep.subr.mxu0 0.0
        %2785 = vmatpush1.msra.mxu0 0.0
        %2786 = vmatprep.subr.mxu0 0.0
        %2787 = vmatpush1.msra.mxu0 0.0
        %2788 = vmatprep.subr.mxu0 0.0
        %2789 = vmatpush1.msra.mxu0 0.0
        %2790 = vmatprep.subr.mxu0 0.0
        %2791 = vmatpush1.msra.mxu0 0.0
        %2792 = vmatprep.subr.mxu0 0.0
        %2793 = vmatpush1.msra.mxu0 0.0
        %2794 = vmatprep.subr.mxu0 0.0
        %2795 = vmatpush1.msra.mxu0 %v2758
        %2796 = vmatprep.subr.mxu0 0.0
        %2797 = vmatpush1.msra.mxu0 %v2757
        %2798 = vmatprep.subr.mxu0 0.0
        %2799 = vmatpush1.msra.mxu0 %v2756
        %2800 = vmatprep.subr.mxu0 0.0
        %2801 = vmatpush1.msra.mxu0 %v2755
        %2802 = vmatprep.subr.mxu0 0.0
        %2803 = vmatpush2.msra.mxu0 0.0
        %2804 = vmatprep.subr.mxu0 0.0
        %2805 = vmatpush2.msra.mxu0 0.0
        %2806 = vmatprep.subr.mxu0 0.0
        %2807 = vmatpush2.msra.mxu0 0.0
        %2808 = vmatprep.subr.mxu0 0.0
        %2809 = vmatpush2.msra.mxu0 0.0
        %2810 = vmatprep.subr.mxu0 0.0
        %2811 = vmatpush2.msra.mxu0 0.0
        %2812 = vmatprep.subr.mxu0 0.0
        %2813 = vmatpush2.msra.mxu0 0.0
        %2814 = vmatprep.subr.mxu0 0.0
        %2815 = vmatpush2.msra.mxu0 0.0
        %2816 = vmatprep.subr.mxu0 0.0
        %2817 = vmatpush2.msra.mxu0 0.0
        %2818 = vmatprep.subr.mxu0 0.0
        %2819 = vmatpush2.msra.mxu0 0.0
        %2820 = vmatprep.subr.mxu0 0.0
        %2821 = vmatpush2.msra.mxu0 0.0
        %2822 = vmatprep.subr.mxu0 0.0
        %2823 = vmatpush2.msra.mxu0 0.0
        %2824 = vmatprep.subr.mxu0 0.0
        %2825 = vmatpush2.msra.mxu0 0.0
        %2826 = vmatprep.subr.mxu0 0.0
        %2827 = vmatpush2.msra.mxu0 0.0
        %2828 = vmatprep.subr.mxu0 0.0
        %2829 = vmatpush2.msra.mxu0 0.0
        %2830 = vmatprep.subr.mxu0 0.0
        %2831 = vmatpush2.msra.mxu0 0.0
        %2832 = vmatprep.subr.mxu0 0.0
        %2833 = vmatpush2.msra.mxu0 0.0
        %2834 = vmatprep.mubr.f32.mxu0 0.0
        %2835 = vmatmul.mubr.f32.gmra.mxu0 %v2768
        %v2836 = vpop.f32.mrf.mxu0
        %v2837 = vadd.f32 %v2765, %v2836
        %v2838 = vpop.f32.mrf.mxu0
        %2839 = vdwg.mxu0
        %v2840 = vmul.f32 %v2837, 0.5
        %v2841 = vmul.f32 %v2837, 0.70710677
        %vm2842 = vcmp.ge.f32.partialorder %v2841, 0.0
        %v2843 = vsel %vm2842, 1.0, -1.0
        %v2844 = vand.u32 2147483647, %v2841
        %v2845 = vmul.f32 %v2844, 0.3275911
        %v2846 = vadd.f32 %v2845, 1.0
        %v2847 = vrcp.pop %v2846
        %v2848 = vmul.f32 1.0, %v2847
        %v2849 = vmul.f32 %v2848, 1.0614054
        %v2850 = vadd.f32 %v2849, -1.4531521
        %v2851 = vmul.f32 %v2848, %v2850
        %v2852 = vadd.f32 %v2851, 1.4214138
        %v2853 = vmul.f32 %v2848, %v2852
        %v2854 = vadd.f32 %v2853, -0.28449672
        %v2855 = vmul.f32 %v2848, %v2854
        %v2856 = vadd.f32 %v2855, 0.2548296
        %v2857 = vmul.f32 %v2848, %v2856
        %v2858 = vsub.f32 0.0, %v2844
        %v2859 = vmul.f32 %v2858, %v2844
        %v2860 = vmul.f32 %v2859, 1.442695
        %v2861 = vpow.pop %v2860
        %v2862 = vmul.f32 %v2857, %v2861
        %v2863 = vsub.f32 1.0, %v2862
        %v2864 = vmul.f32 %v2843, %v2863
        %v2865 = vadd.f32 %v2864, 1.0
        %v2866 = vmul.f32 %v2840, %v2865
        %s2867 = scalar_lea.vmem %s15, 128
        %v2868 = vld [vmem:[%s2867] sm:$0xff]
        %v2869 = vld [vmem:[%s2867 + $0x8] sm:$0xff]
        %v2870 = vld [vmem:[%s2867 + $0x10] sm:$0xff]
        %v2871 = vld [vmem:[%s2867 + $0x18] sm:$0xff]
        %v2872 = vld [vmem:[%s2867 + $0x20] sm:$0xff]
        %v2873 = vld [vmem:[%s2867 + $0x28] sm:$0xff]
        %v2874 = vld [vmem:[%s2867 + $0x30] sm:$0xff]
        %v2875 = vld [vmem:[%s2867 + $0x38] sm:$0xff]
        %v2876 = vld [vmem:[%s2867 + $0x40] sm:$0xff]
        %v2877 = vld [vmem:[%s2867 + $0x48] sm:$0xff]
        %v2878 = vld [vmem:[%s2867 + $0x50] sm:$0xff]
        %v2879 = vld [vmem:[%s2867 + $0x58] sm:$0xff]
        %v2880 = vld [vmem:[%s2867 + $0x60] sm:$0xff]
        %v2881 = vld [vmem:[%s2867 + $0x68] sm:$0xff]
        %v2882 = vld [vmem:[%s2867 + $0x70] sm:$0xff]
        %v2883 = vld [vmem:[%s2867 + $0x78] sm:$0xff]
        %2884 = vmatprep.subr.mxu0 0.0
        %2885 = vmatpush1.msra.mxu0 %v2883
        %2886 = vmatprep.subr.mxu0 0.0
        %2887 = vmatpush1.msra.mxu0 %v2882
        %2888 = vmatprep.subr.mxu0 0.0
        %2889 = vmatpush1.msra.mxu0 %v2881
        %2890 = vmatprep.subr.mxu0 0.0
        %2891 = vmatpush1.msra.mxu0 %v2880
        %2892 = vmatprep.subr.mxu0 0.0
        %2893 = vmatpush1.msra.mxu0 %v2879
        %2894 = vmatprep.subr.mxu0 0.0
        %2895 = vmatpush1.msra.mxu0 %v2878
        %2896 = vmatprep.subr.mxu0 0.0
        %2897 = vmatpush1.msra.mxu0 %v2877
        %2898 = vmatprep.subr.mxu0 0.0
        %2899 = vmatpush1.msra.mxu0 %v2876
        %2900 = vmatprep.subr.mxu0 0.0
        %2901 = vmatpush1.msra.mxu0 %v2875
        %2902 = vmatprep.subr.mxu0 0.0
        %2903 = vmatpush1.msra.mxu0 %v2874
        %2904 = vmatprep.subr.mxu0 0.0
        %2905 = vmatpush1.msra.mxu0 %v2873
        %2906 = vmatprep.subr.mxu0 0.0
        %2907 = vmatpush1.msra.mxu0 %v2872
        %2908 = vmatprep.subr.mxu0 0.0
        %2909 = vmatpush1.msra.mxu0 %v2871
        %2910 = vmatprep.subr.mxu0 0.0
        %2911 = vmatpush1.msra.mxu0 %v2870
        %2912 = vmatprep.subr.mxu0 0.0
        %2913 = vmatpush1.msra.mxu0 %v2869
        %2914 = vmatprep.subr.mxu0 0.0
        %2915 = vmatpush1.msra.mxu0 %v2868
        %2916 = vmatprep.subr.mxu0 0.0
        %2917 = vmatpush2.msra.mxu0 0.0
        %2918 = vmatprep.subr.mxu0 0.0
        %2919 = vmatpush2.msra.mxu0 0.0
        %2920 = vmatprep.subr.mxu0 0.0
        %2921 = vmatpush2.msra.mxu0 0.0
        %2922 = vmatprep.subr.mxu0 0.0
        %2923 = vmatpush2.msra.mxu0 0.0
        %2924 = vmatprep.subr.mxu0 0.0
        %2925 = vmatpush2.msra.mxu0 0.0
        %2926 = vmatprep.subr.mxu0 0.0
        %2927 = vmatpush2.msra.mxu0 0.0
        %2928 = vmatprep.subr.mxu0 0.0
        %2929 = vmatpush2.msra.mxu0 0.0
        %2930 = vmatprep.subr.mxu0 0.0
        %2931 = vmatpush2.msra.mxu0 0.0
        %2932 = vmatprep.subr.mxu0 0.0
        %2933 = vmatpush2.msra.mxu0 0.0
        %2934 = vmatprep.subr.mxu0 0.0
        %2935 = vmatpush2.msra.mxu0 0.0
        %2936 = vmatprep.subr.mxu0 0.0
        %2937 = vmatpush2.msra.mxu0 0.0
        %2938 = vmatprep.subr.mxu0 0.0
        %2939 = vmatpush2.msra.mxu0 0.0
        %2940 = vmatprep.subr.mxu0 0.0
        %2941 = vmatpush2.msra.mxu0 0.0
        %2942 = vmatprep.subr.mxu0 0.0
        %2943 = vmatpush2.msra.mxu0 0.0
        %2944 = vmatprep.subr.mxu0 0.0
        %2945 = vmatpush2.msra.mxu0 0.0
        %2946 = vmatprep.subr.mxu0 0.0
        %2947 = vmatpush2.msra.mxu0 0.0
        %2948 = vmatprep.mubr.f32.mxu0 0.0
        %2949 = vmatmul.mubr.f32.gmra.mxu0 %v2866
        %v2950 = vpop.f32.mrf.mxu0
        %v2951 = vadd.f32 0.0, %v2950
        %v2952 = vpop.f32.mrf.mxu0
        %2953 = vdwg.mxu0
        %v2954 = vadd.f32 %v2722, %v2951
        %s2955 = scalar_lea.vmem %s16, 1
        %v2956 = vld [vmem:[%s2955] sm:$0x1]
        %v2958 = vlaneseq
        %v2959 = vshrl.u32 %v2958, 7
        %v2960 = vsub.s32 0, %v2959
        %v2961 = vrot.slane %v2956, %v2960
        %v2963 = vadd.f32 %v2954, %v2961
        %v2964 = vld [vmem:[%s17] sm:$0x1]
        %v2965 = vld [vmem:[%s18] sm:$0x1]
        %vm2966 = vcmask 253952
        %v2967 = vsel %vm2966, %v2963, 0.0
        %2968 = vadd.xlane.f32.xlu0 %v2967
        %v2969 = vpop.xlane.xlu0 %2968
        %v2970 = vmul.f32 %v2969, %v721
        %v2971 = vsub.f32 %v2963, %v2970
        %v2972 = vmul.f32 %v2971, %v2971
        %v2973 = vsel %vm2966, %v2972, 0.0
        %2974 = vadd.xlane.f32.xlu0 %v2973
        %v2975 = vpop.xlane.xlu0 %2974
        %v2976 = vmul.f32 %v2975, %v721
        %v2977 = vadd.f32 %v2976, 1e-06
        %v2978 = vrsqrt.pop %v2977
        %v2979 = vmul.f32 %v2971, %v2978
        %v2980 = vmul.f32 %v2979, %v2964
        %v2981 = vadd.f32 %v2980, %v2965
        %2982 = vst.msk [vmem:[%s594] sm:$0x1] %vm2966, %v2981
        %s2983 = sand.u32 %s445, 1
        %s2984 = scalar_lea.sflag [#allocation3], %s2983
        %s2985 = sand.u32 %s445, 1
        %s2986 = scalar_lea.vmem [#allocation2], %s2985
        // Predicated region
        $region97: #{vit_forward.1} parent=95 // pred_check
          %p2987 = pneg %p455
        $region98: #{vit_forward.1} parent=95 // pred_check_branch
          %2989 = sbr.rel (%p2987) target = $region100
        $region99: #{vit_forward.1} parent=95 // pred_region
          %s2991 = ssub.s32 16, 16
          %2992 = vsyncadd %s2984, %s2991
          %s2993 = smul.addr %s33, 16
          %s2994 = scalar_lea.hbm %s19, %s2993
          %s2996 = sshll.u32 %s2986, 4
          %s2997 = int_to_ptr.vmem [resolvable:$true] %s2996
          %2999 = dma.vmem_to_hbm [thread:$0]  %s2997, 16, %s2994, %s2984
        $region100: #{vit_forward.1} parent=95 // pred_fallthru
          _
      $region96: #{vit_forward.1} parent=5 // pred_fallthru
        _
      %p3000 = scmp.le.s32.totalorder 2, %s28
      // Predicated region
      $region101: #{vit_forward.1} parent=5 // pred_check
        %p3001 = pneg %p3000
      $region102: #{vit_forward.1} parent=5 // pred_check_branch
        %3003 = sbr.rel (%p3001) target = $region104
      $region103: #{vit_forward.1} parent=5 // pred_region
        %s3004 = ssub.s32 %s28, 2
        // Predicated region
        $region105: #{vit_forward.1} parent=103 // pred_check
          %p3005 = pneg %p461
        $region106: #{vit_forward.1} parent=103 // pred_check_branch
          %3007 = sbr.rel (%p3005) target = $region108
        $region107: #{vit_forward.1} parent=103 // pred_region
          %s3008 = sand.u32 %s446, 1
          %s3009 = scalar_lea.sflag [#allocation3], %s3008
          %s3010 = sand.u32 %s446, 1
          %s3011 = scalar_lea.vmem [#allocation2], %s3010
          %3012 = dma.done %s3009, 16
        $region108: #{vit_forward.1} parent=103 // pred_fallthru
          _
      $region104: #{vit_forward.1} parent=5 // pred_fallthru
        _
    $region6: #{vit_forward.1} parent=1 // loop_footer
      %s32 = sadd.s32 1, %s28
    $region7: #{vit_forward.1} parent=1 // loop_footer_branch
      %27 = sbr.rel target = $region3
    $region8: #{vit_forward.1} parent=1 // loop_exit
      _
    %3013 = vsyncpa [#allocation3], 1
    %s3014 = scalar_lea.sflag [#allocation3], 1
    %3015 = vsyncpa %s3014, 1

</llo_original>
